<compile_context>
chip_gen: v6e
topology: v6e:2x2x1
jax: 0.10.0
libtpu: 0.0.40
codegen_flags: <defaults>
</compile_context>

<pallas_src>
import functools

import jax
import jax.numpy as jnp
from jax.experimental import pallas as pl
from jax.experimental.pallas import tpu as pltpu


def _round_up(x, m):
    return (x + m - 1) // m * m


def _pick_tile_b(b, max_tile=128):
    # Sublane-aligned batch tile; prefer >= 2 grid steps (v7x dual-TC) when possible.
    tb = max_tile
    while tb > 8 and b <= tb:
        tb //= 2
    return max(tb, 8)


# ----------------------------------------------------------------------------
# Fused forward kernel: conv1+ReLU -> conv2+ReLU -> fc1+ReLU -> fc2
# ----------------------------------------------------------------------------
def _fused_forward_kernel(p1_ref, w1_ref, b1_ref, w2_ref, b2_ref,
                          w3_ref, b3_ref, w4_ref, b4_ref, out_ref, *, tb):
    f32 = jnp.float32
    bf16 = jnp.bfloat16

    # ---- conv1: single im2col matmul (patches built host-side), bias + ReLU.
    acc1 = jnp.dot(p1_ref[...], w1_ref[...], preferred_element_type=f32)  # (tb*25, 128)
    h1 = jnp.maximum(acc1 + b1_ref[...], 0.0).astype(bf16)
    h1 = h1.reshape(tb, 5, 5, 128)                                        # NHWC, C on lanes

    # ---- conv2: 3x3 valid, 128 -> 256, bias + ReLU.  One K=1152 matmul per output
    #      position; results concatenated along lanes -> fc1-ready (tb, 2304) layout.
    h2_cols = []
    for oh in range(3):
        for ow in range(3):
            pieces = [
                h1[:, oh + i:oh + i + 1, ow + j:ow + j + 1, :].reshape(tb, 128)
                for i in range(3) for j in range(3)
            ]
            patch = jnp.concatenate(pieces, axis=-1)                      # (tb, 1152) bf16
            pos = jnp.dot(patch, w2_ref[...], preferred_element_type=f32)  # (tb, 256)
            h2_cols.append(jnp.maximum(pos + b2_ref[...], 0.0).astype(bf16))
    h2 = jnp.concatenate(h2_cols, axis=-1)                                # (tb, 2304) bf16

    # ---- fc1 (embedding_layers) + ReLU: one K=2304 matmul, N padded to 128.
    acc3 = jnp.dot(h2, w3_ref[...], preferred_element_type=f32)
    h3 = jnp.maximum(acc3 + b3_ref[...], 0.0).astype(bf16)                # (tb, emb_pad)

    # ---- fc2 (out_layer): N padded 3 -> 128 for a lane-dense HBM store.
    out = jnp.dot(h3, w4_ref[...], preferred_element_type=f32)
    out_ref[...] = (out + b4_ref[...]).astype(out_ref.dtype)


# ----------------------------------------------------------------------------
# Weight packing (torch layouts -> kernel layouts).  Call ONCE, reuse per step.
# ----------------------------------------------------------------------------
def pack_params(params, embedding_size):
    emb = embedding_size
    emb_pad = _round_up(emb, 128)
    cin = params["w1"].shape[1]
    k1 = 16 * cin
    k1_pad = _round_up(k1, 128)

    # conv1: (128, cin, 4, 4) -> (4, 4, cin, 128) -> (16*cin, 128), K padded, bf16.
    w1 = jnp.transpose(params["w1"], (2, 3, 1, 0)).reshape(k1, 128)
    w1 = jnp.zeros((k1_pad, 128), jnp.float32).at[:k1].set(w1).astype(jnp.bfloat16)
    b1 = params["b1"].reshape(1, 128).astype(jnp.float32)

    # conv2: (256, 128, 3, 3) -> (3, 3, 128, 256) -> (1152, 256), bf16.
    w2 = jnp.transpose(params["w2"], (2, 3, 1, 0)).reshape(9 * 128, 256).astype(jnp.bfloat16)
    b2 = params["b2"].reshape(1, 256).astype(jnp.float32)

    # fc1: torch flattens conv2 output in (c, h, w) order; kernel layout is (h*w, c).
    w3 = params["w3"].reshape(emb, 256, 3, 3)
    w3 = jnp.transpose(w3, (2, 3, 1, 0)).reshape(9 * 256, emb)            # rows = p*256 + c
    w3 = jnp.zeros((9 * 256, emb_pad), jnp.float32).at[:, :emb].set(w3).astype(jnp.bfloat16)
    b3 = jnp.zeros((1, emb_pad), jnp.float32).at[:, :emb].set(params["b3"].reshape(1, emb))

    # fc2: (3, emb) -> (emb_pad, 128) zero-padded, bf16.
    w4 = jnp.zeros((emb_pad, 128), jnp.float32).at[:emb, :3].set(params["w4"].T)
    b4 = jnp.zeros((1, 128), jnp.float32).at[:, :3].set(params["b4"].reshape(1, 3))

    return dict(w1=w1, b1=b1, w2=w2, b2=b2, w3=w3, b3=b3,
                w4=w4.astype(jnp.bfloat16), b4=b4)


# ----------------------------------------------------------------------------
# Forward pass (mirrors ResNet_CNN.forward).  `packed` = pack_params(...) output.
# ----------------------------------------------------------------------------
def resnet_cnn_forward(packed, x, embedding_size, steps, max_tile_b=128):
    cin = steps * 2 + 1
    emb_pad = _round_up(embedding_size, 128)
    k1 = 16 * cin
    k1_pad = _round_up(k1, 128)

    x = x.reshape(-1, cin, 8, 8).astype(jnp.float32)
    b = x.shape[0]
    tb = _pick_tile_b(b, max_tile_b)
    b_pad = _round_up(b, tb)

    x = jnp.transpose(x, (0, 2, 3, 1))                      # NCHW -> NHWC
    if b_pad != b:
        x = jnp.pad(x, ((0, b_pad - b), (0, 0), (0, 0), (0, 0)))

    # Host-side im2col for conv1 (input is tiny): patches (b, 25, (i, j, c)).
    cols = [x[:, i:i + 5, j:j + 5, :] for i in range(4) for j in range(4)]
    patches = jnp.stack(cols, axis=3).reshape(b_pad, 25, k1)
    if k1_pad != k1:
        patches = jnp.pad(patches, ((0, 0), (0, 0), (0, k1_pad - k1)))
    patches = patches.reshape(b_pad * 25, k1_pad).astype(jnp.bfloat16)    # cast once

    kern = functools.partial(_fused_forward_kernel, tb=tb)

    out = pl.pallas_call(
        kern,
        out_shape=jax.ShapeDtypeStruct((b_pad, 128), jnp.float32),
        grid=(b_pad // tb,),
        in_specs=[
            pl.BlockSpec((tb * 25, k1_pad), lambda i: (i, 0)),     # conv1 im2col patches
            pl.BlockSpec((k1_pad, 128), lambda i: (0, 0)),         # w1 (grid-invariant)
            pl.BlockSpec((1, 128), lambda i: (0, 0)),              # b1
            pl.BlockSpec((9 * 128, 256), lambda i: (0, 0)),        # w2
            pl.BlockSpec((1, 256), lambda i: (0, 0)),              # b2
            pl.BlockSpec((9 * 256, emb_pad), lambda i: (0, 0)),    # w3 (padded N)
            pl.BlockSpec((1, emb_pad), lambda i: (0, 0)),          # b3
            pl.BlockSpec((emb_pad, 128), lambda i: (0, 0)),        # w4 (padded)
            pl.BlockSpec((1, 128), lambda i: (0, 0)),              # b4 (padded)
        ],
        out_specs=pl.BlockSpec((tb, 128), lambda i: (i, 0)),
        compiler_params=pltpu.CompilerParams(
            dimension_semantics=("parallel",),
            vmem_limit_bytes=32 * 1024 * 1024),
    )(patches, packed["w1"], packed["b1"], packed["w2"], packed["b2"],
      packed["w3"], packed["b3"], packed["w4"], packed["b4"])

    return out[:b, :3]


# ----------------------------------------------------------------------------
# Parameters (deterministic, torch-style uniform init shapes)
# ----------------------------------------------------------------------------
def init_params(key, embedding_size, steps):
    input_size = steps * 2 + 1
    ks = jax.random.split(key, 8)

    def u(k, shape, fan_in):
        bound = 1.0 / float(fan_in) ** 0.5
        return jax.random.uniform(k, shape, jnp.float32, -bound, bound)

    return {
        "w1": u(ks[0], (128, input_size, 4, 4), input_size * 16),
        "b1": u(ks[1], (128,), input_size * 16),
        "w2": u(ks[2], (256, 128, 3, 3), 128 * 9),
        "b2": u(ks[3], (256,), 128 * 9),
        "w3": u(ks[4], (embedding_size, 256 * 9), 256 * 9),
        "b3": u(ks[5], (embedding_size,), 256 * 9),
        "w4": u(ks[6], (3, embedding_size), embedding_size),
        "b4": u(ks[7], (3,), embedding_size),
    }


# ----------------------------------------------------------------------------
# Plain-JAX reference (correctness check only)
# ----------------------------------------------------------------------------
def _reference_forward(params, x, embedding_size, steps):
    cin = steps * 2 + 1
    x = x.reshape(-1, cin, 8, 8).astype(jnp.float32)
    dn = ("NCHW", "OIHW", "NCHW")
    y = jax.lax.conv_general_dilated(x, params["w1"], (1, 1), "VALID",
                                     dimension_numbers=dn)
    y = jax.nn.relu(y + params["b1"].reshape(1, -1, 1, 1))
    y = jax.lax.conv_general_dilated(y, params["w2"], (1, 1), "VALID",
                                     dimension_numbers=dn)
    y = jax.nn.relu(y + params["b2"].reshape(1, -1, 1, 1))
    y = y.reshape(-1, 256 * 9)
    y = jax.nn.relu(y @ params["w3"].T + params["b3"])
    return y @ params["w4"].T + params["b4"]


if __name__ == "__main__":
    embedding_size = 32
    steps = 2                      # input channels = steps*2 + 1 = 5
    batch = 2

    key = jax.random.PRNGKey(0)
    k_params, k_x = jax.random.split(key)
    params = init_params(k_params, embedding_size, steps)
    x = jax.random.normal(k_x, (batch, steps * 2 + 1, 8, 8), dtype=jnp.float32)

    packed = jax.block_until_ready(pack_params(params, embedding_size))  # one-time packing

    fwd = jax.jit(lambda pk, xx: resnet_cnn_forward(pk, xx, embedding_size, steps))
    out = jax.block_until_ready(fwd(packed, x))
    assert out.shape == (batch, 3), out.shape

    # Correctness vs plain-JAX f32 reference (bf16 MXU inputs -> typical err ~1e-3).
    ref = jax.block_until_ready(_reference_forward(params, x, embedding_size, steps))
    max_err = float(jnp.max(jnp.abs(out - ref)))
    assert max_err < 5e-2, f"max abs err vs reference: {max_err}"
    print("KERNEL_OK")
</pallas_src>

<mosaic_0001>
module attributes {stable_mosaic.version = 11 : i64} {
  func.func @_fused_forward_kernel(%arg0: i32, %arg1: memref<200x128xbf16, #tpu.memory_space<vmem>>, %arg2: memref<128x128xbf16, #tpu.memory_space<vmem>>, %arg3: memref<1x128xf32, #tpu.memory_space<vmem>>, %arg4: memref<1152x256xbf16, #tpu.memory_space<vmem>>, %arg5: memref<1x256xf32, #tpu.memory_space<vmem>>, %arg6: memref<2304x128xbf16, #tpu.memory_space<vmem>>, %arg7: memref<1x128xf32, #tpu.memory_space<vmem>>, %arg8: memref<128x128xbf16, #tpu.memory_space<vmem>>, %arg9: memref<1x128xf32, #tpu.memory_space<vmem>>, %arg10: memref<8x128xf32, #tpu.memory_space<vmem>>) attributes {dimension_semantics = [#tpu.dimension_semantics<parallel>], iteration_bounds = array<i64: 1>, scalar_prefetch = 0 : i64, scratch_operands = 0 : i64, tpu.core_type = #tpu.core_type<tc>, window_params = [{transform_indices = @transform_0, window_bounds = array<i64: 200, 128>}, {pipeline_mode = #tpu.pipeline_mode<synchronous>, transform_indices = @transform_1, window_bounds = array<i64: 128, 128>}, {pipeline_mode = #tpu.pipeline_mode<synchronous>, transform_indices = @transform_2, window_bounds = array<i64: 1, 128>}, {pipeline_mode = #tpu.pipeline_mode<synchronous>, transform_indices = @transform_3, window_bounds = array<i64: 1152, 256>}, {pipeline_mode = #tpu.pipeline_mode<synchronous>, transform_indices = @transform_4, window_bounds = array<i64: 1, 256>}, {pipeline_mode = #tpu.pipeline_mode<synchronous>, transform_indices = @transform_5, window_bounds = array<i64: 2304, 128>}, {pipeline_mode = #tpu.pipeline_mode<synchronous>, transform_indices = @transform_6, window_bounds = array<i64: 1, 128>}, {pipeline_mode = #tpu.pipeline_mode<synchronous>, transform_indices = @transform_7, window_bounds = array<i64: 128, 128>}, {pipeline_mode = #tpu.pipeline_mode<synchronous>, transform_indices = @transform_8, window_bounds = array<i64: 1, 128>}, {transform_indices = @transform_9, window_bounds = array<i64: 8, 128>}]} {
    %c0 = arith.constant 0 : index
    %c0_0 = arith.constant 0 : index
    %0 = vector.load %arg1[%c0, %c0_0] : memref<200x128xbf16, #tpu.memory_space<vmem>>, vector<200x128xbf16>
    %c0_1 = arith.constant 0 : index
    %c0_2 = arith.constant 0 : index
    %1 = vector.load %arg2[%c0_1, %c0_2] : memref<128x128xbf16, #tpu.memory_space<vmem>>, vector<128x128xbf16>
    %cst = arith.constant dense<0.000000e+00> : vector<200x128xf32>
    %2 = tpu.matmul %0, %1, %cst {dimension_numbers = #tpu.dot_dimension_numbers<[1], [0], [0], [1], [0, 0, 1, 1], [], []>} : vector<200x128xbf16>, vector<128x128xbf16>, vector<200x128xf32> -> vector<200x128xf32>
    %c0_3 = arith.constant 0 : index
    %c0_4 = arith.constant 0 : index
    %3 = vector.load %arg3[%c0_3, %c0_4] : memref<1x128xf32, #tpu.memory_space<vmem>>, vector<1x128xf32>
    %4 = vector.broadcast %3 : vector<1x128xf32> to vector<200x128xf32>
    %5 = arith.addf %2, %4 : vector<200x128xf32>
    %cst_5 = arith.constant 0.000000e+00 : f32
    %6 = vector.broadcast %cst_5 : f32 to vector<200x128xf32>
    %7 = arith.maximumf %5, %6 : vector<200x128xf32>
    %8 = arith.truncf %7 : vector<200x128xf32> to vector<200x128xbf16>
    %9 = vector.shape_cast %8 : vector<200x128xbf16> to vector<8x5x5x128xbf16>
    %10 = vector.extract_strided_slice %9 {offsets = [0, 0, 0, 0], sizes = [8, 1, 1, 128], strides = [1, 1, 1, 1]} : vector<8x5x5x128xbf16> to vector<8x1x1x128xbf16>
    %11 = vector.shape_cast %10 : vector<8x1x1x128xbf16> to vector<8x128xbf16>
    %12 = vector.extract_strided_slice %9 {offsets = [0, 0, 1, 0], sizes = [8, 1, 1, 128], strides = [1, 1, 1, 1]} : vector<8x5x5x128xbf16> to vector<8x1x1x128xbf16>
    %13 = vector.shape_cast %12 : vector<8x1x1x128xbf16> to vector<8x128xbf16>
    %14 = vector.extract_strided_slice %9 {offsets = [0, 0, 2, 0], sizes = [8, 1, 1, 128], strides = [1, 1, 1, 1]} : vector<8x5x5x128xbf16> to vector<8x1x1x128xbf16>
    %15 = vector.shape_cast %14 : vector<8x1x1x128xbf16> to vector<8x128xbf16>
    %16 = vector.extract_strided_slice %9 {offsets = [0, 1, 0, 0], sizes = [8, 1, 1, 128], strides = [1, 1, 1, 1]} : vector<8x5x5x128xbf16> to vector<8x1x1x128xbf16>
    %17 = vector.shape_cast %16 : vector<8x1x1x128xbf16> to vector<8x128xbf16>
    %18 = vector.extract_strided_slice %9 {offsets = [0, 1, 1, 0], sizes = [8, 1, 1, 128], strides = [1, 1, 1, 1]} : vector<8x5x5x128xbf16> to vector<8x1x1x128xbf16>
    %19 = vector.shape_cast %18 : vector<8x1x1x128xbf16> to vector<8x128xbf16>
    %20 = vector.extract_strided_slice %9 {offsets = [0, 1, 2, 0], sizes = [8, 1, 1, 128], strides = [1, 1, 1, 1]} : vector<8x5x5x128xbf16> to vector<8x1x1x128xbf16>
    %21 = vector.shape_cast %20 : vector<8x1x1x128xbf16> to vector<8x128xbf16>
    %22 = vector.extract_strided_slice %9 {offsets = [0, 2, 0, 0], sizes = [8, 1, 1, 128], strides = [1, 1, 1, 1]} : vector<8x5x5x128xbf16> to vector<8x1x1x128xbf16>
    %23 = vector.shape_cast %22 : vector<8x1x1x128xbf16> to vector<8x128xbf16>
    %24 = vector.extract_strided_slice %9 {offsets = [0, 2, 1, 0], sizes = [8, 1, 1, 128], strides = [1, 1, 1, 1]} : vector<8x5x5x128xbf16> to vector<8x1x1x128xbf16>
    %25 = vector.shape_cast %24 : vector<8x1x1x128xbf16> to vector<8x128xbf16>
    %26 = vector.extract_strided_slice %9 {offsets = [0, 2, 2, 0], sizes = [8, 1, 1, 128], strides = [1, 1, 1, 1]} : vector<8x5x5x128xbf16> to vector<8x1x1x128xbf16>
    %27 = vector.shape_cast %26 : vector<8x1x1x128xbf16> to vector<8x128xbf16>
    %28 = tpu.concatenate %11, %13, %15, %17, %19, %21, %23, %25, %27 in 1 : vector<8x128xbf16>, vector<8x128xbf16>, vector<8x128xbf16>, vector<8x128xbf16>, vector<8x128xbf16>, vector<8x128xbf16>, vector<8x128xbf16>, vector<8x128xbf16>, vector<8x128xbf16> -> vector<8x1152xbf16>
    %c0_6 = arith.constant 0 : index
    %c0_7 = arith.constant 0 : index
    %29 = vector.load %arg4[%c0_6, %c0_7] : memref<1152x256xbf16, #tpu.memory_space<vmem>>, vector<1152x256xbf16>
    %cst_8 = arith.constant dense<0.000000e+00> : vector<8x256xf32>
    %30 = tpu.matmul %28, %29, %cst_8 {dimension_numbers = #tpu.dot_dimension_numbers<[1], [0], [0], [1], [0, 0, 1, 1], [], []>} : vector<8x1152xbf16>, vector<1152x256xbf16>, vector<8x256xf32> -> vector<8x256xf32>
    %c0_9 = arith.constant 0 : index
    %c0_10 = arith.constant 0 : index
    %31 = vector.load %arg5[%c0_9, %c0_10] : memref<1x256xf32, #tpu.memory_space<vmem>>, vector<1x256xf32>
    %32 = vector.broadcast %31 : vector<1x256xf32> to vector<8x256xf32>
    %33 = arith.addf %30, %32 : vector<8x256xf32>
    %cst_11 = arith.constant 0.000000e+00 : f32
    %34 = vector.broadcast %cst_11 : f32 to vector<8x256xf32>
    %35 = arith.maximumf %33, %34 : vector<8x256xf32>
    %36 = arith.truncf %35 : vector<8x256xf32> to vector<8x256xbf16>
    %37 = vector.extract_strided_slice %9 {offsets = [0, 0, 1, 0], sizes = [8, 1, 1, 128], strides = [1, 1, 1, 1]} : vector<8x5x5x128xbf16> to vector<8x1x1x128xbf16>
    %38 = vector.shape_cast %37 : vector<8x1x1x128xbf16> to vector<8x128xbf16>
    %39 = vector.extract_strided_slice %9 {offsets = [0, 0, 2, 0], sizes = [8, 1, 1, 128], strides = [1, 1, 1, 1]} : vector<8x5x5x128xbf16> to vector<8x1x1x128xbf16>
    %40 = vector.shape_cast %39 : vector<8x1x1x128xbf16> to vector<8x128xbf16>
    %41 = vector.extract_strided_slice %9 {offsets = [0, 0, 3, 0], sizes = [8, 1, 1, 128], strides = [1, 1, 1, 1]} : vector<8x5x5x128xbf16> to vector<8x1x1x128xbf16>
    %42 = vector.shape_cast %41 : vector<8x1x1x128xbf16> to vector<8x128xbf16>
    %43 = vector.extract_strided_slice %9 {offsets = [0, 1, 1, 0], sizes = [8, 1, 1, 128], strides = [1, 1, 1, 1]} : vector<8x5x5x128xbf16> to vector<8x1x1x128xbf16>
    %44 = vector.shape_cast %43 : vector<8x1x1x128xbf16> to vector<8x128xbf16>
    %45 = vector.extract_strided_slice %9 {offsets = [0, 1, 2, 0], sizes = [8, 1, 1, 128], strides = [1, 1, 1, 1]} : vector<8x5x5x128xbf16> to vector<8x1x1x128xbf16>
    %46 = vector.shape_cast %45 : vector<8x1x1x128xbf16> to vector<8x128xbf16>
    %47 = vector.extract_strided_slice %9 {offsets = [0, 1, 3, 0], sizes = [8, 1, 1, 128], strides = [1, 1, 1, 1]} : vector<8x5x5x128xbf16> to vector<8x1x1x128xbf16>
    %48 = vector.shape_cast %47 : vector<8x1x1x128xbf16> to vector<8x128xbf16>
    %49 = vector.extract_strided_slice %9 {offsets = [0, 2, 1, 0], sizes = [8, 1, 1, 128], strides = [1, 1, 1, 1]} : vector<8x5x5x128xbf16> to vector<8x1x1x128xbf16>
    %50 = vector.shape_cast %49 : vector<8x1x1x128xbf16> to vector<8x128xbf16>
    %51 = vector.extract_strided_slice %9 {offsets = [0, 2, 2, 0], sizes = [8, 1, 1, 128], strides = [1, 1, 1, 1]} : vector<8x5x5x128xbf16> to vector<8x1x1x128xbf16>
    %52 = vector.shape_cast %51 : vector<8x1x1x128xbf16> to vector<8x128xbf16>
    %53 = vector.extract_strided_slice %9 {offsets = [0, 2, 3, 0], sizes = [8, 1, 1, 128], strides = [1, 1, 1, 1]} : vector<8x5x5x128xbf16> to vector<8x1x1x128xbf16>
    %54 = vector.shape_cast %53 : vector<8x1x1x128xbf16> to vector<8x128xbf16>
    %55 = tpu.concatenate %38, %40, %42, %44, %46, %48, %50, %52, %54 in 1 : vector<8x128xbf16>, vector<8x128xbf16>, vector<8x128xbf16>, vector<8x128xbf16>, vector<8x128xbf16>, vector<8x128xbf16>, vector<8x128xbf16>, vector<8x128xbf16>, vector<8x128xbf16> -> vector<8x1152xbf16>
    %c0_12 = arith.constant 0 : index
    %c0_13 = arith.constant 0 : index
    %56 = vector.load %arg4[%c0_12, %c0_13] : memref<1152x256xbf16, #tpu.memory_space<vmem>>, vector<1152x256xbf16>
    %cst_14 = arith.constant dense<0.000000e+00> : vector<8x256xf32>
    %57 = tpu.matmul %55, %56, %cst_14 {dimension_numbers = #tpu.dot_dimension_numbers<[1], [0], [0], [1], [0, 0, 1, 1], [], []>} : vector<8x1152xbf16>, vector<1152x256xbf16>, vector<8x256xf32> -> vector<8x256xf32>
    %c0_15 = arith.constant 0 : index
    %c0_16 = arith.constant 0 : index
    %58 = vector.load %arg5[%c0_15, %c0_16] : memref<1x256xf32, #tpu.memory_space<vmem>>, vector<1x256xf32>
    %59 = vector.broadcast %58 : vector<1x256xf32> to vector<8x256xf32>
    %60 = arith.addf %57, %59 : vector<8x256xf32>
    %cst_17 = arith.constant 0.000000e+00 : f32
    %61 = vector.broadcast %cst_17 : f32 to vector<8x256xf32>
    %62 = arith.maximumf %60, %61 : vector<8x256xf32>
    %63 = arith.truncf %62 : vector<8x256xf32> to vector<8x256xbf16>
    %64 = vector.extract_strided_slice %9 {offsets = [0, 0, 2, 0], sizes = [8, 1, 1, 128], strides = [1, 1, 1, 1]} : vector<8x5x5x128xbf16> to vector<8x1x1x128xbf16>
    %65 = vector.shape_cast %64 : vector<8x1x1x128xbf16> to vector<8x128xbf16>
    %66 = vector.extract_strided_slice %9 {offsets = [0, 0, 3, 0], sizes = [8, 1, 1, 128], strides = [1, 1, 1, 1]} : vector<8x5x5x128xbf16> to vector<8x1x1x128xbf16>
    %67 = vector.shape_cast %66 : vector<8x1x1x128xbf16> to vector<8x128xbf16>
    %68 = vector.extract_strided_slice %9 {offsets = [0, 0, 4, 0], sizes = [8, 1, 1, 128], strides = [1, 1, 1, 1]} : vector<8x5x5x128xbf16> to vector<8x1x1x128xbf16>
    %69 = vector.shape_cast %68 : vector<8x1x1x128xbf16> to vector<8x128xbf16>
    %70 = vector.extract_strided_slice %9 {offsets = [0, 1, 2, 0], sizes = [8, 1, 1, 128], strides = [1, 1, 1, 1]} : vector<8x5x5x128xbf16> to vector<8x1x1x128xbf16>
    %71 = vector.shape_cast %70 : vector<8x1x1x128xbf16> to vector<8x128xbf16>
    %72 = vector.extract_strided_slice %9 {offsets = [0, 1, 3, 0], sizes = [8, 1, 1, 128], strides = [1, 1, 1, 1]} : vector<8x5x5x128xbf16> to vector<8x1x1x128xbf16>
    %73 = vector.shape_cast %72 : vector<8x1x1x128xbf16> to vector<8x128xbf16>
    %74 = vector.extract_strided_slice %9 {offsets = [0, 1, 4, 0], sizes = [8, 1, 1, 128], strides = [1, 1, 1, 1]} : vector<8x5x5x128xbf16> to vector<8x1x1x128xbf16>
    %75 = vector.shape_cast %74 : vector<8x1x1x128xbf16> to vector<8x128xbf16>
    %76 = vector.extract_strided_slice %9 {offsets = [0, 2, 2, 0], sizes = [8, 1, 1, 128], strides = [1, 1, 1, 1]} : vector<8x5x5x128xbf16> to vector<8x1x1x128xbf16>
    %77 = vector.shape_cast %76 : vector<8x1x1x128xbf16> to vector<8x128xbf16>
    %78 = vector.extract_strided_slice %9 {offsets = [0, 2, 3, 0], sizes = [8, 1, 1, 128], strides = [1, 1, 1, 1]} : vector<8x5x5x128xbf16> to vector<8x1x1x128xbf16>
    %79 = vector.shape_cast %78 : vector<8x1x1x128xbf16> to vector<8x128xbf16>
    %80 = vector.extract_strided_slice %9 {offsets = [0, 2, 4, 0], sizes = [8, 1, 1, 128], strides = [1, 1, 1, 1]} : vector<8x5x5x128xbf16> to vector<8x1x1x128xbf16>
    %81 = vector.shape_cast %80 : vector<8x1x1x128xbf16> to vector<8x128xbf16>
    %82 = tpu.concatenate %65, %67, %69, %71, %73, %75, %77, %79, %81 in 1 : vector<8x128xbf16>, vector<8x128xbf16>, vector<8x128xbf16>, vector<8x128xbf16>, vector<8x128xbf16>, vector<8x128xbf16>, vector<8x128xbf16>, vector<8x128xbf16>, vector<8x128xbf16> -> vector<8x1152xbf16>
    %c0_18 = arith.constant 0 : index
    %c0_19 = arith.constant 0 : index
    %83 = vector.load %arg4[%c0_18, %c0_19] : memref<1152x256xbf16, #tpu.memory_space<vmem>>, vector<1152x256xbf16>
    %cst_20 = arith.constant dense<0.000000e+00> : vector<8x256xf32>
    %84 = tpu.matmul %82, %83, %cst_20 {dimension_numbers = #tpu.dot_dimension_numbers<[1], [0], [0], [1], [0, 0, 1, 1], [], []>} : vector<8x1152xbf16>, vector<1152x256xbf16>, vector<8x256xf32> -> vector<8x256xf32>
    %c0_21 = arith.constant 0 : index
    %c0_22 = arith.constant 0 : index
    %85 = vector.load %arg5[%c0_21, %c0_22] : memref<1x256xf32, #tpu.memory_space<vmem>>, vector<1x256xf32>
    %86 = vector.broadcast %85 : vector<1x256xf32> to vector<8x256xf32>
    %87 = arith.addf %84, %86 : vector<8x256xf32>
    %cst_23 = arith.constant 0.000000e+00 : f32
    %88 = vector.broadcast %cst_23 : f32 to vector<8x256xf32>
    %89 = arith.maximumf %87, %88 : vector<8x256xf32>
    %90 = arith.truncf %89 : vector<8x256xf32> to vector<8x256xbf16>
    %91 = vector.extract_strided_slice %9 {offsets = [0, 1, 0, 0], sizes = [8, 1, 1, 128], strides = [1, 1, 1, 1]} : vector<8x5x5x128xbf16> to vector<8x1x1x128xbf16>
    %92 = vector.shape_cast %91 : vector<8x1x1x128xbf16> to vector<8x128xbf16>
    %93 = vector.extract_strided_slice %9 {offsets = [0, 1, 1, 0], sizes = [8, 1, 1, 128], strides = [1, 1, 1, 1]} : vector<8x5x5x128xbf16> to vector<8x1x1x128xbf16>
    %94 = vector.shape_cast %93 : vector<8x1x1x128xbf16> to vector<8x128xbf16>
    %95 = vector.extract_strided_slice %9 {offsets = [0, 1, 2, 0], sizes = [8, 1, 1, 128], strides = [1, 1, 1, 1]} : vector<8x5x5x128xbf16> to vector<8x1x1x128xbf16>
    %96 = vector.shape_cast %95 : vector<8x1x1x128xbf16> to vector<8x128xbf16>
    %97 = vector.extract_strided_slice %9 {offsets = [0, 2, 0, 0], sizes = [8, 1, 1, 128], strides = [1, 1, 1, 1]} : vector<8x5x5x128xbf16> to vector<8x1x1x128xbf16>
    %98 = vector.shape_cast %97 : vector<8x1x1x128xbf16> to vector<8x128xbf16>
    %99 = vector.extract_strided_slice %9 {offsets = [0, 2, 1, 0], sizes = [8, 1, 1, 128], strides = [1, 1, 1, 1]} : vector<8x5x5x128xbf16> to vector<8x1x1x128xbf16>
    %100 = vector.shape_cast %99 : vector<8x1x1x128xbf16> to vector<8x128xbf16>
    %101 = vector.extract_strided_slice %9 {offsets = [0, 2, 2, 0], sizes = [8, 1, 1, 128], strides = [1, 1, 1, 1]} : vector<8x5x5x128xbf16> to vector<8x1x1x128xbf16>
    %102 = vector.shape_cast %101 : vector<8x1x1x128xbf16> to vector<8x128xbf16>
    %103 = vector.extract_strided_slice %9 {offsets = [0, 3, 0, 0], sizes = [8, 1, 1, 128], strides = [1, 1, 1, 1]} : vector<8x5x5x128xbf16> to vector<8x1x1x128xbf16>
    %104 = vector.shape_cast %103 : vector<8x1x1x128xbf16> to vector<8x128xbf16>
    %105 = vector.extract_strided_slice %9 {offsets = [0, 3, 1, 0], sizes = [8, 1, 1, 128], strides = [1, 1, 1, 1]} : vector<8x5x5x128xbf16> to vector<8x1x1x128xbf16>
    %106 = vector.shape_cast %105 : vector<8x1x1x128xbf16> to vector<8x128xbf16>
    %107 = vector.extract_strided_slice %9 {offsets = [0, 3, 2, 0], sizes = [8, 1, 1, 128], strides = [1, 1, 1, 1]} : vector<8x5x5x128xbf16> to vector<8x1x1x128xbf16>
    %108 = vector.shape_cast %107 : vector<8x1x1x128xbf16> to vector<8x128xbf16>
    %109 = tpu.concatenate %92, %94, %96, %98, %100, %102, %104, %106, %108 in 1 : vector<8x128xbf16>, vector<8x128xbf16>, vector<8x128xbf16>, vector<8x128xbf16>, vector<8x128xbf16>, vector<8x128xbf16>, vector<8x128xbf16>, vector<8x128xbf16>, vector<8x128xbf16> -> vector<8x1152xbf16>
    %c0_24 = arith.constant 0 : index
    %c0_25 = arith.constant 0 : index
    %110 = vector.load %arg4[%c0_24, %c0_25] : memref<1152x256xbf16, #tpu.memory_space<vmem>>, vector<1152x256xbf16>
    %cst_26 = arith.constant dense<0.000000e+00> : vector<8x256xf32>
    %111 = tpu.matmul %109, %110, %cst_26 {dimension_numbers = #tpu.dot_dimension_numbers<[1], [0], [0], [1], [0, 0, 1, 1], [], []>} : vector<8x1152xbf16>, vector<1152x256xbf16>, vector<8x256xf32> -> vector<8x256xf32>
    %c0_27 = arith.constant 0 : index
    %c0_28 = arith.constant 0 : index
    %112 = vector.load %arg5[%c0_27, %c0_28] : memref<1x256xf32, #tpu.memory_space<vmem>>, vector<1x256xf32>
    %113 = vector.broadcast %112 : vector<1x256xf32> to vector<8x256xf32>
    %114 = arith.addf %111, %113 : vector<8x256xf32>
    %cst_29 = arith.constant 0.000000e+00 : f32
    %115 = vector.broadcast %cst_29 : f32 to vector<8x256xf32>
    %116 = arith.maximumf %114, %115 : vector<8x256xf32>
    %117 = arith.truncf %116 : vector<8x256xf32> to vector<8x256xbf16>
    %118 = vector.extract_strided_slice %9 {offsets = [0, 1, 1, 0], sizes = [8, 1, 1, 128], strides = [1, 1, 1, 1]} : vector<8x5x5x128xbf16> to vector<8x1x1x128xbf16>
    %119 = vector.shape_cast %118 : vector<8x1x1x128xbf16> to vector<8x128xbf16>
    %120 = vector.extract_strided_slice %9 {offsets = [0, 1, 2, 0], sizes = [8, 1, 1, 128], strides = [1, 1, 1, 1]} : vector<8x5x5x128xbf16> to vector<8x1x1x128xbf16>
    %121 = vector.shape_cast %120 : vector<8x1x1x128xbf16> to vector<8x128xbf16>
    %122 = vector.extract_strided_slice %9 {offsets = [0, 1, 3, 0], sizes = [8, 1, 1, 128], strides = [1, 1, 1, 1]} : vector<8x5x5x128xbf16> to vector<8x1x1x128xbf16>
    %123 = vector.shape_cast %122 : vector<8x1x1x128xbf16> to vector<8x128xbf16>
    %124 = vector.extract_strided_slice %9 {offsets = [0, 2, 1, 0], sizes = [8, 1, 1, 128], strides = [1, 1, 1, 1]} : vector<8x5x5x128xbf16> to vector<8x1x1x128xbf16>
    %125 = vector.shape_cast %124 : vector<8x1x1x128xbf16> to vector<8x128xbf16>
    %126 = vector.extract_strided_slice %9 {offsets = [0, 2, 2, 0], sizes = [8, 1, 1, 128], strides = [1, 1, 1, 1]} : vector<8x5x5x128xbf16> to vector<8x1x1x128xbf16>
    %127 = vector.shape_cast %126 : vector<8x1x1x128xbf16> to vector<8x128xbf16>
    %128 = vector.extract_strided_slice %9 {offsets = [0, 2, 3, 0], sizes = [8, 1, 1, 128], strides = [1, 1, 1, 1]} : vector<8x5x5x128xbf16> to vector<8x1x1x128xbf16>
    %129 = vector.shape_cast %128 : vector<8x1x1x128xbf16> to vector<8x128xbf16>
    %130 = vector.extract_strided_slice %9 {offsets = [0, 3, 1, 0], sizes = [8, 1, 1, 128], strides = [1, 1, 1, 1]} : vector<8x5x5x128xbf16> to vector<8x1x1x128xbf16>
    %131 = vector.shape_cast %130 : vector<8x1x1x128xbf16> to vector<8x128xbf16>
    %132 = vector.extract_strided_slice %9 {offsets = [0, 3, 2, 0], sizes = [8, 1, 1, 128], strides = [1, 1, 1, 1]} : vector<8x5x5x128xbf16> to vector<8x1x1x128xbf16>
    %133 = vector.shape_cast %132 : vector<8x1x1x128xbf16> to vector<8x128xbf16>
    %134 = vector.extract_strided_slice %9 {offsets = [0, 3, 3, 0], sizes = [8, 1, 1, 128], strides = [1, 1, 1, 1]} : vector<8x5x5x128xbf16> to vector<8x1x1x128xbf16>
    %135 = vector.shape_cast %134 : vector<8x1x1x128xbf16> to vector<8x128xbf16>
    %136 = tpu.concatenate %119, %121, %123, %125, %127, %129, %131, %133, %135 in 1 : vector<8x128xbf16>, vector<8x128xbf16>, vector<8x128xbf16>, vector<8x128xbf16>, vector<8x128xbf16>, vector<8x128xbf16>, vector<8x128xbf16>, vector<8x128xbf16>, vector<8x128xbf16> -> vector<8x1152xbf16>
    %c0_30 = arith.constant 0 : index
    %c0_31 = arith.constant 0 : index
    %137 = vector.load %arg4[%c0_30, %c0_31] : memref<1152x256xbf16, #tpu.memory_space<vmem>>, vector<1152x256xbf16>
    %cst_32 = arith.constant dense<0.000000e+00> : vector<8x256xf32>
    %138 = tpu.matmul %136, %137, %cst_32 {dimension_numbers = #tpu.dot_dimension_numbers<[1], [0], [0], [1], [0, 0, 1, 1], [], []>} : vector<8x1152xbf16>, vector<1152x256xbf16>, vector<8x256xf32> -> vector<8x256xf32>
    %c0_33 = arith.constant 0 : index
    %c0_34 = arith.constant 0 : index
    %139 = vector.load %arg5[%c0_33, %c0_34] : memref<1x256xf32, #tpu.memory_space<vmem>>, vector<1x256xf32>
    %140 = vector.broadcast %139 : vector<1x256xf32> to vector<8x256xf32>
    %141 = arith.addf %138, %140 : vector<8x256xf32>
    %cst_35 = arith.constant 0.000000e+00 : f32
    %142 = vector.broadcast %cst_35 : f32 to vector<8x256xf32>
    %143 = arith.maximumf %141, %142 : vector<8x256xf32>
    %144 = arith.truncf %143 : vector<8x256xf32> to vector<8x256xbf16>
    %145 = vector.extract_strided_slice %9 {offsets = [0, 1, 2, 0], sizes = [8, 1, 1, 128], strides = [1, 1, 1, 1]} : vector<8x5x5x128xbf16> to vector<8x1x1x128xbf16>
    %146 = vector.shape_cast %145 : vector<8x1x1x128xbf16> to vector<8x128xbf16>
    %147 = vector.extract_strided_slice %9 {offsets = [0, 1, 3, 0], sizes = [8, 1, 1, 128], strides = [1, 1, 1, 1]} : vector<8x5x5x128xbf16> to vector<8x1x1x128xbf16>
    %148 = vector.shape_cast %147 : vector<8x1x1x128xbf16> to vector<8x128xbf16>
    %149 = vector.extract_strided_slice %9 {offsets = [0, 1, 4, 0], sizes = [8, 1, 1, 128], strides = [1, 1, 1, 1]} : vector<8x5x5x128xbf16> to vector<8x1x1x128xbf16>
    %150 = vector.shape_cast %149 : vector<8x1x1x128xbf16> to vector<8x128xbf16>
    %151 = vector.extract_strided_slice %9 {offsets = [0, 2, 2, 0], sizes = [8, 1, 1, 128], strides = [1, 1, 1, 1]} : vector<8x5x5x128xbf16> to vector<8x1x1x128xbf16>
    %152 = vector.shape_cast %151 : vector<8x1x1x128xbf16> to vector<8x128xbf16>
    %153 = vector.extract_strided_slice %9 {offsets = [0, 2, 3, 0], sizes = [8, 1, 1, 128], strides = [1, 1, 1, 1]} : vector<8x5x5x128xbf16> to vector<8x1x1x128xbf16>
    %154 = vector.shape_cast %153 : vector<8x1x1x128xbf16> to vector<8x128xbf16>
    %155 = vector.extract_strided_slice %9 {offsets = [0, 2, 4, 0], sizes = [8, 1, 1, 128], strides = [1, 1, 1, 1]} : vector<8x5x5x128xbf16> to vector<8x1x1x128xbf16>
    %156 = vector.shape_cast %155 : vector<8x1x1x128xbf16> to vector<8x128xbf16>
    %157 = vector.extract_strided_slice %9 {offsets = [0, 3, 2, 0], sizes = [8, 1, 1, 128], strides = [1, 1, 1, 1]} : vector<8x5x5x128xbf16> to vector<8x1x1x128xbf16>
    %158 = vector.shape_cast %157 : vector<8x1x1x128xbf16> to vector<8x128xbf16>
    %159 = vector.extract_strided_slice %9 {offsets = [0, 3, 3, 0], sizes = [8, 1, 1, 128], strides = [1, 1, 1, 1]} : vector<8x5x5x128xbf16> to vector<8x1x1x128xbf16>
    %160 = vector.shape_cast %159 : vector<8x1x1x128xbf16> to vector<8x128xbf16>
    %161 = vector.extract_strided_slice %9 {offsets = [0, 3, 4, 0], sizes = [8, 1, 1, 128], strides = [1, 1, 1, 1]} : vector<8x5x5x128xbf16> to vector<8x1x1x128xbf16>
    %162 = vector.shape_cast %161 : vector<8x1x1x128xbf16> to vector<8x128xbf16>
    %163 = tpu.concatenate %146, %148, %150, %152, %154, %156, %158, %160, %162 in 1 : vector<8x128xbf16>, vector<8x128xbf16>, vector<8x128xbf16>, vector<8x128xbf16>, vector<8x128xbf16>, vector<8x128xbf16>, vector<8x128xbf16>, vector<8x128xbf16>, vector<8x128xbf16> -> vector<8x1152xbf16>
    %c0_36 = arith.constant 0 : index
    %c0_37 = arith.constant 0 : index
    %164 = vector.load %arg4[%c0_36, %c0_37] : memref<1152x256xbf16, #tpu.memory_space<vmem>>, vector<1152x256xbf16>
    %cst_38 = arith.constant dense<0.000000e+00> : vector<8x256xf32>
    %165 = tpu.matmul %163, %164, %cst_38 {dimension_numbers = #tpu.dot_dimension_numbers<[1], [0], [0], [1], [0, 0, 1, 1], [], []>} : vector<8x1152xbf16>, vector<1152x256xbf16>, vector<8x256xf32> -> vector<8x256xf32>
    %c0_39 = arith.constant 0 : index
    %c0_40 = arith.constant 0 : index
    %166 = vector.load %arg5[%c0_39, %c0_40] : memref<1x256xf32, #tpu.memory_space<vmem>>, vector<1x256xf32>
    %167 = vector.broadcast %166 : vector<1x256xf32> to vector<8x256xf32>
    %168 = arith.addf %165, %167 : vector<8x256xf32>
    %cst_41 = arith.constant 0.000000e+00 : f32
    %169 = vector.broadcast %cst_41 : f32 to vector<8x256xf32>
    %170 = arith.maximumf %168, %169 : vector<8x256xf32>
    %171 = arith.truncf %170 : vector<8x256xf32> to vector<8x256xbf16>
    %172 = vector.extract_strided_slice %9 {offsets = [0, 2, 0, 0], sizes = [8, 1, 1, 128], strides = [1, 1, 1, 1]} : vector<8x5x5x128xbf16> to vector<8x1x1x128xbf16>
    %173 = vector.shape_cast %172 : vector<8x1x1x128xbf16> to vector<8x128xbf16>
    %174 = vector.extract_strided_slice %9 {offsets = [0, 2, 1, 0], sizes = [8, 1, 1, 128], strides = [1, 1, 1, 1]} : vector<8x5x5x128xbf16> to vector<8x1x1x128xbf16>
    %175 = vector.shape_cast %174 : vector<8x1x1x128xbf16> to vector<8x128xbf16>
    %176 = vector.extract_strided_slice %9 {offsets = [0, 2, 2, 0], sizes = [8, 1, 1, 128], strides = [1, 1, 1, 1]} : vector<8x5x5x128xbf16> to vector<8x1x1x128xbf16>
    %177 = vector.shape_cast %176 : vector<8x1x1x128xbf16> to vector<8x128xbf16>
    %178 = vector.extract_strided_slice %9 {offsets = [0, 3, 0, 0], sizes = [8, 1, 1, 128], strides = [1, 1, 1, 1]} : vector<8x5x5x128xbf16> to vector<8x1x1x128xbf16>
    %179 = vector.shape_cast %178 : vector<8x1x1x128xbf16> to vector<8x128xbf16>
    %180 = vector.extract_strided_slice %9 {offsets = [0, 3, 1, 0], sizes = [8, 1, 1, 128], strides = [1, 1, 1, 1]} : vector<8x5x5x128xbf16> to vector<8x1x1x128xbf16>
    %181 = vector.shape_cast %180 : vector<8x1x1x128xbf16> to vector<8x128xbf16>
    %182 = vector.extract_strided_slice %9 {offsets = [0, 3, 2, 0], sizes = [8, 1, 1, 128], strides = [1, 1, 1, 1]} : vector<8x5x5x128xbf16> to vector<8x1x1x128xbf16>
    %183 = vector.shape_cast %182 : vector<8x1x1x128xbf16> to vector<8x128xbf16>
    %184 = vector.extract_strided_slice %9 {offsets = [0, 4, 0, 0], sizes = [8, 1, 1, 128], strides = [1, 1, 1, 1]} : vector<8x5x5x128xbf16> to vector<8x1x1x128xbf16>
    %185 = vector.shape_cast %184 : vector<8x1x1x128xbf16> to vector<8x128xbf16>
    %186 = vector.extract_strided_slice %9 {offsets = [0, 4, 1, 0], sizes = [8, 1, 1, 128], strides = [1, 1, 1, 1]} : vector<8x5x5x128xbf16> to vector<8x1x1x128xbf16>
    %187 = vector.shape_cast %186 : vector<8x1x1x128xbf16> to vector<8x128xbf16>
    %188 = vector.extract_strided_slice %9 {offsets = [0, 4, 2, 0], sizes = [8, 1, 1, 128], strides = [1, 1, 1, 1]} : vector<8x5x5x128xbf16> to vector<8x1x1x128xbf16>
    %189 = vector.shape_cast %188 : vector<8x1x1x128xbf16> to vector<8x128xbf16>
    %190 = tpu.concatenate %173, %175, %177, %179, %181, %183, %185, %187, %189 in 1 : vector<8x128xbf16>, vector<8x128xbf16>, vector<8x128xbf16>, vector<8x128xbf16>, vector<8x128xbf16>, vector<8x128xbf16>, vector<8x128xbf16>, vector<8x128xbf16>, vector<8x128xbf16> -> vector<8x1152xbf16>
    %c0_42 = arith.constant 0 : index
    %c0_43 = arith.constant 0 : index
    %191 = vector.load %arg4[%c0_42, %c0_43] : memref<1152x256xbf16, #tpu.memory_space<vmem>>, vector<1152x256xbf16>
    %cst_44 = arith.constant dense<0.000000e+00> : vector<8x256xf32>
    %192 = tpu.matmul %190, %191, %cst_44 {dimension_numbers = #tpu.dot_dimension_numbers<[1], [0], [0], [1], [0, 0, 1, 1], [], []>} : vector<8x1152xbf16>, vector<1152x256xbf16>, vector<8x256xf32> -> vector<8x256xf32>
    %c0_45 = arith.constant 0 : index
    %c0_46 = arith.constant 0 : index
    %193 = vector.load %arg5[%c0_45, %c0_46] : memref<1x256xf32, #tpu.memory_space<vmem>>, vector<1x256xf32>
    %194 = vector.broadcast %193 : vector<1x256xf32> to vector<8x256xf32>
    %195 = arith.addf %192, %194 : vector<8x256xf32>
    %cst_47 = arith.constant 0.000000e+00 : f32
    %196 = vector.broadcast %cst_47 : f32 to vector<8x256xf32>
    %197 = arith.maximumf %195, %196 : vector<8x256xf32>
    %198 = arith.truncf %197 : vector<8x256xf32> to vector<8x256xbf16>
    %199 = vector.extract_strided_slice %9 {offsets = [0, 2, 1, 0], sizes = [8, 1, 1, 128], strides = [1, 1, 1, 1]} : vector<8x5x5x128xbf16> to vector<8x1x1x128xbf16>
    %200 = vector.shape_cast %199 : vector<8x1x1x128xbf16> to vector<8x128xbf16>
    %201 = vector.extract_strided_slice %9 {offsets = [0, 2, 2, 0], sizes = [8, 1, 1, 128], strides = [1, 1, 1, 1]} : vector<8x5x5x128xbf16> to vector<8x1x1x128xbf16>
    %202 = vector.shape_cast %201 : vector<8x1x1x128xbf16> to vector<8x128xbf16>
    %203 = vector.extract_strided_slice %9 {offsets = [0, 2, 3, 0], sizes = [8, 1, 1, 128], strides = [1, 1, 1, 1]} : vector<8x5x5x128xbf16> to vector<8x1x1x128xbf16>
    %204 = vector.shape_cast %203 : vector<8x1x1x128xbf16> to vector<8x128xbf16>
    %205 = vector.extract_strided_slice %9 {offsets = [0, 3, 1, 0], sizes = [8, 1, 1, 128], strides = [1, 1, 1, 1]} : vector<8x5x5x128xbf16> to vector<8x1x1x128xbf16>
    %206 = vector.shape_cast %205 : vector<8x1x1x128xbf16> to vector<8x128xbf16>
    %207 = vector.extract_strided_slice %9 {offsets = [0, 3, 2, 0], sizes = [8, 1, 1, 128], strides = [1, 1, 1, 1]} : vector<8x5x5x128xbf16> to vector<8x1x1x128xbf16>
    %208 = vector.shape_cast %207 : vector<8x1x1x128xbf16> to vector<8x128xbf16>
    %209 = vector.extract_strided_slice %9 {offsets = [0, 3, 3, 0], sizes = [8, 1, 1, 128], strides = [1, 1, 1, 1]} : vector<8x5x5x128xbf16> to vector<8x1x1x128xbf16>
    %210 = vector.shape_cast %209 : vector<8x1x1x128xbf16> to vector<8x128xbf16>
    %211 = vector.extract_strided_slice %9 {offsets = [0, 4, 1, 0], sizes = [8, 1, 1, 128], strides = [1, 1, 1, 1]} : vector<8x5x5x128xbf16> to vector<8x1x1x128xbf16>
    %212 = vector.shape_cast %211 : vector<8x1x1x128xbf16> to vector<8x128xbf16>
    %213 = vector.extract_strided_slice %9 {offsets = [0, 4, 2, 0], sizes = [8, 1, 1, 128], strides = [1, 1, 1, 1]} : vector<8x5x5x128xbf16> to vector<8x1x1x128xbf16>
    %214 = vector.shape_cast %213 : vector<8x1x1x128xbf16> to vector<8x128xbf16>
    %215 = vector.extract_strided_slice %9 {offsets = [0, 4, 3, 0], sizes = [8, 1, 1, 128], strides = [1, 1, 1, 1]} : vector<8x5x5x128xbf16> to vector<8x1x1x128xbf16>
    %216 = vector.shape_cast %215 : vector<8x1x1x128xbf16> to vector<8x128xbf16>
    %217 = tpu.concatenate %200, %202, %204, %206, %208, %210, %212, %214, %216 in 1 : vector<8x128xbf16>, vector<8x128xbf16>, vector<8x128xbf16>, vector<8x128xbf16>, vector<8x128xbf16>, vector<8x128xbf16>, vector<8x128xbf16>, vector<8x128xbf16>, vector<8x128xbf16> -> vector<8x1152xbf16>
    %c0_48 = arith.constant 0 : index
    %c0_49 = arith.constant 0 : index
    %218 = vector.load %arg4[%c0_48, %c0_49] : memref<1152x256xbf16, #tpu.memory_space<vmem>>, vector<1152x256xbf16>
    %cst_50 = arith.constant dense<0.000000e+00> : vector<8x256xf32>
    %219 = tpu.matmul %217, %218, %cst_50 {dimension_numbers = #tpu.dot_dimension_numbers<[1], [0], [0], [1], [0, 0, 1, 1], [], []>} : vector<8x1152xbf16>, vector<1152x256xbf16>, vector<8x256xf32> -> vector<8x256xf32>
    %c0_51 = arith.constant 0 : index
    %c0_52 = arith.constant 0 : index
    %220 = vector.load %arg5[%c0_51, %c0_52] : memref<1x256xf32, #tpu.memory_space<vmem>>, vector<1x256xf32>
    %221 = vector.broadcast %220 : vector<1x256xf32> to vector<8x256xf32>
    %222 = arith.addf %219, %221 : vector<8x256xf32>
    %cst_53 = arith.constant 0.000000e+00 : f32
    %223 = vector.broadcast %cst_53 : f32 to vector<8x256xf32>
    %224 = arith.maximumf %222, %223 : vector<8x256xf32>
    %225 = arith.truncf %224 : vector<8x256xf32> to vector<8x256xbf16>
    %226 = vector.extract_strided_slice %9 {offsets = [0, 2, 2, 0], sizes = [8, 1, 1, 128], strides = [1, 1, 1, 1]} : vector<8x5x5x128xbf16> to vector<8x1x1x128xbf16>
    %227 = vector.shape_cast %226 : vector<8x1x1x128xbf16> to vector<8x128xbf16>
    %228 = vector.extract_strided_slice %9 {offsets = [0, 2, 3, 0], sizes = [8, 1, 1, 128], strides = [1, 1, 1, 1]} : vector<8x5x5x128xbf16> to vector<8x1x1x128xbf16>
    %229 = vector.shape_cast %228 : vector<8x1x1x128xbf16> to vector<8x128xbf16>
    %230 = vector.extract_strided_slice %9 {offsets = [0, 2, 4, 0], sizes = [8, 1, 1, 128], strides = [1, 1, 1, 1]} : vector<8x5x5x128xbf16> to vector<8x1x1x128xbf16>
    %231 = vector.shape_cast %230 : vector<8x1x1x128xbf16> to vector<8x128xbf16>
    %232 = vector.extract_strided_slice %9 {offsets = [0, 3, 2, 0], sizes = [8, 1, 1, 128], strides = [1, 1, 1, 1]} : vector<8x5x5x128xbf16> to vector<8x1x1x128xbf16>
    %233 = vector.shape_cast %232 : vector<8x1x1x128xbf16> to vector<8x128xbf16>
    %234 = vector.extract_strided_slice %9 {offsets = [0, 3, 3, 0], sizes = [8, 1, 1, 128], strides = [1, 1, 1, 1]} : vector<8x5x5x128xbf16> to vector<8x1x1x128xbf16>
    %235 = vector.shape_cast %234 : vector<8x1x1x128xbf16> to vector<8x128xbf16>
    %236 = vector.extract_strided_slice %9 {offsets = [0, 3, 4, 0], sizes = [8, 1, 1, 128], strides = [1, 1, 1, 1]} : vector<8x5x5x128xbf16> to vector<8x1x1x128xbf16>
    %237 = vector.shape_cast %236 : vector<8x1x1x128xbf16> to vector<8x128xbf16>
    %238 = vector.extract_strided_slice %9 {offsets = [0, 4, 2, 0], sizes = [8, 1, 1, 128], strides = [1, 1, 1, 1]} : vector<8x5x5x128xbf16> to vector<8x1x1x128xbf16>
    %239 = vector.shape_cast %238 : vector<8x1x1x128xbf16> to vector<8x128xbf16>
    %240 = vector.extract_strided_slice %9 {offsets = [0, 4, 3, 0], sizes = [8, 1, 1, 128], strides = [1, 1, 1, 1]} : vector<8x5x5x128xbf16> to vector<8x1x1x128xbf16>
    %241 = vector.shape_cast %240 : vector<8x1x1x128xbf16> to vector<8x128xbf16>
    %242 = vector.extract_strided_slice %9 {offsets = [0, 4, 4, 0], sizes = [8, 1, 1, 128], strides = [1, 1, 1, 1]} : vector<8x5x5x128xbf16> to vector<8x1x1x128xbf16>
    %243 = vector.shape_cast %242 : vector<8x1x1x128xbf16> to vector<8x128xbf16>
    %244 = tpu.concatenate %227, %229, %231, %233, %235, %237, %239, %241, %243 in 1 : vector<8x128xbf16>, vector<8x128xbf16>, vector<8x128xbf16>, vector<8x128xbf16>, vector<8x128xbf16>, vector<8x128xbf16>, vector<8x128xbf16>, vector<8x128xbf16>, vector<8x128xbf16> -> vector<8x1152xbf16>
    %c0_54 = arith.constant 0 : index
    %c0_55 = arith.constant 0 : index
    %245 = vector.load %arg4[%c0_54, %c0_55] : memref<1152x256xbf16, #tpu.memory_space<vmem>>, vector<1152x256xbf16>
    %cst_56 = arith.constant dense<0.000000e+00> : vector<8x256xf32>
    %246 = tpu.matmul %244, %245, %cst_56 {dimension_numbers = #tpu.dot_dimension_numbers<[1], [0], [0], [1], [0, 0, 1, 1], [], []>} : vector<8x1152xbf16>, vector<1152x256xbf16>, vector<8x256xf32> -> vector<8x256xf32>
    %c0_57 = arith.constant 0 : index
    %c0_58 = arith.constant 0 : index
    %247 = vector.load %arg5[%c0_57, %c0_58] : memref<1x256xf32, #tpu.memory_space<vmem>>, vector<1x256xf32>
    %248 = vector.broadcast %247 : vector<1x256xf32> to vector<8x256xf32>
    %249 = arith.addf %246, %248 : vector<8x256xf32>
    %cst_59 = arith.constant 0.000000e+00 : f32
    %250 = vector.broadcast %cst_59 : f32 to vector<8x256xf32>
    %251 = arith.maximumf %249, %250 : vector<8x256xf32>
    %252 = arith.truncf %251 : vector<8x256xf32> to vector<8x256xbf16>
    %253 = tpu.concatenate %36, %63, %90, %117, %144, %171, %198, %225, %252 in 1 : vector<8x256xbf16>, vector<8x256xbf16>, vector<8x256xbf16>, vector<8x256xbf16>, vector<8x256xbf16>, vector<8x256xbf16>, vector<8x256xbf16>, vector<8x256xbf16>, vector<8x256xbf16> -> vector<8x2304xbf16>
    %c0_60 = arith.constant 0 : index
    %c0_61 = arith.constant 0 : index
    %254 = vector.load %arg6[%c0_60, %c0_61] : memref<2304x128xbf16, #tpu.memory_space<vmem>>, vector<2304x128xbf16>
    %cst_62 = arith.constant dense<0.000000e+00> : vector<8x128xf32>
    %255 = tpu.matmul %253, %254, %cst_62 {dimension_numbers = #tpu.dot_dimension_numbers<[1], [0], [0], [1], [0, 0, 1, 1], [], []>} : vector<8x2304xbf16>, vector<2304x128xbf16>, vector<8x128xf32> -> vector<8x128xf32>
    %c0_63 = arith.constant 0 : index
    %c0_64 = arith.constant 0 : index
    %256 = vector.load %arg7[%c0_63, %c0_64] : memref<1x128xf32, #tpu.memory_space<vmem>>, vector<1x128xf32>
    %257 = vector.broadcast %256 : vector<1x128xf32> to vector<8x128xf32>
    %258 = arith.addf %255, %257 : vector<8x128xf32>
    %cst_65 = arith.constant 0.000000e+00 : f32
    %259 = vector.broadcast %cst_65 : f32 to vector<8x128xf32>
    %260 = arith.maximumf %258, %259 : vector<8x128xf32>
    %261 = arith.truncf %260 : vector<8x128xf32> to vector<8x128xbf16>
    %c0_66 = arith.constant 0 : index
    %c0_67 = arith.constant 0 : index
    %262 = vector.load %arg8[%c0_66, %c0_67] : memref<128x128xbf16, #tpu.memory_space<vmem>>, vector<128x128xbf16>
    %cst_68 = arith.constant dense<0.000000e+00> : vector<8x128xf32>
    %263 = tpu.matmul %261, %262, %cst_68 {dimension_numbers = #tpu.dot_dimension_numbers<[1], [0], [0], [1], [0, 0, 1, 1], [], []>} : vector<8x128xbf16>, vector<128x128xbf16>, vector<8x128xf32> -> vector<8x128xf32>
    %c0_69 = arith.constant 0 : index
    %c0_70 = arith.constant 0 : index
    %264 = vector.load %arg9[%c0_69, %c0_70] : memref<1x128xf32, #tpu.memory_space<vmem>>, vector<1x128xf32>
    %265 = vector.broadcast %264 : vector<1x128xf32> to vector<8x128xf32>
    %266 = arith.addf %263, %265 : vector<8x128xf32>
    %c0_71 = arith.constant 0 : index
    %c0_72 = arith.constant 0 : index
    %267 = vector.load %arg10[%c0_71, %c0_72] : memref<8x128xf32, #tpu.memory_space<vmem>>, vector<8x128xf32>
    tpu.vector_store %arg10[%c0_71, %c0_72], %266 {strides = array<i32>} : memref<8x128xf32, #tpu.memory_space<vmem>>, vector<8x128xf32>,
    return
  }
  func.func @transform_0(%arg0: i32) -> (i32, i32) {
    %c0_i32 = arith.constant 0 : i32
    %c0_i32_0 = arith.constant 0 : i32
    return %arg0, %c0_i32 : i32, i32
  }
  func.func @transform_1(%arg0: i32) -> (i32, i32) {
    %c0_i32 = arith.constant 0 : i32
    %c0_i32_0 = arith.constant 0 : i32
    %c0_i32_1 = arith.constant 0 : i32
    return %c0_i32, %c0_i32_0 : i32, i32
  }
  func.func @transform_2(%arg0: i32) -> (i32, i32) {
    %c0_i32 = arith.constant 0 : i32
    %c0_i32_0 = arith.constant 0 : i32
    %c0_i32_1 = arith.constant 0 : i32
    return %c0_i32, %c0_i32_0 : i32, i32
  }
  func.func @transform_3(%arg0: i32) -> (i32, i32) {
    %c0_i32 = arith.constant 0 : i32
    %c0_i32_0 = arith.constant 0 : i32
    %c0_i32_1 = arith.constant 0 : i32
    return %c0_i32, %c0_i32_0 : i32, i32
  }
  func.func @transform_4(%arg0: i32) -> (i32, i32) {
    %c0_i32 = arith.constant 0 : i32
    %c0_i32_0 = arith.constant 0 : i32
    %c0_i32_1 = arith.constant 0 : i32
    return %c0_i32, %c0_i32_0 : i32, i32
  }
  func.func @transform_5(%arg0: i32) -> (i32, i32) {
    %c0_i32 = arith.constant 0 : i32
    %c0_i32_0 = arith.constant 0 : i32
    %c0_i32_1 = arith.constant 0 : i32
    return %c0_i32, %c0_i32_0 : i32, i32
  }
  func.func @transform_6(%arg0: i32) -> (i32, i32) {
    %c0_i32 = arith.constant 0 : i32
    %c0_i32_0 = arith.constant 0 : i32
    %c0_i32_1 = arith.constant 0 : i32
    return %c0_i32, %c0_i32_0 : i32, i32
  }
  func.func @transform_7(%arg0: i32) -> (i32, i32) {
    %c0_i32 = arith.constant 0 : i32
    %c0_i32_0 = arith.constant 0 : i32
    %c0_i32_1 = arith.constant 0 : i32
    return %c0_i32, %c0_i32_0 : i32, i32
  }
  func.func @transform_8(%arg0: i32) -> (i32, i32) {
    %c0_i32 = arith.constant 0 : i32
    %c0_i32_0 = arith.constant 0 : i32
    %c0_i32_1 = arith.constant 0 : i32
    return %c0_i32, %c0_i32_0 : i32, i32
  }
  func.func @transform_9(%arg0: i32) -> (i32, i32) {
    %c0_i32 = arith.constant 0 : i32
    %c0_i32_0 = arith.constant 0 : i32
    return %arg0, %c0_i32 : i32, i32
  }
}

</mosaic_0001>

<llo_original>
// kernel: _lambda_.1
$region0: #{_lambda_.1}
  #allocation0 [shape = 'u32[]', space=smem, size = 0x4, offset = 0x4, fixed_abs, tag = 'smem constant byte address 0x4 - core index']
  #allocation1 [shape = 'u32[144,128]{1,0:T(1,128)}', space=vmem, size = 0x12000, scoped, tag = 'internal scratch']
  %s0 = inlined_call_operand.vmem [shape: bf16[200,128], index: 0, kind: input, shape index: {}]
  %s1 = inlined_call_operand.vmem [shape: bf16[128,128], index: 1, kind: input, shape index: {}]
  %s2 = inlined_call_operand.vmem [shape: f32[1,128], index: 2, kind: input, shape index: {}]
  %s3 = inlined_call_operand.vmem [shape: bf16[1152,256], index: 3, kind: input, shape index: {}]
  %s4 = inlined_call_operand.vmem [shape: f32[1,256], index: 4, kind: input, shape index: {}]
  %s5 = inlined_call_operand.vmem [shape: bf16[2304,128], index: 5, kind: input, shape index: {}]
  %s6 = inlined_call_operand.vmem [shape: f32[1,128], index: 6, kind: input, shape index: {}]
  %s7 = inlined_call_operand.vmem [shape: bf16[128,128], index: 7, kind: input, shape index: {}]
  %s8 = inlined_call_operand.vmem [shape: f32[1,128], index: 8, kind: input, shape index: {}]
  %s9 = inlined_call_operand.vmem [shape: f32[8,128], index: 9, kind: output, shape index: {}]
  %s10 = sld [smem:[#allocation0]]
  $region46: #{_lambda_.1} parent=0
    _
  %s12 = ssub.s32 1, %s10
  %s13 = scalar_select 0, %s12, %s10
  // Predicated region
  $region2: #{_lambda_.1} parent=0 // pred_check
    _
  $region3: #{_lambda_.1} parent=0 // pred_check_branch
    %15 = sbr.rel (0) target = $region5
  $region4: #{_lambda_.1} parent=0 // pred_region
    _
  $region5: #{_lambda_.1} parent=0 // pred_fallthru
    _
  // Predicated region
  $region6: #{_lambda_.1} parent=0 // pred_check
    _
  $region7: #{_lambda_.1} parent=0 // pred_check_branch
    %17 = sbr.rel (0) target = $region9
  $region8: #{_lambda_.1} parent=0 // pred_region
    _
  $region9: #{_lambda_.1} parent=0 // pred_fallthru
    _
  // Predicated region
  $region10: #{_lambda_.1} parent=0 // pred_check
    _
  $region11: #{_lambda_.1} parent=0 // pred_check_branch
    %19 = sbr.rel (0) target = $region13
  $region12: #{_lambda_.1} parent=0 // pred_region
    _
  $region13: #{_lambda_.1} parent=0 // pred_fallthru
    _
  // Predicated region
  $region14: #{_lambda_.1} parent=0 // pred_check
    _
  $region15: #{_lambda_.1} parent=0 // pred_check_branch
    %21 = sbr.rel (0) target = $region17
  $region16: #{_lambda_.1} parent=0 // pred_region
    _
  $region17: #{_lambda_.1} parent=0 // pred_fallthru
    _
  // Predicated region
  $region18: #{_lambda_.1} parent=0 // pred_check
    _
  $region19: #{_lambda_.1} parent=0 // pred_check_branch
    %23 = sbr.rel (0) target = $region21
  $region20: #{_lambda_.1} parent=0 // pred_region
    _
  $region21: #{_lambda_.1} parent=0 // pred_fallthru
    _
  // Predicated region
  $region22: #{_lambda_.1} parent=0 // pred_check
    _
  $region23: #{_lambda_.1} parent=0 // pred_check_branch
    %25 = sbr.rel (0) target = $region25
  $region24: #{_lambda_.1} parent=0 // pred_region
    _
  $region25: #{_lambda_.1} parent=0 // pred_fallthru
    _
  // Predicated region
  $region26: #{_lambda_.1} parent=0 // pred_check
    _
  $region27: #{_lambda_.1} parent=0 // pred_check_branch
    %27 = sbr.rel (0) target = $region29
  $region28: #{_lambda_.1} parent=0 // pred_region
    _
  $region29: #{_lambda_.1} parent=0 // pred_fallthru
    _
  // Predicated region
  $region30: #{_lambda_.1} parent=0 // pred_check
    _
  $region31: #{_lambda_.1} parent=0 // pred_check_branch
    %29 = sbr.rel (0) target = $region33
  $region32: #{_lambda_.1} parent=0 // pred_region
    _
  $region33: #{_lambda_.1} parent=0 // pred_fallthru
    _
  // Predicated region
  $region34: #{_lambda_.1} parent=0 // pred_check
    _
  $region35: #{_lambda_.1} parent=0 // pred_check_branch
    %31 = sbr.rel (0) target = $region37
  $region36: #{_lambda_.1} parent=0 // pred_region
    _
  $region37: #{_lambda_.1} parent=0 // pred_fallthru
    _
  %v33 = vld [vmem:[%s0] sm:$0xf]
  %v34 = vld [vmem:[%s0 + $0x4] sm:$0xf]
  %v35 = vld [vmem:[%s0 + $0x8] sm:$0xf]
  %v36 = vld [vmem:[%s0 + $0xc] sm:$0xf]
  %v37 = vld [vmem:[%s0 + $0x10] sm:$0xf]
  %v38 = vld [vmem:[%s0 + $0x14] sm:$0xf]
  %v39 = vld [vmem:[%s0 + $0x18] sm:$0xf]
  %v40 = vld [vmem:[%s0 + $0x1c] sm:$0xf]
  %v41 = vld [vmem:[%s0 + $0x20] sm:$0xf]
  %v42 = vld [vmem:[%s0 + $0x24] sm:$0xf]
  %v43 = vld [vmem:[%s0 + $0x28] sm:$0xf]
  %v44 = vld [vmem:[%s0 + $0x2c] sm:$0xf]
  %v45 = vld [vmem:[%s0 + $0x30] sm:$0xf]
  %v46 = vld [vmem:[%s0 + $0x34] sm:$0xf]
  %v47 = vld [vmem:[%s0 + $0x38] sm:$0xf]
  %v48 = vld [vmem:[%s0 + $0x3c] sm:$0xf]
  %v49 = vld [vmem:[%s0 + $0x40] sm:$0xf]
  %v50 = vld [vmem:[%s0 + $0x44] sm:$0xf]
  %v51 = vld [vmem:[%s0 + $0x48] sm:$0xf]
  %v52 = vld [vmem:[%s0 + $0x4c] sm:$0xf]
  %v53 = vld [vmem:[%s0 + $0x50] sm:$0xf]
  %v54 = vld [vmem:[%s0 + $0x54] sm:$0xf]
  %v55 = vld [vmem:[%s0 + $0x58] sm:$0xf]
  %v56 = vld [vmem:[%s0 + $0x5c] sm:$0xf]
  %v57 = vld [vmem:[%s0 + $0x60] sm:$0xf]
  %v58 = vld [vmem:[%s1] sm:$0xf]
  %v59 = vld [vmem:[%s1 + $0x4] sm:$0xf]
  %v60 = vld [vmem:[%s1 + $0x8] sm:$0xf]
  %v61 = vld [vmem:[%s1 + $0xc] sm:$0xf]
  %v62 = vld [vmem:[%s1 + $0x10] sm:$0xf]
  %v63 = vld [vmem:[%s1 + $0x14] sm:$0xf]
  %v64 = vld [vmem:[%s1 + $0x18] sm:$0xf]
  %v65 = vld [vmem:[%s1 + $0x1c] sm:$0xf]
  %v66 = vld [vmem:[%s1 + $0x20] sm:$0xf]
  %v67 = vld [vmem:[%s1 + $0x24] sm:$0xf]
  %v68 = vld [vmem:[%s1 + $0x28] sm:$0xf]
  %v69 = vld [vmem:[%s1 + $0x2c] sm:$0xf]
  %v70 = vld [vmem:[%s1 + $0x30] sm:$0xf]
  %v71 = vld [vmem:[%s1 + $0x34] sm:$0xf]
  %v72 = vld [vmem:[%s1 + $0x38] sm:$0xf]
  %v73 = vld [vmem:[%s1 + $0x3c] sm:$0xf]
  %v74 = vld [vmem:[%s2] sm:$0x1]
  %v76 = vlaneseq
  %v77 = vshrl.u32 %v76, 7
  %v78 = vsub.s32 0, %v77
  %v79 = vrot.slane %v74, %v78
  %v106 = vunpack.c.l.b16 %v33
  %v107 = vunpack.c.l.b16 %v34
  %v108 = vunpack.c.l.b16 %v35
  %v109 = vunpack.c.l.b16 %v36
  %v110 = vunpack.c.l.b16 %v37
  %v111 = vunpack.c.l.b16 %v38
  %v112 = vunpack.c.l.b16 %v39
  %v113 = vunpack.c.l.b16 %v40
  %v114 = vunpack.c.l.b16 %v41
  %v115 = vunpack.c.l.b16 %v42
  %v116 = vunpack.c.l.b16 %v43
  %v117 = vunpack.c.l.b16 %v44
  %v118 = vunpack.c.l.b16 %v45
  %v119 = vunpack.c.l.b16 %v46
  %v120 = vunpack.c.l.b16 %v47
  %v121 = vunpack.c.l.b16 %v48
  %v122 = vunpack.c.l.b16 %v49
  %v123 = vunpack.c.l.b16 %v50
  %v124 = vunpack.c.l.b16 %v51
  %v125 = vunpack.c.l.b16 %v52
  %v126 = vunpack.c.l.b16 %v53
  %v127 = vunpack.c.l.b16 %v54
  %v128 = vunpack.c.l.b16 %v55
  %v129 = vunpack.c.l.b16 %v56
  %v130 = vunpack.c.l.b16 %v57
  %v131 = vpack.c.b16 %v107, %v106
  %v132 = vpack.c.b16 %v109, %v108
  %v133 = vpack.c.b16 %v111, %v110
  %v134 = vpack.c.b16 %v113, %v112
  %v135 = vpack.c.b16 %v115, %v114
  %v136 = vpack.c.b16 %v117, %v116
  %v137 = vpack.c.b16 %v119, %v118
  %v138 = vpack.c.b16 %v121, %v120
  %v139 = vpack.c.b16 %v123, %v122
  %v140 = vpack.c.b16 %v125, %v124
  %v141 = vpack.c.b16 %v127, %v126
  %v142 = vpack.c.b16 %v129, %v128
  %v143 = vpack.c.b16 %v130, %v130
  %v173 = vunpack.c.l.b16 %v58
  %v174 = vunpack.c.l.b16 %v59
  %v175 = vunpack.c.l.b16 %v60
  %v176 = vunpack.c.l.b16 %v61
  %v177 = vunpack.c.l.b16 %v62
  %v178 = vunpack.c.l.b16 %v63
  %v179 = vunpack.c.l.b16 %v64
  %v180 = vunpack.c.l.b16 %v65
  %v181 = vunpack.c.l.b16 %v66
  %v182 = vunpack.c.l.b16 %v67
  %v183 = vunpack.c.l.b16 %v68
  %v184 = vunpack.c.l.b16 %v69
  %v185 = vunpack.c.l.b16 %v70
  %v186 = vunpack.c.l.b16 %v71
  %v187 = vunpack.c.l.b16 %v72
  %v188 = vunpack.c.l.b16 %v73
  %v189 = vpack.c.b16 %v174, %v173
  %v190 = vpack.c.b16 %v176, %v175
  %v191 = vpack.c.b16 %v178, %v177
  %v192 = vpack.c.b16 %v180, %v179
  %v193 = vpack.c.b16 %v182, %v181
  %v194 = vpack.c.b16 %v184, %v183
  %v195 = vpack.c.b16 %v186, %v185
  %v196 = vpack.c.b16 %v188, %v187
  %205 = vmatprep.subr.bf16.mxu0 0
  %206 = vmatpush1.bf16.msra.mxu0 %v196
  %207 = vmatprep.subr.bf16.mxu0 0
  %208 = vmatpush1.bf16.msra.mxu0 %v195
  %209 = vmatprep.subr.bf16.mxu0 0
  %210 = vmatpush1.bf16.msra.mxu0 %v194
  %211 = vmatprep.subr.bf16.mxu0 0
  %212 = vmatpush1.bf16.msra.mxu0 %v193
  %213 = vmatprep.subr.bf16.mxu0 0
  %214 = vmatpush1.bf16.msra.mxu0 %v192
  %215 = vmatprep.subr.bf16.mxu0 0
  %216 = vmatpush1.bf16.msra.mxu0 %v191
  %217 = vmatprep.subr.bf16.mxu0 0
  %218 = vmatpush1.bf16.msra.mxu0 %v190
  %219 = vmatprep.subr.bf16.mxu0 0
  %220 = vmatpush1.bf16.msra.mxu0 %v189
  %221 = vmatprep.subr.bf16.mxu0 0
  %222 = vmatpush2.bf16.msra.mxu0 0
  %223 = vmatprep.subr.bf16.mxu0 0
  %224 = vmatpush2.bf16.msra.mxu0 0
  %225 = vmatprep.subr.bf16.mxu0 0
  %226 = vmatpush2.bf16.msra.mxu0 0
  %227 = vmatprep.subr.bf16.mxu0 0
  %228 = vmatpush2.bf16.msra.mxu0 0
  %229 = vmatprep.subr.bf16.mxu0 0
  %230 = vmatpush2.bf16.msra.mxu0 0
  %231 = vmatprep.subr.bf16.mxu0 0
  %232 = vmatpush2.bf16.msra.mxu0 0
  %233 = vmatprep.subr.bf16.mxu0 0
  %234 = vmatpush2.bf16.msra.mxu0 0
  %235 = vmatprep.subr.bf16.mxu0 0
  %236 = vmatpush2.bf16.msra.mxu0 0
  %237 = vmatprep.mubr.bf16.mxu0 0
  %238 = vmatmul.mubr.bf16.gmra.mxu0 %v131
  %v239 = vpop.f32.mrf.mxu0
  %v240 = vadd.f32 %v79, %v239
  %v241 = vpop.f32.mrf.mxu0
  %v242 = vpop.f32.mrf.mxu0
  %v243 = vadd.f32 %v79, %v242
  %v244 = vpop.f32.mrf.mxu0
  %245 = vmatprep.mubr.bf16.mxu0 0
  %246 = vmatmul.mubr.bf16.gmra.mxu0 %v132
  %v247 = vpop.f32.mrf.mxu0
  %v248 = vadd.f32 %v79, %v247
  %v249 = vpop.f32.mrf.mxu0
  %v250 = vpop.f32.mrf.mxu0
  %v251 = vadd.f32 %v79, %v250
  %v252 = vpop.f32.mrf.mxu0
  %253 = vmatprep.mubr.bf16.mxu0 0
  %254 = vmatmul.mubr.bf16.gmra.mxu0 %v133
  %v255 = vpop.f32.mrf.mxu0
  %v256 = vadd.f32 %v79, %v255
  %v257 = vpop.f32.mrf.mxu0
  %v258 = vpop.f32.mrf.mxu0
  %v259 = vadd.f32 %v79, %v258
  %v260 = vpop.f32.mrf.mxu0
  %261 = vmatprep.mubr.bf16.mxu0 0
  %262 = vmatmul.mubr.bf16.gmra.mxu0 %v134
  %v263 = vpop.f32.mrf.mxu0
  %v264 = vadd.f32 %v79, %v263
  %v265 = vpop.f32.mrf.mxu0
  %v266 = vpop.f32.mrf.mxu0
  %v267 = vadd.f32 %v79, %v266
  %v268 = vpop.f32.mrf.mxu0
  %269 = vmatprep.mubr.bf16.mxu0 0
  %270 = vmatmul.mubr.bf16.gmra.mxu0 %v135
  %v271 = vpop.f32.mrf.mxu0
  %v272 = vadd.f32 %v79, %v271
  %v273 = vpop.f32.mrf.mxu0
  %v274 = vpop.f32.mrf.mxu0
  %v275 = vadd.f32 %v79, %v274
  %v276 = vpop.f32.mrf.mxu0
  %277 = vmatprep.mubr.bf16.mxu0 0
  %278 = vmatmul.mubr.bf16.gmra.mxu0 %v136
  %v279 = vpop.f32.mrf.mxu0
  %v280 = vadd.f32 %v79, %v279
  %v281 = vpop.f32.mrf.mxu0
  %v282 = vpop.f32.mrf.mxu0
  %v283 = vadd.f32 %v79, %v282
  %v284 = vpop.f32.mrf.mxu0
  %285 = vmatprep.mubr.bf16.mxu0 0
  %286 = vmatmul.mubr.bf16.gmra.mxu0 %v137
  %v287 = vpop.f32.mrf.mxu0
  %v288 = vadd.f32 %v79, %v287
  %v289 = vpop.f32.mrf.mxu0
  %v290 = vpop.f32.mrf.mxu0
  %v291 = vadd.f32 %v79, %v290
  %v292 = vpop.f32.mrf.mxu0
  %293 = vmatprep.mubr.bf16.mxu0 0
  %294 = vmatmul.mubr.bf16.gmra.mxu0 %v138
  %v295 = vpop.f32.mrf.mxu0
  %v296 = vadd.f32 %v79, %v295
  %v297 = vpop.f32.mrf.mxu0
  %v298 = vpop.f32.mrf.mxu0
  %v299 = vadd.f32 %v79, %v298
  %v300 = vpop.f32.mrf.mxu0
  %301 = vmatprep.mubr.bf16.mxu0 0
  %302 = vmatmul.mubr.bf16.gmra.mxu0 %v139
  %v303 = vpop.f32.mrf.mxu0
  %v304 = vadd.f32 %v79, %v303
  %v305 = vpop.f32.mrf.mxu0
  %v306 = vpop.f32.mrf.mxu0
  %v307 = vadd.f32 %v79, %v306
  %v308 = vpop.f32.mrf.mxu0
  %309 = vmatprep.mubr.bf16.mxu0 0
  %310 = vmatmul.mubr.bf16.gmra.mxu0 %v140
  %v311 = vpop.f32.mrf.mxu0
  %v312 = vadd.f32 %v79, %v311
  %v313 = vpop.f32.mrf.mxu0
  %v314 = vpop.f32.mrf.mxu0
  %v315 = vadd.f32 %v79, %v314
  %v316 = vpop.f32.mrf.mxu0
  %317 = vmatprep.mubr.bf16.mxu0 0
  %318 = vmatmul.mubr.bf16.gmra.mxu0 %v141
  %v319 = vpop.f32.mrf.mxu0
  %v320 = vadd.f32 %v79, %v319
  %v321 = vpop.f32.mrf.mxu0
  %v322 = vpop.f32.mrf.mxu0
  %v323 = vadd.f32 %v79, %v322
  %v324 = vpop.f32.mrf.mxu0
  %325 = vmatprep.mubr.bf16.mxu0 0
  %326 = vmatmul.mubr.bf16.gmra.mxu0 %v142
  %v327 = vpop.f32.mrf.mxu0
  %v328 = vadd.f32 %v79, %v327
  %v329 = vpop.f32.mrf.mxu0
  %v330 = vpop.f32.mrf.mxu0
  %v331 = vadd.f32 %v79, %v330
  %v332 = vpop.f32.mrf.mxu0
  %333 = vmatprep.mubr.bf16.mxu0 0
  %334 = vmatmul.mubr.bf16.gmra.mxu0 %v143
  %v335 = vpop.f32.mrf.mxu0
  %v336 = vadd.f32 %v79, %v335
  %v337 = vpop.f32.mrf.mxu0
  %v338 = vpop.f32.mrf.mxu0
  %v339 = vpop.f32.mrf.mxu0
  %340 = vdwg.mxu0
  %v341 = vmax.f32 %v240, 0.0
  %v342 = vmax.f32 %v243, 0.0
  %v343 = vmax.f32 %v248, 0.0
  %v344 = vmax.f32 %v251, 0.0
  %v345 = vmax.f32 %v256, 0.0
  %v346 = vmax.f32 %v259, 0.0
  %v347 = vmax.f32 %v264, 0.0
  %v348 = vmax.f32 %v267, 0.0
  %v349 = vmax.f32 %v272, 0.0
  %v350 = vmax.f32 %v275, 0.0
  %v351 = vmax.f32 %v280, 0.0
  %v352 = vmax.f32 %v283, 0.0
  %v353 = vmax.f32 %v288, 0.0
  %v354 = vmax.f32 %v291, 0.0
  %v355 = vmax.f32 %v296, 0.0
  %v356 = vmax.f32 %v299, 0.0
  %v357 = vmax.f32 %v304, 0.0
  %v358 = vmax.f32 %v307, 0.0
  %v359 = vmax.f32 %v312, 0.0
  %v360 = vmax.f32 %v315, 0.0
  %v361 = vmax.f32 %v320, 0.0
  %v362 = vmax.f32 %v323, 0.0
  %v363 = vmax.f32 %v328, 0.0
  %v364 = vmax.f32 %v331, 0.0
  %v365 = vmax.f32 %v336, 0.0
  %v366 = vpack.c.bf16 %v342, %v341
  %v367 = vpack.c.bf16 %v344, %v343
  %v368 = vpack.c.bf16 %v346, %v345
  %v369 = vpack.c.bf16 %v348, %v347
  %v370 = vpack.c.bf16 %v350, %v349
  %v371 = vpack.c.bf16 %v352, %v351
  %v372 = vpack.c.bf16 %v354, %v353
  %v373 = vpack.c.bf16 %v356, %v355
  %v374 = vpack.c.bf16 %v358, %v357
  %v375 = vpack.c.bf16 %v360, %v359
  %v376 = vpack.c.bf16 %v362, %v361
  %v377 = vpack.c.bf16 %v364, %v363
  %v378 = vpack.c.bf16 %v365, %v365
  %v392 = vcombine.high %v366, %v366
  %v394 = vunpack.c.l.s4 1966171168
  %v395 = vunpack.c.0.s8 %v394
  %v396 = vlaneseq
  %v397 = vshrl.u32 %v396, 7
  %v398 = vsub.s32 %v395, %v397
  %v399 = vrot.slane %v366, %v398
  %v401 = vunpack.c.l.s4 1966171168
  %v402 = vunpack.c.0.s8 %v401
  %v403 = vlaneseq
  %v404 = vshrl.u32 %v403, 7
  %v405 = vsub.s32 %v402, %v404
  %v406 = vrot.slane %v392, %v405
  %v407 = vcombine.high %v399, %v399
  %v408 = vcombine.high %v406, %v406
  %v410 = vunpack.c.l.s4 1966171168
  %v411 = vunpack.c.0.s8 %v410
  %v412 = vlaneseq
  %v413 = vshrl.u32 %v412, 7
  %v414 = vsub.s32 %v411, %v413
  %v415 = vrot.slane %v399, %v414
  %v417 = vunpack.c.l.s4 1966171168
  %v418 = vunpack.c.0.s8 %v417
  %v419 = vlaneseq
  %v420 = vshrl.u32 %v419, 7
  %v421 = vsub.s32 %v418, %v420
  %v422 = vrot.slane %v406, %v421
  %v424 = vunpack.c.l.s4 1966171168
  %v425 = vunpack.c.0.s8 %v424
  %v426 = vlaneseq
  %v427 = vshrl.u32 %v426, 7
  %v428 = vsub.s32 %v425, %v427
  %v429 = vrot.slane %v407, %v428
  %v431 = vunpack.c.l.s4 1966171168
  %v432 = vunpack.c.0.s8 %v431
  %v433 = vlaneseq
  %v434 = vshrl.u32 %v433, 7
  %v435 = vsub.s32 %v432, %v434
  %v436 = vrot.slane %v408, %v435
  %v437 = vcombine.high %v415, %v415
  %v438 = vcombine.high %v422, %v422
  %v439 = vcombine.high %v429, %v429
  %v440 = vcombine.high %v436, %v436
  %v441 = vcombine.high %v367, %v367
  %v443 = vunpack.c.l.s4 1966171168
  %v444 = vunpack.c.0.s8 %v443
  %v445 = vlaneseq
  %v446 = vshrl.u32 %v445, 7
  %v447 = vsub.s32 %v444, %v446
  %v448 = vrot.slane %v367, %v447
  %v450 = vunpack.c.l.s4 1966171168
  %v451 = vunpack.c.0.s8 %v450
  %v452 = vlaneseq
  %v453 = vshrl.u32 %v452, 7
  %v454 = vsub.s32 %v451, %v453
  %v455 = vrot.slane %v441, %v454
  %v456 = vcombine.high %v448, %v448
  %v457 = vcombine.high %v455, %v455
  %v459 = vunpack.c.l.s4 1966171168
  %v460 = vunpack.c.0.s8 %v459
  %v461 = vlaneseq
  %v462 = vshrl.u32 %v461, 7
  %v463 = vsub.s32 %v460, %v462
  %v464 = vrot.slane %v448, %v463
  %v466 = vunpack.c.l.s4 1966171168
  %v467 = vunpack.c.0.s8 %v466
  %v468 = vlaneseq
  %v469 = vshrl.u32 %v468, 7
  %v470 = vsub.s32 %v467, %v469
  %v471 = vrot.slane %v455, %v470
  %v473 = vunpack.c.l.s4 1966171168
  %v474 = vunpack.c.0.s8 %v473
  %v475 = vlaneseq
  %v476 = vshrl.u32 %v475, 7
  %v477 = vsub.s32 %v474, %v476
  %v478 = vrot.slane %v456, %v477
  %v480 = vunpack.c.l.s4 1966171168
  %v481 = vunpack.c.0.s8 %v480
  %v482 = vlaneseq
  %v483 = vshrl.u32 %v482, 7
  %v484 = vsub.s32 %v481, %v483
  %v485 = vrot.slane %v457, %v484
  %v486 = vcombine.high %v464, %v464
  %v487 = vcombine.high %v471, %v471
  %v488 = vcombine.high %v478, %v478
  %v489 = vcombine.high %v485, %v485
  %v490 = vcombine.high %v368, %v368
  %v492 = vunpack.c.l.s4 1966171168
  %v493 = vunpack.c.0.s8 %v492
  %v494 = vlaneseq
  %v495 = vshrl.u32 %v494, 7
  %v496 = vsub.s32 %v493, %v495
  %v497 = vrot.slane %v368, %v496
  %v499 = vunpack.c.l.s4 1966171168
  %v500 = vunpack.c.0.s8 %v499
  %v501 = vlaneseq
  %v502 = vshrl.u32 %v501, 7
  %v503 = vsub.s32 %v500, %v502
  %v504 = vrot.slane %v490, %v503
  %v505 = vcombine.high %v497, %v497
  %v506 = vcombine.high %v504, %v504
  %v508 = vunpack.c.l.s4 1966171168
  %v509 = vunpack.c.0.s8 %v508
  %v510 = vlaneseq
  %v511 = vshrl.u32 %v510, 7
  %v512 = vsub.s32 %v509, %v511
  %v513 = vrot.slane %v497, %v512
  %v515 = vunpack.c.l.s4 1966171168
  %v516 = vunpack.c.0.s8 %v515
  %v517 = vlaneseq
  %v518 = vshrl.u32 %v517, 7
  %v519 = vsub.s32 %v516, %v518
  %v520 = vrot.slane %v504, %v519
  %v522 = vunpack.c.l.s4 1966171168
  %v523 = vunpack.c.0.s8 %v522
  %v524 = vlaneseq
  %v525 = vshrl.u32 %v524, 7
  %v526 = vsub.s32 %v523, %v525
  %v527 = vrot.slane %v505, %v526
  %v529 = vunpack.c.l.s4 1966171168
  %v530 = vunpack.c.0.s8 %v529
  %v531 = vlaneseq
  %v532 = vshrl.u32 %v531, 7
  %v533 = vsub.s32 %v530, %v532
  %v534 = vrot.slane %v506, %v533
  %v535 = vcombine.high %v513, %v513
  %v536 = vcombine.high %v520, %v520
  %v537 = vcombine.high %v527, %v527
  %v538 = vcombine.high %v534, %v534
  %v539 = vcombine.high %v369, %v369
  %v541 = vunpack.c.l.s4 1966171168
  %v542 = vunpack.c.0.s8 %v541
  %v543 = vlaneseq
  %v544 = vshrl.u32 %v543, 7
  %v545 = vsub.s32 %v542, %v544
  %v546 = vrot.slane %v369, %v545
  %v548 = vunpack.c.l.s4 1966171168
  %v549 = vunpack.c.0.s8 %v548
  %v550 = vlaneseq
  %v551 = vshrl.u32 %v550, 7
  %v552 = vsub.s32 %v549, %v551
  %v553 = vrot.slane %v539, %v552
  %v554 = vcombine.high %v546, %v546
  %v555 = vcombine.high %v553, %v553
  %v557 = vunpack.c.l.s4 1966171168
  %v558 = vunpack.c.0.s8 %v557
  %v559 = vlaneseq
  %v560 = vshrl.u32 %v559, 7
  %v561 = vsub.s32 %v558, %v560
  %v562 = vrot.slane %v546, %v561
  %v564 = vunpack.c.l.s4 1966171168
  %v565 = vunpack.c.0.s8 %v564
  %v566 = vlaneseq
  %v567 = vshrl.u32 %v566, 7
  %v568 = vsub.s32 %v565, %v567
  %v569 = vrot.slane %v553, %v568
  %v571 = vunpack.c.l.s4 1966171168
  %v572 = vunpack.c.0.s8 %v571
  %v573 = vlaneseq
  %v574 = vshrl.u32 %v573, 7
  %v575 = vsub.s32 %v572, %v574
  %v576 = vrot.slane %v554, %v575
  %v578 = vunpack.c.l.s4 1966171168
  %v579 = vunpack.c.0.s8 %v578
  %v580 = vlaneseq
  %v581 = vshrl.u32 %v580, 7
  %v582 = vsub.s32 %v579, %v581
  %v583 = vrot.slane %v555, %v582
  %v584 = vcombine.high %v562, %v562
  %v585 = vcombine.high %v569, %v569
  %v586 = vcombine.high %v576, %v576
  %v587 = vcombine.high %v583, %v583
  %v588 = vcombine.high %v370, %v370
  %v590 = vunpack.c.l.s4 1966171168
  %v591 = vunpack.c.0.s8 %v590
  %v592 = vlaneseq
  %v593 = vshrl.u32 %v592, 7
  %v594 = vsub.s32 %v591, %v593
  %v595 = vrot.slane %v370, %v594
  %v597 = vunpack.c.l.s4 1966171168
  %v598 = vunpack.c.0.s8 %v597
  %v599 = vlaneseq
  %v600 = vshrl.u32 %v599, 7
  %v601 = vsub.s32 %v598, %v600
  %v602 = vrot.slane %v588, %v601
  %v603 = vcombine.high %v595, %v595
  %v604 = vcombine.high %v602, %v602
  %v606 = vunpack.c.l.s4 1966171168
  %v607 = vunpack.c.0.s8 %v606
  %v608 = vlaneseq
  %v609 = vshrl.u32 %v608, 7
  %v610 = vsub.s32 %v607, %v609
  %v611 = vrot.slane %v595, %v610
  %v613 = vunpack.c.l.s4 1966171168
  %v614 = vunpack.c.0.s8 %v613
  %v615 = vlaneseq
  %v616 = vshrl.u32 %v615, 7
  %v617 = vsub.s32 %v614, %v616
  %v618 = vrot.slane %v602, %v617
  %v620 = vunpack.c.l.s4 1966171168
  %v621 = vunpack.c.0.s8 %v620
  %v622 = vlaneseq
  %v623 = vshrl.u32 %v622, 7
  %v624 = vsub.s32 %v621, %v623
  %v625 = vrot.slane %v603, %v624
  %v627 = vunpack.c.l.s4 1966171168
  %v628 = vunpack.c.0.s8 %v627
  %v629 = vlaneseq
  %v630 = vshrl.u32 %v629, 7
  %v631 = vsub.s32 %v628, %v630
  %v632 = vrot.slane %v604, %v631
  %v633 = vcombine.high %v611, %v611
  %v634 = vcombine.high %v618, %v618
  %v635 = vcombine.high %v625, %v625
  %v636 = vcombine.high %v632, %v632
  %v637 = vcombine.high %v371, %v371
  %v639 = vunpack.c.l.s4 1966171168
  %v640 = vunpack.c.0.s8 %v639
  %v641 = vlaneseq
  %v642 = vshrl.u32 %v641, 7
  %v643 = vsub.s32 %v640, %v642
  %v644 = vrot.slane %v371, %v643
  %v646 = vunpack.c.l.s4 1966171168
  %v647 = vunpack.c.0.s8 %v646
  %v648 = vlaneseq
  %v649 = vshrl.u32 %v648, 7
  %v650 = vsub.s32 %v647, %v649
  %v651 = vrot.slane %v637, %v650
  %v652 = vcombine.high %v644, %v644
  %v653 = vcombine.high %v651, %v651
  %v655 = vunpack.c.l.s4 1966171168
  %v656 = vunpack.c.0.s8 %v655
  %v657 = vlaneseq
  %v658 = vshrl.u32 %v657, 7
  %v659 = vsub.s32 %v656, %v658
  %v660 = vrot.slane %v644, %v659
  %v662 = vunpack.c.l.s4 1966171168
  %v663 = vunpack.c.0.s8 %v662
  %v664 = vlaneseq
  %v665 = vshrl.u32 %v664, 7
  %v666 = vsub.s32 %v663, %v665
  %v667 = vrot.slane %v651, %v666
  %v669 = vunpack.c.l.s4 1966171168
  %v670 = vunpack.c.0.s8 %v669
  %v671 = vlaneseq
  %v672 = vshrl.u32 %v671, 7
  %v673 = vsub.s32 %v670, %v672
  %v674 = vrot.slane %v652, %v673
  %v676 = vunpack.c.l.s4 1966171168
  %v677 = vunpack.c.0.s8 %v676
  %v678 = vlaneseq
  %v679 = vshrl.u32 %v678, 7
  %v680 = vsub.s32 %v677, %v679
  %v681 = vrot.slane %v653, %v680
  %v682 = vcombine.high %v660, %v660
  %v683 = vcombine.high %v667, %v667
  %v684 = vcombine.high %v674, %v674
  %v685 = vcombine.high %v681, %v681
  %v686 = vcombine.high %v372, %v372
  %v688 = vunpack.c.l.s4 1966171168
  %v689 = vunpack.c.0.s8 %v688
  %v690 = vlaneseq
  %v691 = vshrl.u32 %v690, 7
  %v692 = vsub.s32 %v689, %v691
  %v693 = vrot.slane %v372, %v692
  %v695 = vunpack.c.l.s4 1966171168
  %v696 = vunpack.c.0.s8 %v695
  %v697 = vlaneseq
  %v698 = vshrl.u32 %v697, 7
  %v699 = vsub.s32 %v696, %v698
  %v700 = vrot.slane %v686, %v699
  %v701 = vcombine.high %v693, %v693
  %v702 = vcombine.high %v700, %v700
  %v704 = vunpack.c.l.s4 1966171168
  %v705 = vunpack.c.0.s8 %v704
  %v706 = vlaneseq
  %v707 = vshrl.u32 %v706, 7
  %v708 = vsub.s32 %v705, %v707
  %v709 = vrot.slane %v693, %v708
  %v711 = vunpack.c.l.s4 1966171168
  %v712 = vunpack.c.0.s8 %v711
  %v713 = vlaneseq
  %v714 = vshrl.u32 %v713, 7
  %v715 = vsub.s32 %v712, %v714
  %v716 = vrot.slane %v700, %v715
  %v718 = vunpack.c.l.s4 1966171168
  %v719 = vunpack.c.0.s8 %v718
  %v720 = vlaneseq
  %v721 = vshrl.u32 %v720, 7
  %v722 = vsub.s32 %v719, %v721
  %v723 = vrot.slane %v701, %v722
  %v725 = vunpack.c.l.s4 1966171168
  %v726 = vunpack.c.0.s8 %v725
  %v727 = vlaneseq
  %v728 = vshrl.u32 %v727, 7
  %v729 = vsub.s32 %v726, %v728
  %v730 = vrot.slane %v702, %v729
  %v731 = vcombine.high %v709, %v709
  %v732 = vcombine.high %v716, %v716
  %v733 = vcombine.high %v723, %v723
  %v734 = vcombine.high %v730, %v730
  %v735 = vcombine.high %v373, %v373
  %v737 = vunpack.c.l.s4 1966171168
  %v738 = vunpack.c.0.s8 %v737
  %v739 = vlaneseq
  %v740 = vshrl.u32 %v739, 7
  %v741 = vsub.s32 %v738, %v740
  %v742 = vrot.slane %v373, %v741
  %v744 = vunpack.c.l.s4 1966171168
  %v745 = vunpack.c.0.s8 %v744
  %v746 = vlaneseq
  %v747 = vshrl.u32 %v746, 7
  %v748 = vsub.s32 %v745, %v747
  %v749 = vrot.slane %v735, %v748
  %v750 = vcombine.high %v742, %v742
  %v751 = vcombine.high %v749, %v749
  %v753 = vunpack.c.l.s4 1966171168
  %v754 = vunpack.c.0.s8 %v753
  %v755 = vlaneseq
  %v756 = vshrl.u32 %v755, 7
  %v757 = vsub.s32 %v754, %v756
  %v758 = vrot.slane %v742, %v757
  %v760 = vunpack.c.l.s4 1966171168
  %v761 = vunpack.c.0.s8 %v760
  %v762 = vlaneseq
  %v763 = vshrl.u32 %v762, 7
  %v764 = vsub.s32 %v761, %v763
  %v765 = vrot.slane %v749, %v764
  %v767 = vunpack.c.l.s4 1966171168
  %v768 = vunpack.c.0.s8 %v767
  %v769 = vlaneseq
  %v770 = vshrl.u32 %v769, 7
  %v771 = vsub.s32 %v768, %v770
  %v772 = vrot.slane %v750, %v771
  %v774 = vunpack.c.l.s4 1966171168
  %v775 = vunpack.c.0.s8 %v774
  %v776 = vlaneseq
  %v777 = vshrl.u32 %v776, 7
  %v778 = vsub.s32 %v775, %v777
  %v779 = vrot.slane %v751, %v778
  %v780 = vcombine.high %v758, %v758
  %v781 = vcombine.high %v765, %v765
  %v782 = vcombine.high %v772, %v772
  %v783 = vcombine.high %v779, %v779
  %v784 = vcombine.high %v374, %v374
  %v786 = vunpack.c.l.s4 1966171168
  %v787 = vunpack.c.0.s8 %v786
  %v788 = vlaneseq
  %v789 = vshrl.u32 %v788, 7
  %v790 = vsub.s32 %v787, %v789
  %v791 = vrot.slane %v374, %v790
  %v793 = vunpack.c.l.s4 1966171168
  %v794 = vunpack.c.0.s8 %v793
  %v795 = vlaneseq
  %v796 = vshrl.u32 %v795, 7
  %v797 = vsub.s32 %v794, %v796
  %v798 = vrot.slane %v784, %v797
  %v799 = vcombine.high %v791, %v791
  %v800 = vcombine.high %v798, %v798
  %v802 = vunpack.c.l.s4 1966171168
  %v803 = vunpack.c.0.s8 %v802
  %v804 = vlaneseq
  %v805 = vshrl.u32 %v804, 7
  %v806 = vsub.s32 %v803, %v805
  %v807 = vrot.slane %v791, %v806
  %v809 = vunpack.c.l.s4 1966171168
  %v810 = vunpack.c.0.s8 %v809
  %v811 = vlaneseq
  %v812 = vshrl.u32 %v811, 7
  %v813 = vsub.s32 %v810, %v812
  %v814 = vrot.slane %v798, %v813
  %v816 = vunpack.c.l.s4 1966171168
  %v817 = vunpack.c.0.s8 %v816
  %v818 = vlaneseq
  %v819 = vshrl.u32 %v818, 7
  %v820 = vsub.s32 %v817, %v819
  %v821 = vrot.slane %v799, %v820
  %v823 = vunpack.c.l.s4 1966171168
  %v824 = vunpack.c.0.s8 %v823
  %v825 = vlaneseq
  %v826 = vshrl.u32 %v825, 7
  %v827 = vsub.s32 %v824, %v826
  %v828 = vrot.slane %v800, %v827
  %v829 = vcombine.high %v807, %v807
  %v830 = vcombine.high %v814, %v814
  %v831 = vcombine.high %v821, %v821
  %v832 = vcombine.high %v828, %v828
  %v833 = vcombine.high %v375, %v375
  %v835 = vunpack.c.l.s4 1966171168
  %v836 = vunpack.c.0.s8 %v835
  %v837 = vlaneseq
  %v838 = vshrl.u32 %v837, 7
  %v839 = vsub.s32 %v836, %v838
  %v840 = vrot.slane %v375, %v839
  %v842 = vunpack.c.l.s4 1966171168
  %v843 = vunpack.c.0.s8 %v842
  %v844 = vlaneseq
  %v845 = vshrl.u32 %v844, 7
  %v846 = vsub.s32 %v843, %v845
  %v847 = vrot.slane %v833, %v846
  %v848 = vcombine.high %v840, %v840
  %v849 = vcombine.high %v847, %v847
  %v851 = vunpack.c.l.s4 1966171168
  %v852 = vunpack.c.0.s8 %v851
  %v853 = vlaneseq
  %v854 = vshrl.u32 %v853, 7
  %v855 = vsub.s32 %v852, %v854
  %v856 = vrot.slane %v840, %v855
  %v858 = vunpack.c.l.s4 1966171168
  %v859 = vunpack.c.0.s8 %v858
  %v860 = vlaneseq
  %v861 = vshrl.u32 %v860, 7
  %v862 = vsub.s32 %v859, %v861
  %v863 = vrot.slane %v847, %v862
  %v865 = vunpack.c.l.s4 1966171168
  %v866 = vunpack.c.0.s8 %v865
  %v867 = vlaneseq
  %v868 = vshrl.u32 %v867, 7
  %v869 = vsub.s32 %v866, %v868
  %v870 = vrot.slane %v848, %v869
  %v872 = vunpack.c.l.s4 1966171168
  %v873 = vunpack.c.0.s8 %v872
  %v874 = vlaneseq
  %v875 = vshrl.u32 %v874, 7
  %v876 = vsub.s32 %v873, %v875
  %v877 = vrot.slane %v849, %v876
  %v878 = vcombine.high %v856, %v856
  %v879 = vcombine.high %v863, %v863
  %v880 = vcombine.high %v870, %v870
  %v881 = vcombine.high %v877, %v877
  %v882 = vcombine.high %v376, %v376
  %v884 = vunpack.c.l.s4 1966171168
  %v885 = vunpack.c.0.s8 %v884
  %v886 = vlaneseq
  %v887 = vshrl.u32 %v886, 7
  %v888 = vsub.s32 %v885, %v887
  %v889 = vrot.slane %v376, %v888
  %v891 = vunpack.c.l.s4 1966171168
  %v892 = vunpack.c.0.s8 %v891
  %v893 = vlaneseq
  %v894 = vshrl.u32 %v893, 7
  %v895 = vsub.s32 %v892, %v894
  %v896 = vrot.slane %v882, %v895
  %v897 = vcombine.high %v889, %v889
  %v898 = vcombine.high %v896, %v896
  %v900 = vunpack.c.l.s4 1966171168
  %v901 = vunpack.c.0.s8 %v900
  %v902 = vlaneseq
  %v903 = vshrl.u32 %v902, 7
  %v904 = vsub.s32 %v901, %v903
  %v905 = vrot.slane %v889, %v904
  %v907 = vunpack.c.l.s4 1966171168
  %v908 = vunpack.c.0.s8 %v907
  %v909 = vlaneseq
  %v910 = vshrl.u32 %v909, 7
  %v911 = vsub.s32 %v908, %v910
  %v912 = vrot.slane %v896, %v911
  %v914 = vunpack.c.l.s4 1966171168
  %v915 = vunpack.c.0.s8 %v914
  %v916 = vlaneseq
  %v917 = vshrl.u32 %v916, 7
  %v918 = vsub.s32 %v915, %v917
  %v919 = vrot.slane %v897, %v918
  %v921 = vunpack.c.l.s4 1966171168
  %v922 = vunpack.c.0.s8 %v921
  %v923 = vlaneseq
  %v924 = vshrl.u32 %v923, 7
  %v925 = vsub.s32 %v922, %v924
  %v926 = vrot.slane %v898, %v925
  %v927 = vcombine.high %v905, %v905
  %v928 = vcombine.high %v912, %v912
  %v929 = vcombine.high %v919, %v919
  %v930 = vcombine.high %v926, %v926
  %v931 = vcombine.high %v377, %v377
  %v933 = vunpack.c.l.s4 1966171168
  %v934 = vunpack.c.0.s8 %v933
  %v935 = vlaneseq
  %v936 = vshrl.u32 %v935, 7
  %v937 = vsub.s32 %v934, %v936
  %v938 = vrot.slane %v377, %v937
  %v940 = vunpack.c.l.s4 1966171168
  %v941 = vunpack.c.0.s8 %v940
  %v942 = vlaneseq
  %v943 = vshrl.u32 %v942, 7
  %v944 = vsub.s32 %v941, %v943
  %v945 = vrot.slane %v931, %v944
  %v946 = vcombine.high %v938, %v938
  %v947 = vcombine.high %v945, %v945
  %v949 = vunpack.c.l.s4 1966171168
  %v950 = vunpack.c.0.s8 %v949
  %v951 = vlaneseq
  %v952 = vshrl.u32 %v951, 7
  %v953 = vsub.s32 %v950, %v952
  %v954 = vrot.slane %v938, %v953
  %v956 = vunpack.c.l.s4 1966171168
  %v957 = vunpack.c.0.s8 %v956
  %v958 = vlaneseq
  %v959 = vshrl.u32 %v958, 7
  %v960 = vsub.s32 %v957, %v959
  %v961 = vrot.slane %v945, %v960
  %v963 = vunpack.c.l.s4 1966171168
  %v964 = vunpack.c.0.s8 %v963
  %v965 = vlaneseq
  %v966 = vshrl.u32 %v965, 7
  %v967 = vsub.s32 %v964, %v966
  %v968 = vrot.slane %v946, %v967
  %v970 = vunpack.c.l.s4 1966171168
  %v971 = vunpack.c.0.s8 %v970
  %v972 = vlaneseq
  %v973 = vshrl.u32 %v972, 7
  %v974 = vsub.s32 %v971, %v973
  %v975 = vrot.slane %v947, %v974
  %v976 = vcombine.high %v954, %v954
  %v977 = vcombine.high %v961, %v961
  %v978 = vcombine.high %v968, %v968
  %v979 = vcombine.high %v975, %v975
  %v981 = vunpack.c.l.s4 1966171168
  %v982 = vunpack.c.0.s8 %v981
  %v983 = vlaneseq
  %v984 = vshrl.u32 %v983, 7
  %v985 = vsub.s32 %v982, %v984
  %v986 = vrot.slane %v378, %v985
  %v987 = vcombine.high %v986, %v986
  %v989 = vunpack.c.l.s4 1966171168
  %v990 = vunpack.c.0.s8 %v989
  %v991 = vlaneseq
  %v992 = vshrl.u32 %v991, 7
  %v993 = vsub.s32 %v990, %v992
  %v994 = vrot.slane %v986, %v993
  %v996 = vunpack.c.l.s4 1966171168
  %v997 = vunpack.c.0.s8 %v996
  %v998 = vlaneseq
  %v999 = vshrl.u32 %v998, 7
  %v1000 = vsub.s32 %v997, %v999
  %v1001 = vrot.slane %v987, %v1000
  %v1002 = vcombine.high %v994, %v994
  %v1003 = vcombine.high %v1001, %v1001
  %v1004 = vunpack.i.l.s16 %v415
  %v1005 = vunpack.i.h.s16 %v415
  %v1006 = vunpack.i.l.s16 %v429
  %v1007 = vunpack.i.h.s16 %v429
  %v1008 = vunpack.i.l.s16 %v437
  %v1009 = vunpack.i.h.s16 %v437
  %v1010 = vunpack.i.l.s16 %v439
  %v1011 = vunpack.i.h.s16 %v439
  %v1012 = vunpack.i.l.s16 %v422
  %v1013 = vunpack.i.h.s16 %v422
  %v1014 = vunpack.i.l.s16 %v436
  %v1015 = vunpack.i.h.s16 %v436
  %v1016 = vunpack.i.l.s16 %v438
  %v1017 = vunpack.i.h.s16 %v438
  %v1018 = vunpack.i.l.s16 %v440
  %v1019 = vunpack.i.h.s16 %v440
  %v1020 = vunpack.i.l.s16 %v464
  %v1021 = vunpack.i.h.s16 %v464
  %v1022 = vunpack.i.l.s16 %v478
  %v1023 = vunpack.i.h.s16 %v478
  %v1024 = vunpack.i.l.s16 %v486
  %v1025 = vunpack.i.h.s16 %v486
  %v1026 = vunpack.i.l.s16 %v488
  %v1027 = vunpack.i.h.s16 %v488
  %v1028 = vunpack.i.l.s16 %v471
  %v1029 = vunpack.i.h.s16 %v471
  %v1030 = vunpack.i.l.s16 %v485
  %v1031 = vunpack.i.h.s16 %v485
  %v1032 = vunpack.i.l.s16 %v487
  %v1033 = vunpack.i.h.s16 %v487
  %v1034 = vunpack.i.l.s16 %v489
  %v1035 = vunpack.i.h.s16 %v489
  %v1036 = vunpack.i.l.s16 %v513
  %v1037 = vunpack.i.h.s16 %v513
  %v1038 = vunpack.i.l.s16 %v527
  %v1039 = vunpack.i.h.s16 %v527
  %v1040 = vunpack.i.l.s16 %v535
  %v1041 = vunpack.i.h.s16 %v535
  %v1042 = vunpack.i.l.s16 %v537
  %v1043 = vunpack.i.h.s16 %v537
  %v1044 = vunpack.i.l.s16 %v520
  %v1045 = vunpack.i.h.s16 %v520
  %v1046 = vunpack.i.l.s16 %v534
  %v1047 = vunpack.i.h.s16 %v534
  %v1048 = vunpack.i.l.s16 %v536
  %v1049 = vunpack.i.h.s16 %v536
  %v1050 = vunpack.i.l.s16 %v538
  %v1051 = vunpack.i.h.s16 %v538
  %v1052 = vunpack.i.l.s16 %v562
  %v1053 = vunpack.i.h.s16 %v562
  %v1054 = vunpack.i.l.s16 %v576
  %v1055 = vunpack.i.h.s16 %v576
  %v1056 = vunpack.i.l.s16 %v584
  %v1057 = vunpack.i.h.s16 %v584
  %v1058 = vunpack.i.l.s16 %v586
  %v1059 = vunpack.i.h.s16 %v586
  %v1060 = vunpack.i.l.s16 %v569
  %v1061 = vunpack.i.h.s16 %v569
  %v1062 = vunpack.i.l.s16 %v583
  %v1063 = vunpack.i.h.s16 %v583
  %v1064 = vunpack.i.l.s16 %v585
  %v1065 = vunpack.i.h.s16 %v585
  %v1066 = vunpack.i.l.s16 %v587
  %v1067 = vunpack.i.h.s16 %v587
  %v1068 = vunpack.i.l.s16 %v611
  %v1069 = vunpack.i.h.s16 %v611
  %v1070 = vunpack.i.l.s16 %v625
  %v1071 = vunpack.i.h.s16 %v625
  %v1072 = vunpack.i.l.s16 %v633
  %v1073 = vunpack.i.h.s16 %v633
  %v1074 = vunpack.i.l.s16 %v635
  %v1075 = vunpack.i.h.s16 %v635
  %v1076 = vunpack.i.l.s16 %v618
  %v1077 = vunpack.i.h.s16 %v618
  %v1078 = vunpack.i.l.s16 %v632
  %v1079 = vunpack.i.h.s16 %v632
  %v1080 = vunpack.i.l.s16 %v634
  %v1081 = vunpack.i.h.s16 %v634
  %v1082 = vunpack.i.l.s16 %v636
  %v1083 = vunpack.i.h.s16 %v636
  %v1084 = vunpack.i.l.s16 %v660
  %v1085 = vunpack.i.h.s16 %v660
  %v1086 = vunpack.i.l.s16 %v674
  %v1087 = vunpack.i.h.s16 %v674
  %v1088 = vunpack.i.l.s16 %v682
  %v1089 = vunpack.i.h.s16 %v682
  %v1090 = vunpack.i.l.s16 %v684
  %v1091 = vunpack.i.h.s16 %v684
  %v1092 = vunpack.i.l.s16 %v667
  %v1093 = vunpack.i.h.s16 %v667
  %v1094 = vunpack.i.l.s16 %v681
  %v1095 = vunpack.i.h.s16 %v681
  %v1096 = vunpack.i.l.s16 %v683
  %v1097 = vunpack.i.h.s16 %v683
  %v1098 = vunpack.i.l.s16 %v685
  %v1099 = vunpack.i.h.s16 %v685
  %v1100 = vunpack.i.l.s16 %v709
  %v1101 = vunpack.i.h.s16 %v709
  %v1102 = vunpack.i.l.s16 %v723
  %v1103 = vunpack.i.h.s16 %v723
  %v1104 = vunpack.i.l.s16 %v731
  %v1105 = vunpack.i.h.s16 %v731
  %v1106 = vunpack.i.l.s16 %v733
  %v1107 = vunpack.i.h.s16 %v733
  %v1108 = vunpack.i.l.s16 %v716
  %v1109 = vunpack.i.h.s16 %v716
  %v1110 = vunpack.i.l.s16 %v730
  %v1111 = vunpack.i.h.s16 %v730
  %v1112 = vunpack.i.l.s16 %v732
  %v1113 = vunpack.i.h.s16 %v732
  %v1114 = vunpack.i.l.s16 %v734
  %v1115 = vunpack.i.h.s16 %v734
  %v1116 = vunpack.i.l.s16 %v758
  %v1117 = vunpack.i.h.s16 %v758
  %v1118 = vunpack.i.l.s16 %v772
  %v1119 = vunpack.i.h.s16 %v772
  %v1120 = vunpack.i.l.s16 %v780
  %v1121 = vunpack.i.h.s16 %v780
  %v1122 = vunpack.i.l.s16 %v782
  %v1123 = vunpack.i.h.s16 %v782
  %v1124 = vunpack.i.l.s16 %v765
  %v1125 = vunpack.i.h.s16 %v765
  %v1126 = vunpack.i.l.s16 %v779
  %v1127 = vunpack.i.h.s16 %v779
  %v1128 = vunpack.i.l.s16 %v781
  %v1129 = vunpack.i.h.s16 %v781
  %v1130 = vunpack.i.l.s16 %v783
  %v1131 = vunpack.i.h.s16 %v783
  %v1132 = vunpack.i.l.s16 %v807
  %v1133 = vunpack.i.h.s16 %v807
  %v1134 = vunpack.i.l.s16 %v821
  %v1135 = vunpack.i.h.s16 %v821
  %v1136 = vunpack.i.l.s16 %v829
  %v1137 = vunpack.i.h.s16 %v829
  %v1138 = vunpack.i.l.s16 %v831
  %v1139 = vunpack.i.h.s16 %v831
  %v1140 = vunpack.i.l.s16 %v814
  %v1141 = vunpack.i.h.s16 %v814
  %v1142 = vunpack.i.l.s16 %v828
  %v1143 = vunpack.i.h.s16 %v828
  %v1144 = vunpack.i.l.s16 %v830
  %v1145 = vunpack.i.h.s16 %v830
  %v1146 = vunpack.i.l.s16 %v832
  %v1147 = vunpack.i.h.s16 %v832
  %v1148 = vunpack.i.l.s16 %v856
  %v1149 = vunpack.i.h.s16 %v856
  %v1150 = vunpack.i.l.s16 %v870
  %v1151 = vunpack.i.h.s16 %v870
  %v1152 = vunpack.i.l.s16 %v878
  %v1153 = vunpack.i.h.s16 %v878
  %v1154 = vunpack.i.l.s16 %v880
  %v1155 = vunpack.i.h.s16 %v880
  %v1156 = vunpack.i.l.s16 %v863
  %v1157 = vunpack.i.h.s16 %v863
  %v1158 = vunpack.i.l.s16 %v877
  %v1159 = vunpack.i.h.s16 %v877
  %v1160 = vunpack.i.l.s16 %v879
  %v1161 = vunpack.i.h.s16 %v879
  %v1162 = vunpack.i.l.s16 %v881
  %v1163 = vunpack.i.h.s16 %v881
  %v1164 = vunpack.i.l.s16 %v905
  %v1165 = vunpack.i.h.s16 %v905
  %v1166 = vunpack.i.l.s16 %v919
  %v1167 = vunpack.i.h.s16 %v919
  %v1168 = vunpack.i.l.s16 %v927
  %v1169 = vunpack.i.h.s16 %v927
  %v1170 = vunpack.i.l.s16 %v929
  %v1171 = vunpack.i.h.s16 %v929
  %v1172 = vunpack.i.l.s16 %v912
  %v1173 = vunpack.i.h.s16 %v912
  %v1174 = vunpack.i.l.s16 %v926
  %v1175 = vunpack.i.h.s16 %v926
  %v1176 = vunpack.i.l.s16 %v928
  %v1177 = vunpack.i.h.s16 %v928
  %v1178 = vunpack.i.l.s16 %v930
  %v1179 = vunpack.i.h.s16 %v930
  %v1180 = vunpack.i.l.s16 %v954
  %v1181 = vunpack.i.h.s16 %v954
  %v1182 = vunpack.i.l.s16 %v968
  %v1183 = vunpack.i.h.s16 %v968
  %v1184 = vunpack.i.l.s16 %v976
  %v1185 = vunpack.i.h.s16 %v976
  %v1186 = vunpack.i.l.s16 %v978
  %v1187 = vunpack.i.h.s16 %v978
  %v1188 = vunpack.i.l.s16 %v961
  %v1189 = vunpack.i.h.s16 %v961
  %v1190 = vunpack.i.l.s16 %v975
  %v1191 = vunpack.i.h.s16 %v975
  %v1192 = vunpack.i.l.s16 %v977
  %v1193 = vunpack.i.h.s16 %v977
  %v1194 = vunpack.i.l.s16 %v979
  %v1195 = vunpack.i.h.s16 %v979
  %v1196 = vunpack.i.l.s16 %v994
  %v1197 = vunpack.i.h.s16 %v994
  %v1198 = vunpack.i.l.s16 %v1001
  %v1199 = vunpack.i.h.s16 %v1001
  %v1200 = vunpack.i.l.s16 %v1002
  %v1201 = vunpack.i.h.s16 %v1002
  %v1202 = vunpack.i.l.s16 %v1003
  %v1203 = vunpack.i.h.s16 %v1003
  %v1204 = vpack.i.b16 %v1029, %v1004
  %v1205 = vpack.i.b16 %v1079, %v1054
  %v1206 = vpack.i.b16 %v1129, %v1104
  %v1207 = vpack.i.b16 %v1179, %v1154
  %v1208 = vcombine.low %v1204, %v1205
  %v1209 = vcombine.low %v1206, %v1207
  %v1211 = vunpack.c.l.s4 1966171168
  %v1212 = vunpack.c.0.s8 %v1211
  %v1213 = vlaneseq
  %v1214 = vshrl.u32 %v1213, 7
  %v1215 = vsub.s32 %v1212, %v1214
  %v1216 = vrot.slane %v1208, %v1215
  %v1218 = vunpack.c.l.s4 1966171168
  %v1219 = vunpack.c.0.s8 %v1218
  %v1220 = vlaneseq
  %v1221 = vshrl.u32 %v1220, 7
  %v1222 = vsub.s32 %v1219, %v1221
  %v1223 = vrot.slane %v1209, %v1222
  %v1224 = vcombine.low %v1216, %v1223
  %v1226 = vunpack.c.l.s4 1966171168
  %v1227 = vunpack.c.0.s8 %v1226
  %v1228 = vlaneseq
  %v1229 = vshrl.u32 %v1228, 7
  %v1230 = vsub.s32 %v1227, %v1229
  %v1231 = vrot.slane %v1224, %v1230
  %v1233 = vpack.i.b16 %v1030, %v1005
  %v1234 = vpack.i.b16 %v1080, %v1055
  %v1235 = vpack.i.b16 %v1130, %v1105
  %v1236 = vpack.i.b16 %v1180, %v1155
  %v1237 = vcombine.low %v1233, %v1234
  %v1238 = vcombine.low %v1235, %v1236
  %v1240 = vunpack.c.l.s4 1966171168
  %v1241 = vunpack.c.0.s8 %v1240
  %v1242 = vlaneseq
  %v1243 = vshrl.u32 %v1242, 7
  %v1244 = vsub.s32 %v1241, %v1243
  %v1245 = vrot.slane %v1237, %v1244
  %v1247 = vunpack.c.l.s4 1966171168
  %v1248 = vunpack.c.0.s8 %v1247
  %v1249 = vlaneseq
  %v1250 = vshrl.u32 %v1249, 7
  %v1251 = vsub.s32 %v1248, %v1250
  %v1252 = vrot.slane %v1238, %v1251
  %v1253 = vcombine.low %v1245, %v1252
  %v1255 = vunpack.c.l.s4 1966171168
  %v1256 = vunpack.c.0.s8 %v1255
  %v1257 = vlaneseq
  %v1258 = vshrl.u32 %v1257, 7
  %v1259 = vsub.s32 %v1256, %v1258
  %v1260 = vrot.slane %v1253, %v1259
  %v1262 = vpack.i.b16 %v1031, %v1006
  %v1263 = vpack.i.b16 %v1081, %v1056
  %v1264 = vpack.i.b16 %v1131, %v1106
  %v1265 = vpack.i.b16 %v1181, %v1156
  %v1266 = vcombine.low %v1262, %v1263
  %v1267 = vcombine.low %v1264, %v1265
  %v1269 = vunpack.c.l.s4 1966171168
  %v1270 = vunpack.c.0.s8 %v1269
  %v1271 = vlaneseq
  %v1272 = vshrl.u32 %v1271, 7
  %v1273 = vsub.s32 %v1270, %v1272
  %v1274 = vrot.slane %v1266, %v1273
  %v1276 = vunpack.c.l.s4 1966171168
  %v1277 = vunpack.c.0.s8 %v1276
  %v1278 = vlaneseq
  %v1279 = vshrl.u32 %v1278, 7
  %v1280 = vsub.s32 %v1277, %v1279
  %v1281 = vrot.slane %v1267, %v1280
  %v1282 = vcombine.low %v1274, %v1281
  %v1284 = vunpack.c.l.s4 1966171168
  %v1285 = vunpack.c.0.s8 %v1284
  %v1286 = vlaneseq
  %v1287 = vshrl.u32 %v1286, 7
  %v1288 = vsub.s32 %v1285, %v1287
  %v1289 = vrot.slane %v1282, %v1288
  %v1291 = vpack.i.b16 %v1034, %v1009
  %v1292 = vpack.i.b16 %v1084, %v1059
  %v1293 = vpack.i.b16 %v1134, %v1109
  %v1294 = vpack.i.b16 %v1184, %v1159
  %v1295 = vcombine.low %v1291, %v1292
  %v1296 = vcombine.low %v1293, %v1294
  %v1298 = vunpack.c.l.s4 1966171168
  %v1299 = vunpack.c.0.s8 %v1298
  %v1300 = vlaneseq
  %v1301 = vshrl.u32 %v1300, 7
  %v1302 = vsub.s32 %v1299, %v1301
  %v1303 = vrot.slane %v1295, %v1302
  %v1305 = vunpack.c.l.s4 1966171168
  %v1306 = vunpack.c.0.s8 %v1305
  %v1307 = vlaneseq
  %v1308 = vshrl.u32 %v1307, 7
  %v1309 = vsub.s32 %v1306, %v1308
  %v1310 = vrot.slane %v1296, %v1309
  %v1311 = vcombine.low %v1303, %v1310
  %v1313 = vunpack.c.l.s4 1966171168
  %v1314 = vunpack.c.0.s8 %v1313
  %v1315 = vlaneseq
  %v1316 = vshrl.u32 %v1315, 7
  %v1317 = vsub.s32 %v1314, %v1316
  %v1318 = vrot.slane %v1311, %v1317
  %v1320 = vpack.i.b16 %v1035, %v1010
  %v1321 = vpack.i.b16 %v1085, %v1060
  %v1322 = vpack.i.b16 %v1135, %v1110
  %v1323 = vpack.i.b16 %v1185, %v1160
  %v1324 = vcombine.low %v1320, %v1321
  %v1325 = vcombine.low %v1322, %v1323
  %v1327 = vunpack.c.l.s4 1966171168
  %v1328 = vunpack.c.0.s8 %v1327
  %v1329 = vlaneseq
  %v1330 = vshrl.u32 %v1329, 7
  %v1331 = vsub.s32 %v1328, %v1330
  %v1332 = vrot.slane %v1324, %v1331
  %v1334 = vunpack.c.l.s4 1966171168
  %v1335 = vunpack.c.0.s8 %v1334
  %v1336 = vlaneseq
  %v1337 = vshrl.u32 %v1336, 7
  %v1338 = vsub.s32 %v1335, %v1337
  %v1339 = vrot.slane %v1325, %v1338
  %v1340 = vcombine.low %v1332, %v1339
  %v1342 = vunpack.c.l.s4 1966171168
  %v1343 = vunpack.c.0.s8 %v1342
  %v1344 = vlaneseq
  %v1345 = vshrl.u32 %v1344, 7
  %v1346 = vsub.s32 %v1343, %v1345
  %v1347 = vrot.slane %v1340, %v1346
  %v1349 = vpack.i.b16 %v1036, %v1011
  %v1350 = vpack.i.b16 %v1086, %v1061
  %v1351 = vpack.i.b16 %v1136, %v1111
  %v1352 = vpack.i.b16 %v1186, %v1161
  %v1353 = vcombine.low %v1349, %v1350
  %v1354 = vcombine.low %v1351, %v1352
  %v1356 = vunpack.c.l.s4 1966171168
  %v1357 = vunpack.c.0.s8 %v1356
  %v1358 = vlaneseq
  %v1359 = vshrl.u32 %v1358, 7
  %v1360 = vsub.s32 %v1357, %v1359
  %v1361 = vrot.slane %v1353, %v1360
  %v1363 = vunpack.c.l.s4 1966171168
  %v1364 = vunpack.c.0.s8 %v1363
  %v1365 = vlaneseq
  %v1366 = vshrl.u32 %v1365, 7
  %v1367 = vsub.s32 %v1364, %v1366
  %v1368 = vrot.slane %v1354, %v1367
  %v1369 = vcombine.low %v1361, %v1368
  %v1371 = vunpack.c.l.s4 1966171168
  %v1372 = vunpack.c.0.s8 %v1371
  %v1373 = vlaneseq
  %v1374 = vshrl.u32 %v1373, 7
  %v1375 = vsub.s32 %v1372, %v1374
  %v1376 = vrot.slane %v1369, %v1375
  %v1378 = vpack.i.b16 %v1039, %v1014
  %v1379 = vpack.i.b16 %v1089, %v1064
  %v1380 = vpack.i.b16 %v1139, %v1114
  %v1381 = vpack.i.b16 %v1189, %v1164
  %v1382 = vcombine.low %v1378, %v1379
  %v1383 = vcombine.low %v1380, %v1381
  %v1385 = vunpack.c.l.s4 1966171168
  %v1386 = vunpack.c.0.s8 %v1385
  %v1387 = vlaneseq
  %v1388 = vshrl.u32 %v1387, 7
  %v1389 = vsub.s32 %v1386, %v1388
  %v1390 = vrot.slane %v1382, %v1389
  %v1392 = vunpack.c.l.s4 1966171168
  %v1393 = vunpack.c.0.s8 %v1392
  %v1394 = vlaneseq
  %v1395 = vshrl.u32 %v1394, 7
  %v1396 = vsub.s32 %v1393, %v1395
  %v1397 = vrot.slane %v1383, %v1396
  %v1398 = vcombine.low %v1390, %v1397
  %v1400 = vunpack.c.l.s4 1966171168
  %v1401 = vunpack.c.0.s8 %v1400
  %v1402 = vlaneseq
  %v1403 = vshrl.u32 %v1402, 7
  %v1404 = vsub.s32 %v1401, %v1403
  %v1405 = vrot.slane %v1398, %v1404
  %v1407 = vpack.i.b16 %v1040, %v1015
  %v1408 = vpack.i.b16 %v1090, %v1065
  %v1409 = vpack.i.b16 %v1140, %v1115
  %v1410 = vpack.i.b16 %v1190, %v1165
  %v1411 = vcombine.low %v1407, %v1408
  %v1412 = vcombine.low %v1409, %v1410
  %v1414 = vunpack.c.l.s4 1966171168
  %v1415 = vunpack.c.0.s8 %v1414
  %v1416 = vlaneseq
  %v1417 = vshrl.u32 %v1416, 7
  %v1418 = vsub.s32 %v1415, %v1417
  %v1419 = vrot.slane %v1411, %v1418
  %v1421 = vunpack.c.l.s4 1966171168
  %v1422 = vunpack.c.0.s8 %v1421
  %v1423 = vlaneseq
  %v1424 = vshrl.u32 %v1423, 7
  %v1425 = vsub.s32 %v1422, %v1424
  %v1426 = vrot.slane %v1412, %v1425
  %v1427 = vcombine.low %v1419, %v1426
  %v1429 = vunpack.c.l.s4 1966171168
  %v1430 = vunpack.c.0.s8 %v1429
  %v1431 = vlaneseq
  %v1432 = vshrl.u32 %v1431, 7
  %v1433 = vsub.s32 %v1430, %v1432
  %v1434 = vrot.slane %v1427, %v1433
  %v1436 = vpack.i.b16 %v1041, %v1016
  %v1437 = vpack.i.b16 %v1091, %v1066
  %v1438 = vpack.i.b16 %v1141, %v1116
  %v1439 = vpack.i.b16 %v1191, %v1166
  %v1440 = vcombine.low %v1436, %v1437
  %v1441 = vcombine.low %v1438, %v1439
  %v1443 = vunpack.c.l.s4 1966171168
  %v1444 = vunpack.c.0.s8 %v1443
  %v1445 = vlaneseq
  %v1446 = vshrl.u32 %v1445, 7
  %v1447 = vsub.s32 %v1444, %v1446
  %v1448 = vrot.slane %v1440, %v1447
  %v1450 = vunpack.c.l.s4 1966171168
  %v1451 = vunpack.c.0.s8 %v1450
  %v1452 = vlaneseq
  %v1453 = vshrl.u32 %v1452, 7
  %v1454 = vsub.s32 %v1451, %v1453
  %v1455 = vrot.slane %v1441, %v1454
  %v1456 = vcombine.low %v1448, %v1455
  %v1458 = vunpack.c.l.s4 1966171168
  %v1459 = vunpack.c.0.s8 %v1458
  %v1460 = vlaneseq
  %v1461 = vshrl.u32 %v1460, 7
  %v1462 = vsub.s32 %v1459, %v1461
  %v1463 = vrot.slane %v1456, %v1462
  %v1465 = vld [vmem:[%s3] sm:$0xff]
  %v1466 = vld [vmem:[%s3 + $0x8] sm:$0xff]
  %v1467 = vld [vmem:[%s3 + $0x10] sm:$0xff]
  %v1468 = vld [vmem:[%s3 + $0x18] sm:$0xff]
  %v1469 = vld [vmem:[%s3 + $0x20] sm:$0xff]
  %v1470 = vld [vmem:[%s3 + $0x28] sm:$0xff]
  %v1471 = vld [vmem:[%s3 + $0x30] sm:$0xff]
  %v1472 = vld [vmem:[%s3 + $0x38] sm:$0xff]
  %v1473 = vld [vmem:[%s3 + $0x40] sm:$0xff]
  %v1474 = vld [vmem:[%s3 + $0x48] sm:$0xff]
  %v1475 = vld [vmem:[%s3 + $0x50] sm:$0xff]
  %v1476 = vld [vmem:[%s3 + $0x58] sm:$0xff]
  %v1477 = vld [vmem:[%s3 + $0x60] sm:$0xff]
  %v1478 = vld [vmem:[%s3 + $0x68] sm:$0xff]
  %v1479 = vld [vmem:[%s3 + $0x70] sm:$0xff]
  %v1480 = vld [vmem:[%s3 + $0x78] sm:$0xff]
  %v1481 = vld [vmem:[%s3 + $0x80] sm:$0xff]
  %v1482 = vld [vmem:[%s3 + $0x88] sm:$0xff]
  %v1483 = vld [vmem:[%s3 + $0x90] sm:$0xff]
  %v1484 = vld [vmem:[%s3 + $0x98] sm:$0xff]
  %v1485 = vld [vmem:[%s3 + $0xa0] sm:$0xff]
  %v1486 = vld [vmem:[%s3 + $0xa8] sm:$0xff]
  %v1487 = vld [vmem:[%s3 + $0xb0] sm:$0xff]
  %v1488 = vld [vmem:[%s3 + $0xb8] sm:$0xff]
  %v1489 = vld [vmem:[%s3 + $0xc0] sm:$0xff]
  %v1490 = vld [vmem:[%s3 + $0xc8] sm:$0xff]
  %v1491 = vld [vmem:[%s3 + $0xd0] sm:$0xff]
  %v1492 = vld [vmem:[%s3 + $0xd8] sm:$0xff]
  %v1493 = vld [vmem:[%s3 + $0xe0] sm:$0xff]
  %v1494 = vld [vmem:[%s3 + $0xe8] sm:$0xff]
  %v1495 = vld [vmem:[%s3 + $0xf0] sm:$0xff]
  %v1496 = vld [vmem:[%s3 + $0xf8] sm:$0xff]
  %v1497 = vld [vmem:[%s3 + $0x100] sm:$0xff]
  %v1498 = vld [vmem:[%s3 + $0x108] sm:$0xff]
  %v1499 = vld [vmem:[%s3 + $0x110] sm:$0xff]
  %v1500 = vld [vmem:[%s3 + $0x118] sm:$0xff]
  %v1501 = vld [vmem:[%s3 + $0x120] sm:$0xff]
  %v1502 = vld [vmem:[%s3 + $0x128] sm:$0xff]
  %v1503 = vld [vmem:[%s3 + $0x130] sm:$0xff]
  %v1504 = vld [vmem:[%s3 + $0x138] sm:$0xff]
  %v1505 = vld [vmem:[%s3 + $0x140] sm:$0xff]
  %v1506 = vld [vmem:[%s3 + $0x148] sm:$0xff]
  %v1507 = vld [vmem:[%s3 + $0x150] sm:$0xff]
  %v1508 = vld [vmem:[%s3 + $0x158] sm:$0xff]
  %v1509 = vld [vmem:[%s3 + $0x160] sm:$0xff]
  %v1510 = vld [vmem:[%s3 + $0x168] sm:$0xff]
  %v1511 = vld [vmem:[%s3 + $0x170] sm:$0xff]
  %v1512 = vld [vmem:[%s3 + $0x178] sm:$0xff]
  %v1513 = vld [vmem:[%s3 + $0x180] sm:$0xff]
  %v1514 = vld [vmem:[%s3 + $0x188] sm:$0xff]
  %v1515 = vld [vmem:[%s3 + $0x190] sm:$0xff]
  %v1516 = vld [vmem:[%s3 + $0x198] sm:$0xff]
  %v1517 = vld [vmem:[%s3 + $0x1a0] sm:$0xff]
  %v1518 = vld [vmem:[%s3 + $0x1a8] sm:$0xff]
  %v1519 = vld [vmem:[%s3 + $0x1b0] sm:$0xff]
  %v1520 = vld [vmem:[%s3 + $0x1b8] sm:$0xff]
  %v1521 = vld [vmem:[%s3 + $0x1c0] sm:$0xff]
  %v1522 = vld [vmem:[%s3 + $0x1c8] sm:$0xff]
  %v1523 = vld [vmem:[%s3 + $0x1d0] sm:$0xff]
  %v1524 = vld [vmem:[%s3 + $0x1d8] sm:$0xff]
  %v1525 = vld [vmem:[%s3 + $0x1e0] sm:$0xff]
  %v1526 = vld [vmem:[%s3 + $0x1e8] sm:$0xff]
  %v1527 = vld [vmem:[%s3 + $0x1f0] sm:$0xff]
  %v1528 = vld [vmem:[%s3 + $0x1f8] sm:$0xff]
  %v1529 = vld [vmem:[%s3 + $0x200] sm:$0xff]
  %v1530 = vld [vmem:[%s3 + $0x208] sm:$0xff]
  %v1531 = vld [vmem:[%s3 + $0x210] sm:$0xff]
  %v1532 = vld [vmem:[%s3 + $0x218] sm:$0xff]
  %v1533 = vld [vmem:[%s3 + $0x220] sm:$0xff]
  %v1534 = vld [vmem:[%s3 + $0x228] sm:$0xff]
  %v1535 = vld [vmem:[%s3 + $0x230] sm:$0xff]
  %v1536 = vld [vmem:[%s3 + $0x238] sm:$0xff]
  %v1537 = vld [vmem:[%s3 + $0x240] sm:$0xff]
  %v1538 = vld [vmem:[%s3 + $0x248] sm:$0xff]
  %v1539 = vld [vmem:[%s3 + $0x250] sm:$0xff]
  %v1540 = vld [vmem:[%s3 + $0x258] sm:$0xff]
  %v1541 = vld [vmem:[%s3 + $0x260] sm:$0xff]
  %v1542 = vld [vmem:[%s3 + $0x268] sm:$0xff]
  %v1543 = vld [vmem:[%s3 + $0x270] sm:$0xff]
  %v1544 = vld [vmem:[%s3 + $0x278] sm:$0xff]
  %v1545 = vld [vmem:[%s3 + $0x280] sm:$0xff]
  %v1546 = vld [vmem:[%s3 + $0x288] sm:$0xff]
  %v1547 = vld [vmem:[%s3 + $0x290] sm:$0xff]
  %v1548 = vld [vmem:[%s3 + $0x298] sm:$0xff]
  %v1549 = vld [vmem:[%s3 + $0x2a0] sm:$0xff]
  %v1550 = vld [vmem:[%s3 + $0x2a8] sm:$0xff]
  %v1551 = vld [vmem:[%s3 + $0x2b0] sm:$0xff]
  %v1552 = vld [vmem:[%s3 + $0x2b8] sm:$0xff]
  %v1553 = vld [vmem:[%s3 + $0x2c0] sm:$0xff]
  %v1554 = vld [vmem:[%s3 + $0x2c8] sm:$0xff]
  %v1555 = vld [vmem:[%s3 + $0x2d0] sm:$0xff]
  %v1556 = vld [vmem:[%s3 + $0x2d8] sm:$0xff]
  %v1557 = vld [vmem:[%s3 + $0x2e0] sm:$0xff]
  %v1558 = vld [vmem:[%s3 + $0x2e8] sm:$0xff]
  %v1559 = vld [vmem:[%s3 + $0x2f0] sm:$0xff]
  %v1560 = vld [vmem:[%s3 + $0x2f8] sm:$0xff]
  %v1561 = vld [vmem:[%s3 + $0x300] sm:$0xff]
  %v1562 = vld [vmem:[%s3 + $0x308] sm:$0xff]
  %v1563 = vld [vmem:[%s3 + $0x310] sm:$0xff]
  %v1564 = vld [vmem:[%s3 + $0x318] sm:$0xff]
  %v1565 = vld [vmem:[%s3 + $0x320] sm:$0xff]
  %v1566 = vld [vmem:[%s3 + $0x328] sm:$0xff]
  %v1567 = vld [vmem:[%s3 + $0x330] sm:$0xff]
  %v1568 = vld [vmem:[%s3 + $0x338] sm:$0xff]
  %v1569 = vld [vmem:[%s3 + $0x340] sm:$0xff]
  %v1570 = vld [vmem:[%s3 + $0x348] sm:$0xff]
  %v1571 = vld [vmem:[%s3 + $0x350] sm:$0xff]
  %v1572 = vld [vmem:[%s3 + $0x358] sm:$0xff]
  %v1573 = vld [vmem:[%s3 + $0x360] sm:$0xff]
  %v1574 = vld [vmem:[%s3 + $0x368] sm:$0xff]
  %v1575 = vld [vmem:[%s3 + $0x370] sm:$0xff]
  %v1576 = vld [vmem:[%s3 + $0x378] sm:$0xff]
  %v1577 = vld [vmem:[%s3 + $0x380] sm:$0xff]
  %v1578 = vld [vmem:[%s3 + $0x388] sm:$0xff]
  %v1579 = vld [vmem:[%s3 + $0x390] sm:$0xff]
  %v1580 = vld [vmem:[%s3 + $0x398] sm:$0xff]
  %v1581 = vld [vmem:[%s3 + $0x3a0] sm:$0xff]
  %v1582 = vld [vmem:[%s3 + $0x3a8] sm:$0xff]
  %v1583 = vld [vmem:[%s3 + $0x3b0] sm:$0xff]
  %v1584 = vld [vmem:[%s3 + $0x3b8] sm:$0xff]
  %v1585 = vld [vmem:[%s3 + $0x3c0] sm:$0xff]
  %v1586 = vld [vmem:[%s3 + $0x3c8] sm:$0xff]
  %v1587 = vld [vmem:[%s3 + $0x3d0] sm:$0xff]
  %v1588 = vld [vmem:[%s3 + $0x3d8] sm:$0xff]
  %v1589 = vld [vmem:[%s3 + $0x3e0] sm:$0xff]
  %v1590 = vld [vmem:[%s3 + $0x3e8] sm:$0xff]
  %v1591 = vld [vmem:[%s3 + $0x3f0] sm:$0xff]
  %v1592 = vld [vmem:[%s3 + $0x3f8] sm:$0xff]
  %v1593 = vld [vmem:[%s3 + $0x400] sm:$0xff]
  %v1594 = vld [vmem:[%s3 + $0x408] sm:$0xff]
  %v1595 = vld [vmem:[%s3 + $0x410] sm:$0xff]
  %v1596 = vld [vmem:[%s3 + $0x418] sm:$0xff]
  %v1597 = vld [vmem:[%s3 + $0x420] sm:$0xff]
  %v1598 = vld [vmem:[%s3 + $0x428] sm:$0xff]
  %v1599 = vld [vmem:[%s3 + $0x430] sm:$0xff]
  %v1600 = vld [vmem:[%s3 + $0x438] sm:$0xff]
  %v1601 = vld [vmem:[%s3 + $0x440] sm:$0xff]
  %v1602 = vld [vmem:[%s3 + $0x448] sm:$0xff]
  %v1603 = vld [vmem:[%s3 + $0x450] sm:$0xff]
  %v1604 = vld [vmem:[%s3 + $0x458] sm:$0xff]
  %v1605 = vld [vmem:[%s3 + $0x460] sm:$0xff]
  %v1606 = vld [vmem:[%s3 + $0x468] sm:$0xff]
  %v1607 = vld [vmem:[%s3 + $0x470] sm:$0xff]
  %v1608 = vld [vmem:[%s3 + $0x478] sm:$0xff]
  %v1609 = vld [vmem:[%s4] sm:$0x3]
  %v1611 = vlaneseq
  %v1612 = vshrl.u32 %v1611, 7
  %v1613 = vsub.s32 0, %v1612
  %v1614 = vrot.slane %v1609, %v1613
  %v1615 = vlaneseq
  %v1616 = vshrl.u32 %v1615, 7
  %v1617 = vsub.s32 1, %v1616
  %v1618 = vrot.slane %v1609, %v1617
  %v1765 = vunpack.c.l.b16 %v1465
  %v1766 = vunpack.c.h.b16 %v1465
  %v1767 = vunpack.c.l.b16 %v1466
  %v1768 = vunpack.c.h.b16 %v1466
  %v1769 = vunpack.c.l.b16 %v1467
  %v1770 = vunpack.c.h.b16 %v1467
  %v1771 = vunpack.c.l.b16 %v1468
  %v1772 = vunpack.c.h.b16 %v1468
  %v1773 = vunpack.c.l.b16 %v1469
  %v1774 = vunpack.c.h.b16 %v1469
  %v1775 = vunpack.c.l.b16 %v1470
  %v1776 = vunpack.c.h.b16 %v1470
  %v1777 = vunpack.c.l.b16 %v1471
  %v1778 = vunpack.c.h.b16 %v1471
  %v1779 = vunpack.c.l.b16 %v1472
  %v1780 = vunpack.c.h.b16 %v1472
  %v1781 = vunpack.c.l.b16 %v1473
  %v1782 = vunpack.c.h.b16 %v1473
  %v1783 = vunpack.c.l.b16 %v1474
  %v1784 = vunpack.c.h.b16 %v1474
  %v1785 = vunpack.c.l.b16 %v1475
  %v1786 = vunpack.c.h.b16 %v1475
  %v1787 = vunpack.c.l.b16 %v1476
  %v1788 = vunpack.c.h.b16 %v1476
  %v1789 = vunpack.c.l.b16 %v1477
  %v1790 = vunpack.c.h.b16 %v1477
  %v1791 = vunpack.c.l.b16 %v1478
  %v1792 = vunpack.c.h.b16 %v1478
  %v1793 = vunpack.c.l.b16 %v1479
  %v1794 = vunpack.c.h.b16 %v1479
  %v1795 = vunpack.c.l.b16 %v1480
  %v1796 = vunpack.c.h.b16 %v1480
  %v1797 = vunpack.c.l.b16 %v1481
  %v1798 = vunpack.c.h.b16 %v1481
  %v1799 = vunpack.c.l.b16 %v1482
  %v1800 = vunpack.c.h.b16 %v1482
  %v1801 = vunpack.c.l.b16 %v1483
  %v1802 = vunpack.c.h.b16 %v1483
  %v1803 = vunpack.c.l.b16 %v1484
  %v1804 = vunpack.c.h.b16 %v1484
  %v1805 = vunpack.c.l.b16 %v1485
  %v1806 = vunpack.c.h.b16 %v1485
  %v1807 = vunpack.c.l.b16 %v1486
  %v1808 = vunpack.c.h.b16 %v1486
  %v1809 = vunpack.c.l.b16 %v1487
  %v1810 = vunpack.c.h.b16 %v1487
  %v1811 = vunpack.c.l.b16 %v1488
  %v1812 = vunpack.c.h.b16 %v1488
  %v1813 = vunpack.c.l.b16 %v1489
  %v1814 = vunpack.c.h.b16 %v1489
  %v1815 = vunpack.c.l.b16 %v1490
  %v1816 = vunpack.c.h.b16 %v1490
  %v1817 = vunpack.c.l.b16 %v1491
  %v1818 = vunpack.c.h.b16 %v1491
  %v1819 = vunpack.c.l.b16 %v1492
  %v1820 = vunpack.c.h.b16 %v1492
  %v1821 = vunpack.c.l.b16 %v1493
  %v1822 = vunpack.c.h.b16 %v1493
  %v1823 = vunpack.c.l.b16 %v1494
  %v1824 = vunpack.c.h.b16 %v1494
  %v1825 = vunpack.c.l.b16 %v1495
  %v1826 = vunpack.c.h.b16 %v1495
  %v1827 = vunpack.c.l.b16 %v1496
  %v1828 = vunpack.c.h.b16 %v1496
  %v1829 = vunpack.c.l.b16 %v1497
  %v1830 = vunpack.c.h.b16 %v1497
  %v1831 = vunpack.c.l.b16 %v1498
  %v1832 = vunpack.c.h.b16 %v1498
  %v1833 = vunpack.c.l.b16 %v1499
  %v1834 = vunpack.c.h.b16 %v1499
  %v1835 = vunpack.c.l.b16 %v1500
  %v1836 = vunpack.c.h.b16 %v1500
  %v1837 = vunpack.c.l.b16 %v1501
  %v1838 = vunpack.c.h.b16 %v1501
  %v1839 = vunpack.c.l.b16 %v1502
  %v1840 = vunpack.c.h.b16 %v1502
  %v1841 = vunpack.c.l.b16 %v1503
  %v1842 = vunpack.c.h.b16 %v1503
  %v1843 = vunpack.c.l.b16 %v1504
  %v1844 = vunpack.c.h.b16 %v1504
  %v1845 = vunpack.c.l.b16 %v1505
  %v1846 = vunpack.c.h.b16 %v1505
  %v1847 = vunpack.c.l.b16 %v1506
  %v1848 = vunpack.c.h.b16 %v1506
  %v1849 = vunpack.c.l.b16 %v1507
  %v1850 = vunpack.c.h.b16 %v1507
  %v1851 = vunpack.c.l.b16 %v1508
  %v1852 = vunpack.c.h.b16 %v1508
  %v1853 = vunpack.c.l.b16 %v1509
  %v1854 = vunpack.c.h.b16 %v1509
  %v1855 = vunpack.c.l.b16 %v1510
  %v1856 = vunpack.c.h.b16 %v1510
  %v1857 = vunpack.c.l.b16 %v1511
  %v1858 = vunpack.c.h.b16 %v1511
  %v1859 = vunpack.c.l.b16 %v1512
  %v1860 = vunpack.c.h.b16 %v1512
  %v1861 = vunpack.c.l.b16 %v1513
  %v1862 = vunpack.c.h.b16 %v1513
  %v1863 = vunpack.c.l.b16 %v1514
  %v1864 = vunpack.c.h.b16 %v1514
  %v1865 = vunpack.c.l.b16 %v1515
  %v1866 = vunpack.c.h.b16 %v1515
  %v1867 = vunpack.c.l.b16 %v1516
  %v1868 = vunpack.c.h.b16 %v1516
  %v1869 = vunpack.c.l.b16 %v1517
  %v1870 = vunpack.c.h.b16 %v1517
  %v1871 = vunpack.c.l.b16 %v1518
  %v1872 = vunpack.c.h.b16 %v1518
  %v1873 = vunpack.c.l.b16 %v1519
  %v1874 = vunpack.c.h.b16 %v1519
  %v1875 = vunpack.c.l.b16 %v1520
  %v1876 = vunpack.c.h.b16 %v1520
  %v1877 = vunpack.c.l.b16 %v1521
  %v1878 = vunpack.c.h.b16 %v1521
  %v1879 = vunpack.c.l.b16 %v1522
  %v1880 = vunpack.c.h.b16 %v1522
  %v1881 = vunpack.c.l.b16 %v1523
  %v1882 = vunpack.c.h.b16 %v1523
  %v1883 = vunpack.c.l.b16 %v1524
  %v1884 = vunpack.c.h.b16 %v1524
  %v1885 = vunpack.c.l.b16 %v1525
  %v1886 = vunpack.c.h.b16 %v1525
  %v1887 = vunpack.c.l.b16 %v1526
  %v1888 = vunpack.c.h.b16 %v1526
  %v1889 = vunpack.c.l.b16 %v1527
  %v1890 = vunpack.c.h.b16 %v1527
  %v1891 = vunpack.c.l.b16 %v1528
  %v1892 = vunpack.c.h.b16 %v1528
  %v1893 = vunpack.c.l.b16 %v1529
  %v1894 = vunpack.c.h.b16 %v1529
  %v1895 = vunpack.c.l.b16 %v1530
  %v1896 = vunpack.c.h.b16 %v1530
  %v1897 = vunpack.c.l.b16 %v1531
  %v1898 = vunpack.c.h.b16 %v1531
  %v1899 = vunpack.c.l.b16 %v1532
  %v1900 = vunpack.c.h.b16 %v1532
  %v1901 = vunpack.c.l.b16 %v1533
  %v1902 = vunpack.c.h.b16 %v1533
  %v1903 = vunpack.c.l.b16 %v1534
  %v1904 = vunpack.c.h.b16 %v1534
  %v1905 = vunpack.c.l.b16 %v1535
  %v1906 = vunpack.c.h.b16 %v1535
  %v1907 = vunpack.c.l.b16 %v1536
  %v1908 = vunpack.c.h.b16 %v1536
  %v1909 = vunpack.c.l.b16 %v1537
  %v1910 = vunpack.c.h.b16 %v1537
  %v1911 = vunpack.c.l.b16 %v1538
  %v1912 = vunpack.c.h.b16 %v1538
  %v1913 = vunpack.c.l.b16 %v1539
  %v1914 = vunpack.c.h.b16 %v1539
  %v1915 = vunpack.c.l.b16 %v1540
  %v1916 = vunpack.c.h.b16 %v1540
  %v1917 = vunpack.c.l.b16 %v1541
  %v1918 = vunpack.c.h.b16 %v1541
  %v1919 = vunpack.c.l.b16 %v1542
  %v1920 = vunpack.c.h.b16 %v1542
  %v1921 = vunpack.c.l.b16 %v1543
  %v1922 = vunpack.c.h.b16 %v1543
  %v1923 = vunpack.c.l.b16 %v1544
  %v1924 = vunpack.c.h.b16 %v1544
  %v1925 = vunpack.c.l.b16 %v1545
  %v1926 = vunpack.c.h.b16 %v1545
  %v1927 = vunpack.c.l.b16 %v1546
  %v1928 = vunpack.c.h.b16 %v1546
  %v1929 = vunpack.c.l.b16 %v1547
  %v1930 = vunpack.c.h.b16 %v1547
  %v1931 = vunpack.c.l.b16 %v1548
  %v1932 = vunpack.c.h.b16 %v1548
  %v1933 = vunpack.c.l.b16 %v1549
  %v1934 = vunpack.c.h.b16 %v1549
  %v1935 = vunpack.c.l.b16 %v1550
  %v1936 = vunpack.c.h.b16 %v1550
  %v1937 = vunpack.c.l.b16 %v1551
  %v1938 = vunpack.c.h.b16 %v1551
  %v1939 = vunpack.c.l.b16 %v1552
  %v1940 = vunpack.c.h.b16 %v1552
  %v1941 = vunpack.c.l.b16 %v1553
  %v1942 = vunpack.c.h.b16 %v1553
  %v1943 = vunpack.c.l.b16 %v1554
  %v1944 = vunpack.c.h.b16 %v1554
  %v1945 = vunpack.c.l.b16 %v1555
  %v1946 = vunpack.c.h.b16 %v1555
  %v1947 = vunpack.c.l.b16 %v1556
  %v1948 = vunpack.c.h.b16 %v1556
  %v1949 = vunpack.c.l.b16 %v1557
  %v1950 = vunpack.c.h.b16 %v1557
  %v1951 = vunpack.c.l.b16 %v1558
  %v1952 = vunpack.c.h.b16 %v1558
  %v1953 = vunpack.c.l.b16 %v1559
  %v1954 = vunpack.c.h.b16 %v1559
  %v1955 = vunpack.c.l.b16 %v1560
  %v1956 = vunpack.c.h.b16 %v1560
  %v1957 = vunpack.c.l.b16 %v1561
  %v1958 = vunpack.c.h.b16 %v1561
  %v1959 = vunpack.c.l.b16 %v1562
  %v1960 = vunpack.c.h.b16 %v1562
  %v1961 = vunpack.c.l.b16 %v1563
  %v1962 = vunpack.c.h.b16 %v1563
  %v1963 = vunpack.c.l.b16 %v1564
  %v1964 = vunpack.c.h.b16 %v1564
  %v1965 = vunpack.c.l.b16 %v1565
  %v1966 = vunpack.c.h.b16 %v1565
  %v1967 = vunpack.c.l.b16 %v1566
  %v1968 = vunpack.c.h.b16 %v1566
  %v1969 = vunpack.c.l.b16 %v1567
  %v1970 = vunpack.c.h.b16 %v1567
  %v1971 = vunpack.c.l.b16 %v1568
  %v1972 = vunpack.c.h.b16 %v1568
  %v1973 = vunpack.c.l.b16 %v1569
  %v1974 = vunpack.c.h.b16 %v1569
  %v1975 = vunpack.c.l.b16 %v1570
  %v1976 = vunpack.c.h.b16 %v1570
  %v1977 = vunpack.c.l.b16 %v1571
  %v1978 = vunpack.c.h.b16 %v1571
  %v1979 = vunpack.c.l.b16 %v1572
  %v1980 = vunpack.c.h.b16 %v1572
  %v1981 = vunpack.c.l.b16 %v1573
  %v1982 = vunpack.c.h.b16 %v1573
  %v1983 = vunpack.c.l.b16 %v1574
  %v1984 = vunpack.c.h.b16 %v1574
  %v1985 = vunpack.c.l.b16 %v1575
  %v1986 = vunpack.c.h.b16 %v1575
  %v1987 = vunpack.c.l.b16 %v1576
  %v1988 = vunpack.c.h.b16 %v1576
  %v1989 = vunpack.c.l.b16 %v1577
  %v1990 = vunpack.c.h.b16 %v1577
  %v1991 = vunpack.c.l.b16 %v1578
  %v1992 = vunpack.c.h.b16 %v1578
  %v1993 = vunpack.c.l.b16 %v1579
  %v1994 = vunpack.c.h.b16 %v1579
  %v1995 = vunpack.c.l.b16 %v1580
  %v1996 = vunpack.c.h.b16 %v1580
  %v1997 = vunpack.c.l.b16 %v1581
  %v1998 = vunpack.c.h.b16 %v1581
  %v1999 = vunpack.c.l.b16 %v1582
  %v2000 = vunpack.c.h.b16 %v1582
  %v2001 = vunpack.c.l.b16 %v1583
  %v2002 = vunpack.c.h.b16 %v1583
  %v2003 = vunpack.c.l.b16 %v1584
  %v2004 = vunpack.c.h.b16 %v1584
  %v2005 = vunpack.c.l.b16 %v1585
  %v2006 = vunpack.c.h.b16 %v1585
  %v2007 = vunpack.c.l.b16 %v1586
  %v2008 = vunpack.c.h.b16 %v1586
  %v2009 = vunpack.c.l.b16 %v1587
  %v2010 = vunpack.c.h.b16 %v1587
  %v2011 = vunpack.c.l.b16 %v1588
  %v2012 = vunpack.c.h.b16 %v1588
  %v2013 = vunpack.c.l.b16 %v1589
  %v2014 = vunpack.c.h.b16 %v1589
  %v2015 = vunpack.c.l.b16 %v1590
  %v2016 = vunpack.c.h.b16 %v1590
  %v2017 = vunpack.c.l.b16 %v1591
  %v2018 = vunpack.c.h.b16 %v1591
  %v2019 = vunpack.c.l.b16 %v1592
  %v2020 = vunpack.c.h.b16 %v1592
  %v2021 = vunpack.c.l.b16 %v1593
  %v2022 = vunpack.c.h.b16 %v1593
  %v2023 = vunpack.c.l.b16 %v1594
  %v2024 = vunpack.c.h.b16 %v1594
  %v2025 = vunpack.c.l.b16 %v1595
  %v2026 = vunpack.c.h.b16 %v1595
  %v2027 = vunpack.c.l.b16 %v1596
  %v2028 = vunpack.c.h.b16 %v1596
  %v2029 = vunpack.c.l.b16 %v1597
  %v2030 = vunpack.c.h.b16 %v1597
  %v2031 = vunpack.c.l.b16 %v1598
  %v2032 = vunpack.c.h.b16 %v1598
  %v2033 = vunpack.c.l.b16 %v1599
  %v2034 = vunpack.c.h.b16 %v1599
  %v2035 = vunpack.c.l.b16 %v1600
  %v2036 = vunpack.c.h.b16 %v1600
  %v2037 = vunpack.c.l.b16 %v1601
  %v2038 = vunpack.c.h.b16 %v1601
  %v2039 = vunpack.c.l.b16 %v1602
  %v2040 = vunpack.c.h.b16 %v1602
  %v2041 = vunpack.c.l.b16 %v1603
  %v2042 = vunpack.c.h.b16 %v1603
  %v2043 = vunpack.c.l.b16 %v1604
  %v2044 = vunpack.c.h.b16 %v1604
  %v2045 = vunpack.c.l.b16 %v1605
  %v2046 = vunpack.c.h.b16 %v1605
  %v2047 = vunpack.c.l.b16 %v1606
  %v2048 = vunpack.c.h.b16 %v1606
  %v2049 = vunpack.c.l.b16 %v1607
  %v2050 = vunpack.c.h.b16 %v1607
  %v2051 = vunpack.c.l.b16 %v1608
  %v2052 = vunpack.c.h.b16 %v1608
  %v2053 = vpack.c.b16 %v1767, %v1765
  %v2054 = vpack.c.b16 %v1768, %v1766
  %v2055 = vpack.c.b16 %v1771, %v1769
  %v2056 = vpack.c.b16 %v1772, %v1770
  %v2057 = vpack.c.b16 %v1775, %v1773
  %v2058 = vpack.c.b16 %v1776, %v1774
  %v2059 = vpack.c.b16 %v1779, %v1777
  %v2060 = vpack.c.b16 %v1780, %v1778
  %v2061 = vpack.c.b16 %v1783, %v1781
  %v2062 = vpack.c.b16 %v1784, %v1782
  %v2063 = vpack.c.b16 %v1787, %v1785
  %v2064 = vpack.c.b16 %v1788, %v1786
  %v2065 = vpack.c.b16 %v1791, %v1789
  %v2066 = vpack.c.b16 %v1792, %v1790
  %v2067 = vpack.c.b16 %v1795, %v1793
  %v2068 = vpack.c.b16 %v1796, %v1794
  %v2069 = vpack.c.b16 %v1799, %v1797
  %v2070 = vpack.c.b16 %v1800, %v1798
  %v2071 = vpack.c.b16 %v1803, %v1801
  %v2072 = vpack.c.b16 %v1804, %v1802
  %v2073 = vpack.c.b16 %v1807, %v1805
  %v2074 = vpack.c.b16 %v1808, %v1806
  %v2075 = vpack.c.b16 %v1811, %v1809
  %v2076 = vpack.c.b16 %v1812, %v1810
  %v2077 = vpack.c.b16 %v1815, %v1813
  %v2078 = vpack.c.b16 %v1816, %v1814
  %v2079 = vpack.c.b16 %v1819, %v1817
  %v2080 = vpack.c.b16 %v1820, %v1818
  %v2081 = vpack.c.b16 %v1823, %v1821
  %v2082 = vpack.c.b16 %v1824, %v1822
  %v2083 = vpack.c.b16 %v1827, %v1825
  %v2084 = vpack.c.b16 %v1828, %v1826
  %v2085 = vpack.c.b16 %v1831, %v1829
  %v2086 = vpack.c.b16 %v1832, %v1830
  %v2087 = vpack.c.b16 %v1835, %v1833
  %v2088 = vpack.c.b16 %v1836, %v1834
  %v2089 = vpack.c.b16 %v1839, %v1837
  %v2090 = vpack.c.b16 %v1840, %v1838
  %v2091 = vpack.c.b16 %v1843, %v1841
  %v2092 = vpack.c.b16 %v1844, %v1842
  %v2093 = vpack.c.b16 %v1847, %v1845
  %v2094 = vpack.c.b16 %v1848, %v1846
  %v2095 = vpack.c.b16 %v1851, %v1849
  %v2096 = vpack.c.b16 %v1852, %v1850
  %v2097 = vpack.c.b16 %v1855, %v1853
  %v2098 = vpack.c.b16 %v1856, %v1854
  %v2099 = vpack.c.b16 %v1859, %v1857
  %v2100 = vpack.c.b16 %v1860, %v1858
  %v2101 = vpack.c.b16 %v1863, %v1861
  %v2102 = vpack.c.b16 %v1864, %v1862
  %v2103 = vpack.c.b16 %v1867, %v1865
  %v2104 = vpack.c.b16 %v1868, %v1866
  %v2105 = vpack.c.b16 %v1871, %v1869
  %v2106 = vpack.c.b16 %v1872, %v1870
  %v2107 = vpack.c.b16 %v1875, %v1873
  %v2108 = vpack.c.b16 %v1876, %v1874
  %v2109 = vpack.c.b16 %v1879, %v1877
  %v2110 = vpack.c.b16 %v1880, %v1878
  %v2111 = vpack.c.b16 %v1883, %v1881
  %v2112 = vpack.c.b16 %v1884, %v1882
  %v2113 = vpack.c.b16 %v1887, %v1885
  %v2114 = vpack.c.b16 %v1888, %v1886
  %v2115 = vpack.c.b16 %v1891, %v1889
  %v2116 = vpack.c.b16 %v1892, %v1890
  %v2117 = vpack.c.b16 %v1895, %v1893
  %v2118 = vpack.c.b16 %v1896, %v1894
  %v2119 = vpack.c.b16 %v1899, %v1897
  %v2120 = vpack.c.b16 %v1900, %v1898
  %v2121 = vpack.c.b16 %v1903, %v1901
  %v2122 = vpack.c.b16 %v1904, %v1902
  %v2123 = vpack.c.b16 %v1907, %v1905
  %v2124 = vpack.c.b16 %v1908, %v1906
  %v2125 = vpack.c.b16 %v1911, %v1909
  %v2126 = vpack.c.b16 %v1912, %v1910
  %v2127 = vpack.c.b16 %v1915, %v1913
  %v2128 = vpack.c.b16 %v1916, %v1914
  %v2129 = vpack.c.b16 %v1919, %v1917
  %v2130 = vpack.c.b16 %v1920, %v1918
  %v2131 = vpack.c.b16 %v1923, %v1921
  %v2132 = vpack.c.b16 %v1924, %v1922
  %v2133 = vpack.c.b16 %v1927, %v1925
  %v2134 = vpack.c.b16 %v1928, %v1926
  %v2135 = vpack.c.b16 %v1931, %v1929
  %v2136 = vpack.c.b16 %v1932, %v1930
  %v2137 = vpack.c.b16 %v1935, %v1933
  %v2138 = vpack.c.b16 %v1936, %v1934
  %v2139 = vpack.c.b16 %v1939, %v1937
  %v2140 = vpack.c.b16 %v1940, %v1938
  %v2141 = vpack.c.b16 %v1943, %v1941
  %v2142 = vpack.c.b16 %v1944, %v1942
  %v2143 = vpack.c.b16 %v1947, %v1945
  %v2144 = vpack.c.b16 %v1948, %v1946
  %v2145 = vpack.c.b16 %v1951, %v1949
  %v2146 = vpack.c.b16 %v1952, %v1950
  %v2147 = vpack.c.b16 %v1955, %v1953
  %v2148 = vpack.c.b16 %v1956, %v1954
  %v2149 = vpack.c.b16 %v1959, %v1957
  %v2150 = vpack.c.b16 %v1960, %v1958
  %v2151 = vpack.c.b16 %v1963, %v1961
  %v2152 = vpack.c.b16 %v1964, %v1962
  %v2153 = vpack.c.b16 %v1967, %v1965
  %v2154 = vpack.c.b16 %v1968, %v1966
  %v2155 = vpack.c.b16 %v1971, %v1969
  %v2156 = vpack.c.b16 %v1972, %v1970
  %v2157 = vpack.c.b16 %v1975, %v1973
  %v2158 = vpack.c.b16 %v1976, %v1974
  %v2159 = vpack.c.b16 %v1979, %v1977
  %v2160 = vpack.c.b16 %v1980, %v1978
  %v2161 = vpack.c.b16 %v1983, %v1981
  %v2162 = vpack.c.b16 %v1984, %v1982
  %v2163 = vpack.c.b16 %v1987, %v1985
  %v2164 = vpack.c.b16 %v1988, %v1986
  %v2165 = vpack.c.b16 %v1991, %v1989
  %v2166 = vpack.c.b16 %v1992, %v1990
  %v2167 = vpack.c.b16 %v1995, %v1993
  %v2168 = vpack.c.b16 %v1996, %v1994
  %v2169 = vpack.c.b16 %v1999, %v1997
  %v2170 = vpack.c.b16 %v2000, %v1998
  %v2171 = vpack.c.b16 %v2003, %v2001
  %v2172 = vpack.c.b16 %v2004, %v2002
  %v2173 = vpack.c.b16 %v2007, %v2005
  %v2174 = vpack.c.b16 %v2008, %v2006
  %v2175 = vpack.c.b16 %v2011, %v2009
  %v2176 = vpack.c.b16 %v2012, %v2010
  %v2177 = vpack.c.b16 %v2015, %v2013
  %v2178 = vpack.c.b16 %v2016, %v2014
  %v2179 = vpack.c.b16 %v2019, %v2017
  %v2180 = vpack.c.b16 %v2020, %v2018
  %v2181 = vpack.c.b16 %v2023, %v2021
  %v2182 = vpack.c.b16 %v2024, %v2022
  %v2183 = vpack.c.b16 %v2027, %v2025
  %v2184 = vpack.c.b16 %v2028, %v2026
  %v2185 = vpack.c.b16 %v2031, %v2029
  %v2186 = vpack.c.b16 %v2032, %v2030
  %v2187 = vpack.c.b16 %v2035, %v2033
  %v2188 = vpack.c.b16 %v2036, %v2034
  %v2189 = vpack.c.b16 %v2039, %v2037
  %v2190 = vpack.c.b16 %v2040, %v2038
  %v2191 = vpack.c.b16 %v2043, %v2041
  %v2192 = vpack.c.b16 %v2044, %v2042
  %v2193 = vpack.c.b16 %v2047, %v2045
  %v2194 = vpack.c.b16 %v2048, %v2046
  %v2195 = vpack.c.b16 %v2051, %v2049
  %v2196 = vpack.c.b16 %v2052, %v2050
  %2341 = vmatprep.subr.bf16.mxu0 %v2068
  %2342 = vmatpush1.bf16.msra.mxu0 %v2067
  %2343 = vmatprep.subr.bf16.mxu0 %v2066
  %2344 = vmatpush1.bf16.msra.mxu0 %v2065
  %2345 = vmatprep.subr.bf16.mxu0 %v2064
  %2346 = vmatpush1.bf16.msra.mxu0 %v2063
  %2347 = vmatprep.subr.bf16.mxu0 %v2062
  %2348 = vmatpush1.bf16.msra.mxu0 %v2061
  %2349 = vmatprep.subr.bf16.mxu0 %v2060
  %2350 = vmatpush1.bf16.msra.mxu0 %v2059
  %2351 = vmatprep.subr.bf16.mxu0 %v2058
  %2352 = vmatpush1.bf16.msra.mxu0 %v2057
  %2353 = vmatprep.subr.bf16.mxu0 %v2056
  %2354 = vmatpush1.bf16.msra.mxu0 %v2055
  %2355 = vmatprep.subr.bf16.mxu0 %v2054
  %2356 = vmatpush1.bf16.msra.mxu0 %v2053
  %2357 = vmatprep.subr.bf16.mxu0 %v2084
  %2358 = vmatpush2.bf16.msra.mxu0 %v2083
  %2359 = vmatprep.subr.bf16.mxu0 %v2082
  %2360 = vmatpush2.bf16.msra.mxu0 %v2081
  %2361 = vmatprep.subr.bf16.mxu0 %v2080
  %2362 = vmatpush2.bf16.msra.mxu0 %v2079
  %2363 = vmatprep.subr.bf16.mxu0 %v2078
  %2364 = vmatpush2.bf16.msra.mxu0 %v2077
  %2365 = vmatprep.subr.bf16.mxu0 %v2076
  %2366 = vmatpush2.bf16.msra.mxu0 %v2075
  %2367 = vmatprep.subr.bf16.mxu0 %v2074
  %2368 = vmatpush2.bf16.msra.mxu0 %v2073
  %2369 = vmatprep.subr.bf16.mxu0 %v2072
  %2370 = vmatpush2.bf16.msra.mxu0 %v2071
  %2371 = vmatprep.subr.bf16.mxu0 %v2070
  %2372 = vmatpush2.bf16.msra.mxu0 %v2069
  %2373 = vmatprep.mubr.bf16.mxu0 %v1260
  %2374 = vmatmul.mubr.bf16.gmra.mxu0 %v1231
  %v2375 = vpop.f32.mrf.mxu0
  %v2376 = vadd.f32 %v1614, %v2375
  %v2377 = vpop.f32.mrf.mxu0
  %v2378 = vadd.f32 %v1618, %v2377
  %v2379 = vpop.f32.mrf.mxu0
  %v2380 = vpop.f32.mrf.mxu0
  %2381 = vdwg.mxu0
  %2382 = vmatprep.subr.bf16.mxu0 %v2100
  %2383 = vmatpush1.bf16.msra.mxu0 %v2099
  %2384 = vmatprep.subr.bf16.mxu0 %v2098
  %2385 = vmatpush1.bf16.msra.mxu0 %v2097
  %2386 = vmatprep.subr.bf16.mxu0 %v2096
  %2387 = vmatpush1.bf16.msra.mxu0 %v2095
  %2388 = vmatprep.subr.bf16.mxu0 %v2094
  %2389 = vmatpush1.bf16.msra.mxu0 %v2093
  %2390 = vmatprep.subr.bf16.mxu0 %v2092
  %2391 = vmatpush1.bf16.msra.mxu0 %v2091
  %2392 = vmatprep.subr.bf16.mxu0 %v2090
  %2393 = vmatpush1.bf16.msra.mxu0 %v2089
  %2394 = vmatprep.subr.bf16.mxu0 %v2088
  %2395 = vmatpush1.bf16.msra.mxu0 %v2087
  %2396 = vmatprep.subr.bf16.mxu0 %v2086
  %2397 = vmatpush1.bf16.msra.mxu0 %v2085
  %2398 = vmatprep.subr.bf16.mxu0 %v2116
  %2399 = vmatpush2.bf16.msra.mxu0 %v2115
  %2400 = vmatprep.subr.bf16.mxu0 %v2114
  %2401 = vmatpush2.bf16.msra.mxu0 %v2113
  %2402 = vmatprep.subr.bf16.mxu0 %v2112
  %2403 = vmatpush2.bf16.msra.mxu0 %v2111
  %2404 = vmatprep.subr.bf16.mxu0 %v2110
  %2405 = vmatpush2.bf16.msra.mxu0 %v2109
  %2406 = vmatprep.subr.bf16.mxu0 %v2108
  %2407 = vmatpush2.bf16.msra.mxu0 %v2107
  %2408 = vmatprep.subr.bf16.mxu0 %v2106
  %2409 = vmatpush2.bf16.msra.mxu0 %v2105
  %2410 = vmatprep.subr.bf16.mxu0 %v2104
  %2411 = vmatpush2.bf16.msra.mxu0 %v2103
  %2412 = vmatprep.subr.bf16.mxu0 %v2102
  %2413 = vmatpush2.bf16.msra.mxu0 %v2101
  %2414 = vmatprep.mubr.bf16.mxu0 %v1318
  %2415 = vmatmul.mubr.bf16.gmra.mxu0 %v1289
  %v2416 = vpop.f32.mrf.mxu0
  %v2417 = vadd.f32 %v2376, %v2416
  %v2418 = vpop.f32.mrf.mxu0
  %v2419 = vadd.f32 %v2378, %v2418
  %v2420 = vpop.f32.mrf.mxu0
  %v2421 = vpop.f32.mrf.mxu0
  %2422 = vdwg.mxu0
  %2423 = vmatprep.subr.bf16.mxu0 %v2132
  %2424 = vmatpush1.bf16.msra.mxu0 %v2131
  %2425 = vmatprep.subr.bf16.mxu0 %v2130
  %2426 = vmatpush1.bf16.msra.mxu0 %v2129
  %2427 = vmatprep.subr.bf16.mxu0 %v2128
  %2428 = vmatpush1.bf16.msra.mxu0 %v2127
  %2429 = vmatprep.subr.bf16.mxu0 %v2126
  %2430 = vmatpush1.bf16.msra.mxu0 %v2125
  %2431 = vmatprep.subr.bf16.mxu0 %v2124
  %2432 = vmatpush1.bf16.msra.mxu0 %v2123
  %2433 = vmatprep.subr.bf16.mxu0 %v2122
  %2434 = vmatpush1.bf16.msra.mxu0 %v2121
  %2435 = vmatprep.subr.bf16.mxu0 %v2120
  %2436 = vmatpush1.bf16.msra.mxu0 %v2119
  %2437 = vmatprep.subr.bf16.mxu0 %v2118
  %2438 = vmatpush1.bf16.msra.mxu0 %v2117
  %2439 = vmatprep.subr.bf16.mxu0 %v2148
  %2440 = vmatpush2.bf16.msra.mxu0 %v2147
  %2441 = vmatprep.subr.bf16.mxu0 %v2146
  %2442 = vmatpush2.bf16.msra.mxu0 %v2145
  %2443 = vmatprep.subr.bf16.mxu0 %v2144
  %2444 = vmatpush2.bf16.msra.mxu0 %v2143
  %2445 = vmatprep.subr.bf16.mxu0 %v2142
  %2446 = vmatpush2.bf16.msra.mxu0 %v2141
  %2447 = vmatprep.subr.bf16.mxu0 %v2140
  %2448 = vmatpush2.bf16.msra.mxu0 %v2139
  %2449 = vmatprep.subr.bf16.mxu0 %v2138
  %2450 = vmatpush2.bf16.msra.mxu0 %v2137
  %2451 = vmatprep.subr.bf16.mxu0 %v2136
  %2452 = vmatpush2.bf16.msra.mxu0 %v2135
  %2453 = vmatprep.subr.bf16.mxu0 %v2134
  %2454 = vmatpush2.bf16.msra.mxu0 %v2133
  %2455 = vmatprep.mubr.bf16.mxu0 %v1376
  %2456 = vmatmul.mubr.bf16.gmra.mxu0 %v1347
  %v2457 = vpop.f32.mrf.mxu0
  %v2458 = vadd.f32 %v2417, %v2457
  %v2459 = vpop.f32.mrf.mxu0
  %v2460 = vadd.f32 %v2419, %v2459
  %v2461 = vpop.f32.mrf.mxu0
  %v2462 = vpop.f32.mrf.mxu0
  %2463 = vdwg.mxu0
  %2464 = vmatprep.subr.bf16.mxu0 %v2164
  %2465 = vmatpush1.bf16.msra.mxu0 %v2163
  %2466 = vmatprep.subr.bf16.mxu0 %v2162
  %2467 = vmatpush1.bf16.msra.mxu0 %v2161
  %2468 = vmatprep.subr.bf16.mxu0 %v2160
  %2469 = vmatpush1.bf16.msra.mxu0 %v2159
  %2470 = vmatprep.subr.bf16.mxu0 %v2158
  %2471 = vmatpush1.bf16.msra.mxu0 %v2157
  %2472 = vmatprep.subr.bf16.mxu0 %v2156
  %2473 = vmatpush1.bf16.msra.mxu0 %v2155
  %2474 = vmatprep.subr.bf16.mxu0 %v2154
  %2475 = vmatpush1.bf16.msra.mxu0 %v2153
  %2476 = vmatprep.subr.bf16.mxu0 %v2152
  %2477 = vmatpush1.bf16.msra.mxu0 %v2151
  %2478 = vmatprep.subr.bf16.mxu0 %v2150
  %2479 = vmatpush1.bf16.msra.mxu0 %v2149
  %2480 = vmatprep.subr.bf16.mxu0 %v2180
  %2481 = vmatpush2.bf16.msra.mxu0 %v2179
  %2482 = vmatprep.subr.bf16.mxu0 %v2178
  %2483 = vmatpush2.bf16.msra.mxu0 %v2177
  %2484 = vmatprep.subr.bf16.mxu0 %v2176
  %2485 = vmatpush2.bf16.msra.mxu0 %v2175
  %2486 = vmatprep.subr.bf16.mxu0 %v2174
  %2487 = vmatpush2.bf16.msra.mxu0 %v2173
  %2488 = vmatprep.subr.bf16.mxu0 %v2172
  %2489 = vmatpush2.bf16.msra.mxu0 %v2171
  %2490 = vmatprep.subr.bf16.mxu0 %v2170
  %2491 = vmatpush2.bf16.msra.mxu0 %v2169
  %2492 = vmatprep.subr.bf16.mxu0 %v2168
  %2493 = vmatpush2.bf16.msra.mxu0 %v2167
  %2494 = vmatprep.subr.bf16.mxu0 %v2166
  %2495 = vmatpush2.bf16.msra.mxu0 %v2165
  %2496 = vmatprep.mubr.bf16.mxu0 %v1434
  %2497 = vmatmul.mubr.bf16.gmra.mxu0 %v1405
  %v2498 = vpop.f32.mrf.mxu0
  %v2499 = vadd.f32 %v2458, %v2498
  %v2500 = vpop.f32.mrf.mxu0
  %v2501 = vadd.f32 %v2460, %v2500
  %v2502 = vpop.f32.mrf.mxu0
  %v2503 = vpop.f32.mrf.mxu0
  %2504 = vdwg.mxu0
  %2505 = vmatprep.subr.bf16.mxu0 %v2196
  %2506 = vmatpush1.bf16.msra.mxu0 %v2195
  %2507 = vmatprep.subr.bf16.mxu0 %v2194
  %2508 = vmatpush1.bf16.msra.mxu0 %v2193
  %2509 = vmatprep.subr.bf16.mxu0 %v2192
  %2510 = vmatpush1.bf16.msra.mxu0 %v2191
  %2511 = vmatprep.subr.bf16.mxu0 %v2190
  %2512 = vmatpush1.bf16.msra.mxu0 %v2189
  %2513 = vmatprep.subr.bf16.mxu0 %v2188
  %2514 = vmatpush1.bf16.msra.mxu0 %v2187
  %2515 = vmatprep.subr.bf16.mxu0 %v2186
  %2516 = vmatpush1.bf16.msra.mxu0 %v2185
  %2517 = vmatprep.subr.bf16.mxu0 %v2184
  %2518 = vmatpush1.bf16.msra.mxu0 %v2183
  %2519 = vmatprep.subr.bf16.mxu0 %v2182
  %2520 = vmatpush1.bf16.msra.mxu0 %v2181
  %2521 = vmatprep.subr.bf16.mxu0 0
  %2522 = vmatpush2.bf16.msra.mxu0 0
  %2523 = vmatprep.subr.bf16.mxu0 0
  %2524 = vmatpush2.bf16.msra.mxu0 0
  %2525 = vmatprep.subr.bf16.mxu0 0
  %2526 = vmatpush2.bf16.msra.mxu0 0
  %2527 = vmatprep.subr.bf16.mxu0 0
  %2528 = vmatpush2.bf16.msra.mxu0 0
  %2529 = vmatprep.subr.bf16.mxu0 0
  %2530 = vmatpush2.bf16.msra.mxu0 0
  %2531 = vmatprep.subr.bf16.mxu0 0
  %2532 = vmatpush2.bf16.msra.mxu0 0
  %2533 = vmatprep.subr.bf16.mxu0 0
  %2534 = vmatpush2.bf16.msra.mxu0 0
  %2535 = vmatprep.subr.bf16.mxu0 0
  %2536 = vmatpush2.bf16.msra.mxu0 0
  %2537 = vmatprep.mubr.bf16.mxu0 0
  %2538 = vmatmul.mubr.bf16.gmra.mxu0 %v1463
  %v2539 = vpop.f32.mrf.mxu0
  %v2540 = vadd.f32 %v2499, %v2539
  %v2541 = vpop.f32.mrf.mxu0
  %v2542 = vadd.f32 %v2501, %v2541
  %v2543 = vpop.f32.mrf.mxu0
  %v2544 = vpop.f32.mrf.mxu0
  %2545 = vdwg.mxu0
  %v2546 = vmax.f32 %v2540, 0.0
  %v2547 = vmax.f32 %v2542, 0.0
  %v2548 = vpack.c.bf16 %v2546, %v2546
  %v2549 = vpack.c.bf16 %v2547, %v2547
  %v2550 = vpack.i.b16 %v1032, %v1007
  %v2551 = vpack.i.b16 %v1082, %v1057
  %v2552 = vpack.i.b16 %v1132, %v1107
  %v2553 = vpack.i.b16 %v1182, %v1157
  %v2554 = vcombine.low %v2550, %v2551
  %v2555 = vcombine.low %v2552, %v2553
  %v2557 = vunpack.c.l.s4 1966171168
  %v2558 = vunpack.c.0.s8 %v2557
  %v2559 = vlaneseq
  %v2560 = vshrl.u32 %v2559, 7
  %v2561 = vsub.s32 %v2558, %v2560
  %v2562 = vrot.slane %v2554, %v2561
  %v2564 = vunpack.c.l.s4 1966171168
  %v2565 = vunpack.c.0.s8 %v2564
  %v2566 = vlaneseq
  %v2567 = vshrl.u32 %v2566, 7
  %v2568 = vsub.s32 %v2565, %v2567
  %v2569 = vrot.slane %v2555, %v2568
  %v2570 = vcombine.low %v2562, %v2569
  %v2572 = vunpack.c.l.s4 1966171168
  %v2573 = vunpack.c.0.s8 %v2572
  %v2574 = vlaneseq
  %v2575 = vshrl.u32 %v2574, 7
  %v2576 = vsub.s32 %v2573, %v2575
  %v2577 = vrot.slane %v2570, %v2576
  %v2579 = vpack.i.b16 %v1037, %v1012
  %v2580 = vpack.i.b16 %v1087, %v1062
  %v2581 = vpack.i.b16 %v1137, %v1112
  %v2582 = vpack.i.b16 %v1187, %v1162
  %v2583 = vcombine.low %v2579, %v2580
  %v2584 = vcombine.low %v2581, %v2582
  %v2586 = vunpack.c.l.s4 1966171168
  %v2587 = vunpack.c.0.s8 %v2586
  %v2588 = vlaneseq
  %v2589 = vshrl.u32 %v2588, 7
  %v2590 = vsub.s32 %v2587, %v2589
  %v2591 = vrot.slane %v2583, %v2590
  %v2593 = vunpack.c.l.s4 1966171168
  %v2594 = vunpack.c.0.s8 %v2593
  %v2595 = vlaneseq
  %v2596 = vshrl.u32 %v2595, 7
  %v2597 = vsub.s32 %v2594, %v2596
  %v2598 = vrot.slane %v2584, %v2597
  %v2599 = vcombine.low %v2591, %v2598
  %v2601 = vunpack.c.l.s4 1966171168
  %v2602 = vunpack.c.0.s8 %v2601
  %v2603 = vlaneseq
  %v2604 = vshrl.u32 %v2603, 7
  %v2605 = vsub.s32 %v2602, %v2604
  %v2606 = vrot.slane %v2599, %v2605
  %v2608 = vpack.i.b16 %v1042, %v1017
  %v2609 = vpack.i.b16 %v1092, %v1067
  %v2610 = vpack.i.b16 %v1142, %v1117
  %v2611 = vpack.i.b16 %v1192, %v1167
  %v2612 = vcombine.low %v2608, %v2609
  %v2613 = vcombine.low %v2610, %v2611
  %v2615 = vunpack.c.l.s4 1966171168
  %v2616 = vunpack.c.0.s8 %v2615
  %v2617 = vlaneseq
  %v2618 = vshrl.u32 %v2617, 7
  %v2619 = vsub.s32 %v2616, %v2618
  %v2620 = vrot.slane %v2612, %v2619
  %v2622 = vunpack.c.l.s4 1966171168
  %v2623 = vunpack.c.0.s8 %v2622
  %v2624 = vlaneseq
  %v2625 = vshrl.u32 %v2624, 7
  %v2626 = vsub.s32 %v2623, %v2625
  %v2627 = vrot.slane %v2613, %v2626
  %v2628 = vcombine.low %v2620, %v2627
  %v2630 = vunpack.c.l.s4 1966171168
  %v2631 = vunpack.c.0.s8 %v2630
  %v2632 = vlaneseq
  %v2633 = vshrl.u32 %v2632, 7
  %v2634 = vsub.s32 %v2631, %v2633
  %v2635 = vrot.slane %v2628, %v2634
  %2637 = vmatprep.subr.bf16.mxu0 %v2068
  %2638 = vmatpush1.bf16.msra.mxu0 %v2067
  %2639 = vmatprep.subr.bf16.mxu0 %v2066
  %2640 = vmatpush1.bf16.msra.mxu0 %v2065
  %2641 = vmatprep.subr.bf16.mxu0 %v2064
  %2642 = vmatpush1.bf16.msra.mxu0 %v2063
  %2643 = vmatprep.subr.bf16.mxu0 %v2062
  %2644 = vmatpush1.bf16.msra.mxu0 %v2061
  %2645 = vmatprep.subr.bf16.mxu0 %v2060
  %2646 = vmatpush1.bf16.msra.mxu0 %v2059
  %2647 = vmatprep.subr.bf16.mxu0 %v2058
  %2648 = vmatpush1.bf16.msra.mxu0 %v2057
  %2649 = vmatprep.subr.bf16.mxu0 %v2056
  %2650 = vmatpush1.bf16.msra.mxu0 %v2055
  %2651 = vmatprep.subr.bf16.mxu0 %v2054
  %2652 = vmatpush1.bf16.msra.mxu0 %v2053
  %2653 = vmatprep.subr.bf16.mxu0 %v2084
  %2654 = vmatpush2.bf16.msra.mxu0 %v2083
  %2655 = vmatprep.subr.bf16.mxu0 %v2082
  %2656 = vmatpush2.bf16.msra.mxu0 %v2081
  %2657 = vmatprep.subr.bf16.mxu0 %v2080
  %2658 = vmatpush2.bf16.msra.mxu0 %v2079
  %2659 = vmatprep.subr.bf16.mxu0 %v2078
  %2660 = vmatpush2.bf16.msra.mxu0 %v2077
  %2661 = vmatprep.subr.bf16.mxu0 %v2076
  %2662 = vmatpush2.bf16.msra.mxu0 %v2075
  %2663 = vmatprep.subr.bf16.mxu0 %v2074
  %2664 = vmatpush2.bf16.msra.mxu0 %v2073
  %2665 = vmatprep.subr.bf16.mxu0 %v2072
  %2666 = vmatpush2.bf16.msra.mxu0 %v2071
  %2667 = vmatprep.subr.bf16.mxu0 %v2070
  %2668 = vmatpush2.bf16.msra.mxu0 %v2069
  %2669 = vmatprep.mubr.bf16.mxu0 %v1289
  %2670 = vmatmul.mubr.bf16.gmra.mxu0 %v1260
  %v2671 = vpop.f32.mrf.mxu0
  %v2672 = vadd.f32 %v1614, %v2671
  %v2673 = vpop.f32.mrf.mxu0
  %v2674 = vadd.f32 %v1618, %v2673
  %v2675 = vpop.f32.mrf.mxu0
  %v2676 = vpop.f32.mrf.mxu0
  %2677 = vdwg.mxu0
  %2678 = vmatprep.subr.bf16.mxu0 %v2100
  %2679 = vmatpush1.bf16.msra.mxu0 %v2099
  %2680 = vmatprep.subr.bf16.mxu0 %v2098
  %2681 = vmatpush1.bf16.msra.mxu0 %v2097
  %2682 = vmatprep.subr.bf16.mxu0 %v2096
  %2683 = vmatpush1.bf16.msra.mxu0 %v2095
  %2684 = vmatprep.subr.bf16.mxu0 %v2094
  %2685 = vmatpush1.bf16.msra.mxu0 %v2093
  %2686 = vmatprep.subr.bf16.mxu0 %v2092
  %2687 = vmatpush1.bf16.msra.mxu0 %v2091
  %2688 = vmatprep.subr.bf16.mxu0 %v2090
  %2689 = vmatpush1.bf16.msra.mxu0 %v2089
  %2690 = vmatprep.subr.bf16.mxu0 %v2088
  %2691 = vmatpush1.bf16.msra.mxu0 %v2087
  %2692 = vmatprep.subr.bf16.mxu0 %v2086
  %2693 = vmatpush1.bf16.msra.mxu0 %v2085
  %2694 = vmatprep.subr.bf16.mxu0 %v2116
  %2695 = vmatpush2.bf16.msra.mxu0 %v2115
  %2696 = vmatprep.subr.bf16.mxu0 %v2114
  %2697 = vmatpush2.bf16.msra.mxu0 %v2113
  %2698 = vmatprep.subr.bf16.mxu0 %v2112
  %2699 = vmatpush2.bf16.msra.mxu0 %v2111
  %2700 = vmatprep.subr.bf16.mxu0 %v2110
  %2701 = vmatpush2.bf16.msra.mxu0 %v2109
  %2702 = vmatprep.subr.bf16.mxu0 %v2108
  %2703 = vmatpush2.bf16.msra.mxu0 %v2107
  %2704 = vmatprep.subr.bf16.mxu0 %v2106
  %2705 = vmatpush2.bf16.msra.mxu0 %v2105
  %2706 = vmatprep.subr.bf16.mxu0 %v2104
  %2707 = vmatpush2.bf16.msra.mxu0 %v2103
  %2708 = vmatprep.subr.bf16.mxu0 %v2102
  %2709 = vmatpush2.bf16.msra.mxu0 %v2101
  %2710 = vmatprep.mubr.bf16.mxu0 %v1347
  %2711 = vmatmul.mubr.bf16.gmra.mxu0 %v2577
  %v2712 = vpop.f32.mrf.mxu0
  %v2713 = vadd.f32 %v2672, %v2712
  %v2714 = vpop.f32.mrf.mxu0
  %v2715 = vadd.f32 %v2674, %v2714
  %v2716 = vpop.f32.mrf.mxu0
  %v2717 = vpop.f32.mrf.mxu0
  %2718 = vdwg.mxu0
  %2719 = vmatprep.subr.bf16.mxu0 %v2132
  %2720 = vmatpush1.bf16.msra.mxu0 %v2131
  %2721 = vmatprep.subr.bf16.mxu0 %v2130
  %2722 = vmatpush1.bf16.msra.mxu0 %v2129
  %2723 = vmatprep.subr.bf16.mxu0 %v2128
  %2724 = vmatpush1.bf16.msra.mxu0 %v2127
  %2725 = vmatprep.subr.bf16.mxu0 %v2126
  %2726 = vmatpush1.bf16.msra.mxu0 %v2125
  %2727 = vmatprep.subr.bf16.mxu0 %v2124
  %2728 = vmatpush1.bf16.msra.mxu0 %v2123
  %2729 = vmatprep.subr.bf16.mxu0 %v2122
  %2730 = vmatpush1.bf16.msra.mxu0 %v2121
  %2731 = vmatprep.subr.bf16.mxu0 %v2120
  %2732 = vmatpush1.bf16.msra.mxu0 %v2119
  %2733 = vmatprep.subr.bf16.mxu0 %v2118
  %2734 = vmatpush1.bf16.msra.mxu0 %v2117
  %2735 = vmatprep.subr.bf16.mxu0 %v2148
  %2736 = vmatpush2.bf16.msra.mxu0 %v2147
  %2737 = vmatprep.subr.bf16.mxu0 %v2146
  %2738 = vmatpush2.bf16.msra.mxu0 %v2145
  %2739 = vmatprep.subr.bf16.mxu0 %v2144
  %2740 = vmatpush2.bf16.msra.mxu0 %v2143
  %2741 = vmatprep.subr.bf16.mxu0 %v2142
  %2742 = vmatpush2.bf16.msra.mxu0 %v2141
  %2743 = vmatprep.subr.bf16.mxu0 %v2140
  %2744 = vmatpush2.bf16.msra.mxu0 %v2139
  %2745 = vmatprep.subr.bf16.mxu0 %v2138
  %2746 = vmatpush2.bf16.msra.mxu0 %v2137
  %2747 = vmatprep.subr.bf16.mxu0 %v2136
  %2748 = vmatpush2.bf16.msra.mxu0 %v2135
  %2749 = vmatprep.subr.bf16.mxu0 %v2134
  %2750 = vmatpush2.bf16.msra.mxu0 %v2133
  %2751 = vmatprep.mubr.bf16.mxu0 %v2606
  %2752 = vmatmul.mubr.bf16.gmra.mxu0 %v1376
  %v2753 = vpop.f32.mrf.mxu0
  %v2754 = vadd.f32 %v2713, %v2753
  %v2755 = vpop.f32.mrf.mxu0
  %v2756 = vadd.f32 %v2715, %v2755
  %v2757 = vpop.f32.mrf.mxu0
  %v2758 = vpop.f32.mrf.mxu0
  %2759 = vdwg.mxu0
  %2760 = vmatprep.subr.bf16.mxu0 %v2164
  %2761 = vmatpush1.bf16.msra.mxu0 %v2163
  %2762 = vmatprep.subr.bf16.mxu0 %v2162
  %2763 = vmatpush1.bf16.msra.mxu0 %v2161
  %2764 = vmatprep.subr.bf16.mxu0 %v2160
  %2765 = vmatpush1.bf16.msra.mxu0 %v2159
  %2766 = vmatprep.subr.bf16.mxu0 %v2158
  %2767 = vmatpush1.bf16.msra.mxu0 %v2157
  %2768 = vmatprep.subr.bf16.mxu0 %v2156
  %2769 = vmatpush1.bf16.msra.mxu0 %v2155
  %2770 = vmatprep.subr.bf16.mxu0 %v2154
  %2771 = vmatpush1.bf16.msra.mxu0 %v2153
  %2772 = vmatprep.subr.bf16.mxu0 %v2152
  %2773 = vmatpush1.bf16.msra.mxu0 %v2151
  %2774 = vmatprep.subr.bf16.mxu0 %v2150
  %2775 = vmatpush1.bf16.msra.mxu0 %v2149
  %2776 = vmatprep.subr.bf16.mxu0 %v2180
  %2777 = vmatpush2.bf16.msra.mxu0 %v2179
  %2778 = vmatprep.subr.bf16.mxu0 %v2178
  %2779 = vmatpush2.bf16.msra.mxu0 %v2177
  %2780 = vmatprep.subr.bf16.mxu0 %v2176
  %2781 = vmatpush2.bf16.msra.mxu0 %v2175
  %2782 = vmatprep.subr.bf16.mxu0 %v2174
  %2783 = vmatpush2.bf16.msra.mxu0 %v2173
  %2784 = vmatprep.subr.bf16.mxu0 %v2172
  %2785 = vmatpush2.bf16.msra.mxu0 %v2171
  %2786 = vmatprep.subr.bf16.mxu0 %v2170
  %2787 = vmatpush2.bf16.msra.mxu0 %v2169
  %2788 = vmatprep.subr.bf16.mxu0 %v2168
  %2789 = vmatpush2.bf16.msra.mxu0 %v2167
  %2790 = vmatprep.subr.bf16.mxu0 %v2166
  %2791 = vmatpush2.bf16.msra.mxu0 %v2165
  %2792 = vmatprep.mubr.bf16.mxu0 %v1463
  %2793 = vmatmul.mubr.bf16.gmra.mxu0 %v1434
  %v2794 = vpop.f32.mrf.mxu0
  %v2795 = vadd.f32 %v2754, %v2794
  %v2796 = vpop.f32.mrf.mxu0
  %v2797 = vadd.f32 %v2756, %v2796
  %v2798 = vpop.f32.mrf.mxu0
  %v2799 = vpop.f32.mrf.mxu0
  %2800 = vdwg.mxu0
  %2801 = vmatprep.subr.bf16.mxu0 %v2196
  %2802 = vmatpush1.bf16.msra.mxu0 %v2195
  %2803 = vmatprep.subr.bf16.mxu0 %v2194
  %2804 = vmatpush1.bf16.msra.mxu0 %v2193
  %2805 = vmatprep.subr.bf16.mxu0 %v2192
  %2806 = vmatpush1.bf16.msra.mxu0 %v2191
  %2807 = vmatprep.subr.bf16.mxu0 %v2190
  %2808 = vmatpush1.bf16.msra.mxu0 %v2189
  %2809 = vmatprep.subr.bf16.mxu0 %v2188
  %2810 = vmatpush1.bf16.msra.mxu0 %v2187
  %2811 = vmatprep.subr.bf16.mxu0 %v2186
  %2812 = vmatpush1.bf16.msra.mxu0 %v2185
  %2813 = vmatprep.subr.bf16.mxu0 %v2184
  %2814 = vmatpush1.bf16.msra.mxu0 %v2183
  %2815 = vmatprep.subr.bf16.mxu0 %v2182
  %2816 = vmatpush1.bf16.msra.mxu0 %v2181
  %2817 = vmatprep.subr.bf16.mxu0 0
  %2818 = vmatpush2.bf16.msra.mxu0 0
  %2819 = vmatprep.subr.bf16.mxu0 0
  %2820 = vmatpush2.bf16.msra.mxu0 0
  %2821 = vmatprep.subr.bf16.mxu0 0
  %2822 = vmatpush2.bf16.msra.mxu0 0
  %2823 = vmatprep.subr.bf16.mxu0 0
  %2824 = vmatpush2.bf16.msra.mxu0 0
  %2825 = vmatprep.subr.bf16.mxu0 0
  %2826 = vmatpush2.bf16.msra.mxu0 0
  %2827 = vmatprep.subr.bf16.mxu0 0
  %2828 = vmatpush2.bf16.msra.mxu0 0
  %2829 = vmatprep.subr.bf16.mxu0 0
  %2830 = vmatpush2.bf16.msra.mxu0 0
  %2831 = vmatprep.subr.bf16.mxu0 0
  %2832 = vmatpush2.bf16.msra.mxu0 0
  %2833 = vmatprep.mubr.bf16.mxu0 0
  %2834 = vmatmul.mubr.bf16.gmra.mxu0 %v2635
  %v2835 = vpop.f32.mrf.mxu0
  %v2836 = vadd.f32 %v2795, %v2835
  %v2837 = vpop.f32.mrf.mxu0
  %v2838 = vadd.f32 %v2797, %v2837
  %v2839 = vpop.f32.mrf.mxu0
  %v2840 = vpop.f32.mrf.mxu0
  %2841 = vdwg.mxu0
  %v2842 = vmax.f32 %v2836, 0.0
  %v2843 = vmax.f32 %v2838, 0.0
  %v2844 = vpack.c.bf16 %v2842, %v2842
  %v2845 = vpack.c.bf16 %v2843, %v2843
  %v2846 = vpack.i.b16 %v1033, %v1008
  %v2847 = vpack.i.b16 %v1083, %v1058
  %v2848 = vpack.i.b16 %v1133, %v1108
  %v2849 = vpack.i.b16 %v1183, %v1158
  %v2850 = vcombine.low %v2846, %v2847
  %v2851 = vcombine.low %v2848, %v2849
  %v2853 = vunpack.c.l.s4 1966171168
  %v2854 = vunpack.c.0.s8 %v2853
  %v2855 = vlaneseq
  %v2856 = vshrl.u32 %v2855, 7
  %v2857 = vsub.s32 %v2854, %v2856
  %v2858 = vrot.slane %v2850, %v2857
  %v2860 = vunpack.c.l.s4 1966171168
  %v2861 = vunpack.c.0.s8 %v2860
  %v2862 = vlaneseq
  %v2863 = vshrl.u32 %v2862, 7
  %v2864 = vsub.s32 %v2861, %v2863
  %v2865 = vrot.slane %v2851, %v2864
  %v2866 = vcombine.low %v2858, %v2865
  %v2868 = vunpack.c.l.s4 1966171168
  %v2869 = vunpack.c.0.s8 %v2868
  %v2870 = vlaneseq
  %v2871 = vshrl.u32 %v2870, 7
  %v2872 = vsub.s32 %v2869, %v2871
  %v2873 = vrot.slane %v2866, %v2872
  %v2875 = vpack.i.b16 %v1038, %v1013
  %v2876 = vpack.i.b16 %v1088, %v1063
  %v2877 = vpack.i.b16 %v1138, %v1113
  %v2878 = vpack.i.b16 %v1188, %v1163
  %v2879 = vcombine.low %v2875, %v2876
  %v2880 = vcombine.low %v2877, %v2878
  %v2882 = vunpack.c.l.s4 1966171168
  %v2883 = vunpack.c.0.s8 %v2882
  %v2884 = vlaneseq
  %v2885 = vshrl.u32 %v2884, 7
  %v2886 = vsub.s32 %v2883, %v2885
  %v2887 = vrot.slane %v2879, %v2886
  %v2889 = vunpack.c.l.s4 1966171168
  %v2890 = vunpack.c.0.s8 %v2889
  %v2891 = vlaneseq
  %v2892 = vshrl.u32 %v2891, 7
  %v2893 = vsub.s32 %v2890, %v2892
  %v2894 = vrot.slane %v2880, %v2893
  %v2895 = vcombine.low %v2887, %v2894
  %v2897 = vunpack.c.l.s4 1966171168
  %v2898 = vunpack.c.0.s8 %v2897
  %v2899 = vlaneseq
  %v2900 = vshrl.u32 %v2899, 7
  %v2901 = vsub.s32 %v2898, %v2900
  %v2902 = vrot.slane %v2895, %v2901
  %v2904 = vpack.i.b16 %v1043, %v1018
  %v2905 = vpack.i.b16 %v1093, %v1068
  %v2906 = vpack.i.b16 %v1143, %v1118
  %v2907 = vpack.i.b16 %v1193, %v1168
  %v2908 = vcombine.low %v2904, %v2905
  %v2909 = vcombine.low %v2906, %v2907
  %v2911 = vunpack.c.l.s4 1966171168
  %v2912 = vunpack.c.0.s8 %v2911
  %v2913 = vlaneseq
  %v2914 = vshrl.u32 %v2913, 7
  %v2915 = vsub.s32 %v2912, %v2914
  %v2916 = vrot.slane %v2908, %v2915
  %v2918 = vunpack.c.l.s4 1966171168
  %v2919 = vunpack.c.0.s8 %v2918
  %v2920 = vlaneseq
  %v2921 = vshrl.u32 %v2920, 7
  %v2922 = vsub.s32 %v2919, %v2921
  %v2923 = vrot.slane %v2909, %v2922
  %v2924 = vcombine.low %v2916, %v2923
  %v2926 = vunpack.c.l.s4 1966171168
  %v2927 = vunpack.c.0.s8 %v2926
  %v2928 = vlaneseq
  %v2929 = vshrl.u32 %v2928, 7
  %v2930 = vsub.s32 %v2927, %v2929
  %v2931 = vrot.slane %v2924, %v2930
  %2933 = vmatprep.subr.bf16.mxu0 %v2068
  %2934 = vmatpush1.bf16.msra.mxu0 %v2067
  %2935 = vmatprep.subr.bf16.mxu0 %v2066
  %2936 = vmatpush1.bf16.msra.mxu0 %v2065
  %2937 = vmatprep.subr.bf16.mxu0 %v2064
  %2938 = vmatpush1.bf16.msra.mxu0 %v2063
  %2939 = vmatprep.subr.bf16.mxu0 %v2062
  %2940 = vmatpush1.bf16.msra.mxu0 %v2061
  %2941 = vmatprep.subr.bf16.mxu0 %v2060
  %2942 = vmatpush1.bf16.msra.mxu0 %v2059
  %2943 = vmatprep.subr.bf16.mxu0 %v2058
  %2944 = vmatpush1.bf16.msra.mxu0 %v2057
  %2945 = vmatprep.subr.bf16.mxu0 %v2056
  %2946 = vmatpush1.bf16.msra.mxu0 %v2055
  %2947 = vmatprep.subr.bf16.mxu0 %v2054
  %2948 = vmatpush1.bf16.msra.mxu0 %v2053
  %2949 = vmatprep.subr.bf16.mxu0 %v2084
  %2950 = vmatpush2.bf16.msra.mxu0 %v2083
  %2951 = vmatprep.subr.bf16.mxu0 %v2082
  %2952 = vmatpush2.bf16.msra.mxu0 %v2081
  %2953 = vmatprep.subr.bf16.mxu0 %v2080
  %2954 = vmatpush2.bf16.msra.mxu0 %v2079
  %2955 = vmatprep.subr.bf16.mxu0 %v2078
  %2956 = vmatpush2.bf16.msra.mxu0 %v2077
  %2957 = vmatprep.subr.bf16.mxu0 %v2076
  %2958 = vmatpush2.bf16.msra.mxu0 %v2075
  %2959 = vmatprep.subr.bf16.mxu0 %v2074
  %2960 = vmatpush2.bf16.msra.mxu0 %v2073
  %2961 = vmatprep.subr.bf16.mxu0 %v2072
  %2962 = vmatpush2.bf16.msra.mxu0 %v2071
  %2963 = vmatprep.subr.bf16.mxu0 %v2070
  %2964 = vmatpush2.bf16.msra.mxu0 %v2069
  %2965 = vmatprep.mubr.bf16.mxu0 %v2577
  %2966 = vmatmul.mubr.bf16.gmra.mxu0 %v1289
  %v2967 = vpop.f32.mrf.mxu0
  %v2968 = vadd.f32 %v1614, %v2967
  %v2969 = vpop.f32.mrf.mxu0
  %v2970 = vadd.f32 %v1618, %v2969
  %v2971 = vpop.f32.mrf.mxu0
  %v2972 = vpop.f32.mrf.mxu0
  %2973 = vdwg.mxu0
  %2974 = vmatprep.subr.bf16.mxu0 %v2100
  %2975 = vmatpush1.bf16.msra.mxu0 %v2099
  %2976 = vmatprep.subr.bf16.mxu0 %v2098
  %2977 = vmatpush1.bf16.msra.mxu0 %v2097
  %2978 = vmatprep.subr.bf16.mxu0 %v2096
  %2979 = vmatpush1.bf16.msra.mxu0 %v2095
  %2980 = vmatprep.subr.bf16.mxu0 %v2094
  %2981 = vmatpush1.bf16.msra.mxu0 %v2093
  %2982 = vmatprep.subr.bf16.mxu0 %v2092
  %2983 = vmatpush1.bf16.msra.mxu0 %v2091
  %2984 = vmatprep.subr.bf16.mxu0 %v2090
  %2985 = vmatpush1.bf16.msra.mxu0 %v2089
  %2986 = vmatprep.subr.bf16.mxu0 %v2088
  %2987 = vmatpush1.bf16.msra.mxu0 %v2087
  %2988 = vmatprep.subr.bf16.mxu0 %v2086
  %2989 = vmatpush1.bf16.msra.mxu0 %v2085
  %2990 = vmatprep.subr.bf16.mxu0 %v2116
  %2991 = vmatpush2.bf16.msra.mxu0 %v2115
  %2992 = vmatprep.subr.bf16.mxu0 %v2114
  %2993 = vmatpush2.bf16.msra.mxu0 %v2113
  %2994 = vmatprep.subr.bf16.mxu0 %v2112
  %2995 = vmatpush2.bf16.msra.mxu0 %v2111
  %2996 = vmatprep.subr.bf16.mxu0 %v2110
  %2997 = vmatpush2.bf16.msra.mxu0 %v2109
  %2998 = vmatprep.subr.bf16.mxu0 %v2108
  %2999 = vmatpush2.bf16.msra.mxu0 %v2107
  %3000 = vmatprep.subr.bf16.mxu0 %v2106
  %3001 = vmatpush2.bf16.msra.mxu0 %v2105
  %3002 = vmatprep.subr.bf16.mxu0 %v2104
  %3003 = vmatpush2.bf16.msra.mxu0 %v2103
  %3004 = vmatprep.subr.bf16.mxu0 %v2102
  %3005 = vmatpush2.bf16.msra.mxu0 %v2101
  %3006 = vmatprep.mubr.bf16.mxu0 %v1376
  %3007 = vmatmul.mubr.bf16.gmra.mxu0 %v2873
  %v3008 = vpop.f32.mrf.mxu0
  %v3009 = vadd.f32 %v2968, %v3008
  %v3010 = vpop.f32.mrf.mxu0
  %v3011 = vadd.f32 %v2970, %v3010
  %v3012 = vpop.f32.mrf.mxu0
  %v3013 = vpop.f32.mrf.mxu0
  %3014 = vdwg.mxu0
  %3015 = vmatprep.subr.bf16.mxu0 %v2132
  %3016 = vmatpush1.bf16.msra.mxu0 %v2131
  %3017 = vmatprep.subr.bf16.mxu0 %v2130
  %3018 = vmatpush1.bf16.msra.mxu0 %v2129
  %3019 = vmatprep.subr.bf16.mxu0 %v2128
  %3020 = vmatpush1.bf16.msra.mxu0 %v2127
  %3021 = vmatprep.subr.bf16.mxu0 %v2126
  %3022 = vmatpush1.bf16.msra.mxu0 %v2125
  %3023 = vmatprep.subr.bf16.mxu0 %v2124
  %3024 = vmatpush1.bf16.msra.mxu0 %v2123
  %3025 = vmatprep.subr.bf16.mxu0 %v2122
  %3026 = vmatpush1.bf16.msra.mxu0 %v2121
  %3027 = vmatprep.subr.bf16.mxu0 %v2120
  %3028 = vmatpush1.bf16.msra.mxu0 %v2119
  %3029 = vmatprep.subr.bf16.mxu0 %v2118
  %3030 = vmatpush1.bf16.msra.mxu0 %v2117
  %3031 = vmatprep.subr.bf16.mxu0 %v2148
  %3032 = vmatpush2.bf16.msra.mxu0 %v2147
  %3033 = vmatprep.subr.bf16.mxu0 %v2146
  %3034 = vmatpush2.bf16.msra.mxu0 %v2145
  %3035 = vmatprep.subr.bf16.mxu0 %v2144
  %3036 = vmatpush2.bf16.msra.mxu0 %v2143
  %3037 = vmatprep.subr.bf16.mxu0 %v2142
  %3038 = vmatpush2.bf16.msra.mxu0 %v2141
  %3039 = vmatprep.subr.bf16.mxu0 %v2140
  %3040 = vmatpush2.bf16.msra.mxu0 %v2139
  %3041 = vmatprep.subr.bf16.mxu0 %v2138
  %3042 = vmatpush2.bf16.msra.mxu0 %v2137
  %3043 = vmatprep.subr.bf16.mxu0 %v2136
  %3044 = vmatpush2.bf16.msra.mxu0 %v2135
  %3045 = vmatprep.subr.bf16.mxu0 %v2134
  %3046 = vmatpush2.bf16.msra.mxu0 %v2133
  %3047 = vmatprep.mubr.bf16.mxu0 %v2902
  %3048 = vmatmul.mubr.bf16.gmra.mxu0 %v2606
  %v3049 = vpop.f32.mrf.mxu0
  %v3050 = vadd.f32 %v3009, %v3049
  %v3051 = vpop.f32.mrf.mxu0
  %v3052 = vadd.f32 %v3011, %v3051
  %v3053 = vpop.f32.mrf.mxu0
  %v3054 = vpop.f32.mrf.mxu0
  %3055 = vdwg.mxu0
  %3056 = vmatprep.subr.bf16.mxu0 %v2164
  %3057 = vmatpush1.bf16.msra.mxu0 %v2163
  %3058 = vmatprep.subr.bf16.mxu0 %v2162
  %3059 = vmatpush1.bf16.msra.mxu0 %v2161
  %3060 = vmatprep.subr.bf16.mxu0 %v2160
  %3061 = vmatpush1.bf16.msra.mxu0 %v2159
  %3062 = vmatprep.subr.bf16.mxu0 %v2158
  %3063 = vmatpush1.bf16.msra.mxu0 %v2157
  %3064 = vmatprep.subr.bf16.mxu0 %v2156
  %3065 = vmatpush1.bf16.msra.mxu0 %v2155
  %3066 = vmatprep.subr.bf16.mxu0 %v2154
  %3067 = vmatpush1.bf16.msra.mxu0 %v2153
  %3068 = vmatprep.subr.bf16.mxu0 %v2152
  %3069 = vmatpush1.bf16.msra.mxu0 %v2151
  %3070 = vmatprep.subr.bf16.mxu0 %v2150
  %3071 = vmatpush1.bf16.msra.mxu0 %v2149
  %3072 = vmatprep.subr.bf16.mxu0 %v2180
  %3073 = vmatpush2.bf16.msra.mxu0 %v2179
  %3074 = vmatprep.subr.bf16.mxu0 %v2178
  %3075 = vmatpush2.bf16.msra.mxu0 %v2177
  %3076 = vmatprep.subr.bf16.mxu0 %v2176
  %3077 = vmatpush2.bf16.msra.mxu0 %v2175
  %3078 = vmatprep.subr.bf16.mxu0 %v2174
  %3079 = vmatpush2.bf16.msra.mxu0 %v2173
  %3080 = vmatprep.subr.bf16.mxu0 %v2172
  %3081 = vmatpush2.bf16.msra.mxu0 %v2171
  %3082 = vmatprep.subr.bf16.mxu0 %v2170
  %3083 = vmatpush2.bf16.msra.mxu0 %v2169
  %3084 = vmatprep.subr.bf16.mxu0 %v2168
  %3085 = vmatpush2.bf16.msra.mxu0 %v2167
  %3086 = vmatprep.subr.bf16.mxu0 %v2166
  %3087 = vmatpush2.bf16.msra.mxu0 %v2165
  %3088 = vmatprep.mubr.bf16.mxu0 %v2635
  %3089 = vmatmul.mubr.bf16.gmra.mxu0 %v1463
  %v3090 = vpop.f32.mrf.mxu0
  %v3091 = vadd.f32 %v3050, %v3090
  %v3092 = vpop.f32.mrf.mxu0
  %v3093 = vadd.f32 %v3052, %v3092
  %v3094 = vpop.f32.mrf.mxu0
  %v3095 = vpop.f32.mrf.mxu0
  %3096 = vdwg.mxu0
  %3097 = vmatprep.subr.bf16.mxu0 %v2196
  %3098 = vmatpush1.bf16.msra.mxu0 %v2195
  %3099 = vmatprep.subr.bf16.mxu0 %v2194
  %3100 = vmatpush1.bf16.msra.mxu0 %v2193
  %3101 = vmatprep.subr.bf16.mxu0 %v2192
  %3102 = vmatpush1.bf16.msra.mxu0 %v2191
  %3103 = vmatprep.subr.bf16.mxu0 %v2190
  %3104 = vmatpush1.bf16.msra.mxu0 %v2189
  %3105 = vmatprep.subr.bf16.mxu0 %v2188
  %3106 = vmatpush1.bf16.msra.mxu0 %v2187
  %3107 = vmatprep.subr.bf16.mxu0 %v2186
  %3108 = vmatpush1.bf16.msra.mxu0 %v2185
  %3109 = vmatprep.subr.bf16.mxu0 %v2184
  %3110 = vmatpush1.bf16.msra.mxu0 %v2183
  %3111 = vmatprep.subr.bf16.mxu0 %v2182
  %3112 = vmatpush1.bf16.msra.mxu0 %v2181
  %3113 = vmatprep.subr.bf16.mxu0 0
  %3114 = vmatpush2.bf16.msra.mxu0 0
  %3115 = vmatprep.subr.bf16.mxu0 0
  %3116 = vmatpush2.bf16.msra.mxu0 0
  %3117 = vmatprep.subr.bf16.mxu0 0
  %3118 = vmatpush2.bf16.msra.mxu0 0
  %3119 = vmatprep.subr.bf16.mxu0 0
  %3120 = vmatpush2.bf16.msra.mxu0 0
  %3121 = vmatprep.subr.bf16.mxu0 0
  %3122 = vmatpush2.bf16.msra.mxu0 0
  %3123 = vmatprep.subr.bf16.mxu0 0
  %3124 = vmatpush2.bf16.msra.mxu0 0
  %3125 = vmatprep.subr.bf16.mxu0 0
  %3126 = vmatpush2.bf16.msra.mxu0 0
  %3127 = vmatprep.subr.bf16.mxu0 0
  %3128 = vmatpush2.bf16.msra.mxu0 0
  %3129 = vmatprep.mubr.bf16.mxu0 0
  %3130 = vmatmul.mubr.bf16.gmra.mxu0 %v2931
  %v3131 = vpop.f32.mrf.mxu0
  %v3132 = vadd.f32 %v3091, %v3131
  %v3133 = vpop.f32.mrf.mxu0
  %v3134 = vadd.f32 %v3093, %v3133
  %v3135 = vpop.f32.mrf.mxu0
  %v3136 = vpop.f32.mrf.mxu0
  %3137 = vdwg.mxu0
  %v3138 = vmax.f32 %v3132, 0.0
  %v3139 = vmax.f32 %v3134, 0.0
  %v3140 = vpack.c.bf16 %v3138, %v3138
  %v3141 = vpack.c.bf16 %v3139, %v3139
  %v3142 = vpack.i.b16 %v1044, %v1019
  %v3143 = vpack.i.b16 %v1094, %v1069
  %v3144 = vpack.i.b16 %v1144, %v1119
  %v3145 = vpack.i.b16 %v1194, %v1169
  %v3146 = vcombine.low %v3142, %v3143
  %v3147 = vcombine.low %v3144, %v3145
  %v3149 = vunpack.c.l.s4 1966171168
  %v3150 = vunpack.c.0.s8 %v3149
  %v3151 = vlaneseq
  %v3152 = vshrl.u32 %v3151, 7
  %v3153 = vsub.s32 %v3150, %v3152
  %v3154 = vrot.slane %v3146, %v3153
  %v3156 = vunpack.c.l.s4 1966171168
  %v3157 = vunpack.c.0.s8 %v3156
  %v3158 = vlaneseq
  %v3159 = vshrl.u32 %v3158, 7
  %v3160 = vsub.s32 %v3157, %v3159
  %v3161 = vrot.slane %v3147, %v3160
  %v3162 = vcombine.low %v3154, %v3161
  %v3164 = vunpack.c.l.s4 1966171168
  %v3165 = vunpack.c.0.s8 %v3164
  %v3166 = vlaneseq
  %v3167 = vshrl.u32 %v3166, 7
  %v3168 = vsub.s32 %v3165, %v3167
  %v3169 = vrot.slane %v3162, %v3168
  %v3171 = vpack.i.b16 %v1045, %v1020
  %v3172 = vpack.i.b16 %v1095, %v1070
  %v3173 = vpack.i.b16 %v1145, %v1120
  %v3174 = vpack.i.b16 %v1195, %v1170
  %v3175 = vcombine.low %v3171, %v3172
  %v3176 = vcombine.low %v3173, %v3174
  %v3178 = vunpack.c.l.s4 1966171168
  %v3179 = vunpack.c.0.s8 %v3178
  %v3180 = vlaneseq
  %v3181 = vshrl.u32 %v3180, 7
  %v3182 = vsub.s32 %v3179, %v3181
  %v3183 = vrot.slane %v3175, %v3182
  %v3185 = vunpack.c.l.s4 1966171168
  %v3186 = vunpack.c.0.s8 %v3185
  %v3187 = vlaneseq
  %v3188 = vshrl.u32 %v3187, 7
  %v3189 = vsub.s32 %v3186, %v3188
  %v3190 = vrot.slane %v3176, %v3189
  %v3191 = vcombine.low %v3183, %v3190
  %v3193 = vunpack.c.l.s4 1966171168
  %v3194 = vunpack.c.0.s8 %v3193
  %v3195 = vlaneseq
  %v3196 = vshrl.u32 %v3195, 7
  %v3197 = vsub.s32 %v3194, %v3196
  %v3198 = vrot.slane %v3191, %v3197
  %v3200 = vpack.i.b16 %v1046, %v1021
  %v3201 = vpack.i.b16 %v1096, %v1071
  %v3202 = vpack.i.b16 %v1146, %v1121
  %v3203 = vpack.i.b16 %v1196, %v1171
  %v3204 = vcombine.low %v3200, %v3201
  %v3205 = vcombine.low %v3202, %v3203
  %v3207 = vunpack.c.l.s4 1966171168
  %v3208 = vunpack.c.0.s8 %v3207
  %v3209 = vlaneseq
  %v3210 = vshrl.u32 %v3209, 7
  %v3211 = vsub.s32 %v3208, %v3210
  %v3212 = vrot.slane %v3204, %v3211
  %v3214 = vunpack.c.l.s4 1966171168
  %v3215 = vunpack.c.0.s8 %v3214
  %v3216 = vlaneseq
  %v3217 = vshrl.u32 %v3216, 7
  %v3218 = vsub.s32 %v3215, %v3217
  %v3219 = vrot.slane %v3205, %v3218
  %v3220 = vcombine.low %v3212, %v3219
  %v3222 = vunpack.c.l.s4 1966171168
  %v3223 = vunpack.c.0.s8 %v3222
  %v3224 = vlaneseq
  %v3225 = vshrl.u32 %v3224, 7
  %v3226 = vsub.s32 %v3223, %v3225
  %v3227 = vrot.slane %v3220, %v3226
  %3229 = vmatprep.subr.bf16.mxu0 %v2068
  %3230 = vmatpush1.bf16.msra.mxu0 %v2067
  %3231 = vmatprep.subr.bf16.mxu0 %v2066
  %3232 = vmatpush1.bf16.msra.mxu0 %v2065
  %3233 = vmatprep.subr.bf16.mxu0 %v2064
  %3234 = vmatpush1.bf16.msra.mxu0 %v2063
  %3235 = vmatprep.subr.bf16.mxu0 %v2062
  %3236 = vmatpush1.bf16.msra.mxu0 %v2061
  %3237 = vmatprep.subr.bf16.mxu0 %v2060
  %3238 = vmatpush1.bf16.msra.mxu0 %v2059
  %3239 = vmatprep.subr.bf16.mxu0 %v2058
  %3240 = vmatpush1.bf16.msra.mxu0 %v2057
  %3241 = vmatprep.subr.bf16.mxu0 %v2056
  %3242 = vmatpush1.bf16.msra.mxu0 %v2055
  %3243 = vmatprep.subr.bf16.mxu0 %v2054
  %3244 = vmatpush1.bf16.msra.mxu0 %v2053
  %3245 = vmatprep.subr.bf16.mxu0 %v2084
  %3246 = vmatpush2.bf16.msra.mxu0 %v2083
  %3247 = vmatprep.subr.bf16.mxu0 %v2082
  %3248 = vmatpush2.bf16.msra.mxu0 %v2081
  %3249 = vmatprep.subr.bf16.mxu0 %v2080
  %3250 = vmatpush2.bf16.msra.mxu0 %v2079
  %3251 = vmatprep.subr.bf16.mxu0 %v2078
  %3252 = vmatpush2.bf16.msra.mxu0 %v2077
  %3253 = vmatprep.subr.bf16.mxu0 %v2076
  %3254 = vmatpush2.bf16.msra.mxu0 %v2075
  %3255 = vmatprep.subr.bf16.mxu0 %v2074
  %3256 = vmatpush2.bf16.msra.mxu0 %v2073
  %3257 = vmatprep.subr.bf16.mxu0 %v2072
  %3258 = vmatpush2.bf16.msra.mxu0 %v2071
  %3259 = vmatprep.subr.bf16.mxu0 %v2070
  %3260 = vmatpush2.bf16.msra.mxu0 %v2069
  %3261 = vmatprep.mubr.bf16.mxu0 %v1347
  %3262 = vmatmul.mubr.bf16.gmra.mxu0 %v1318
  %v3263 = vpop.f32.mrf.mxu0
  %v3264 = vadd.f32 %v1614, %v3263
  %v3265 = vpop.f32.mrf.mxu0
  %v3266 = vadd.f32 %v1618, %v3265
  %v3267 = vpop.f32.mrf.mxu0
  %v3268 = vpop.f32.mrf.mxu0
  %3269 = vdwg.mxu0
  %3270 = vmatprep.subr.bf16.mxu0 %v2100
  %3271 = vmatpush1.bf16.msra.mxu0 %v2099
  %3272 = vmatprep.subr.bf16.mxu0 %v2098
  %3273 = vmatpush1.bf16.msra.mxu0 %v2097
  %3274 = vmatprep.subr.bf16.mxu0 %v2096
  %3275 = vmatpush1.bf16.msra.mxu0 %v2095
  %3276 = vmatprep.subr.bf16.mxu0 %v2094
  %3277 = vmatpush1.bf16.msra.mxu0 %v2093
  %3278 = vmatprep.subr.bf16.mxu0 %v2092
  %3279 = vmatpush1.bf16.msra.mxu0 %v2091
  %3280 = vmatprep.subr.bf16.mxu0 %v2090
  %3281 = vmatpush1.bf16.msra.mxu0 %v2089
  %3282 = vmatprep.subr.bf16.mxu0 %v2088
  %3283 = vmatpush1.bf16.msra.mxu0 %v2087
  %3284 = vmatprep.subr.bf16.mxu0 %v2086
  %3285 = vmatpush1.bf16.msra.mxu0 %v2085
  %3286 = vmatprep.subr.bf16.mxu0 %v2116
  %3287 = vmatpush2.bf16.msra.mxu0 %v2115
  %3288 = vmatprep.subr.bf16.mxu0 %v2114
  %3289 = vmatpush2.bf16.msra.mxu0 %v2113
  %3290 = vmatprep.subr.bf16.mxu0 %v2112
  %3291 = vmatpush2.bf16.msra.mxu0 %v2111
  %3292 = vmatprep.subr.bf16.mxu0 %v2110
  %3293 = vmatpush2.bf16.msra.mxu0 %v2109
  %3294 = vmatprep.subr.bf16.mxu0 %v2108
  %3295 = vmatpush2.bf16.msra.mxu0 %v2107
  %3296 = vmatprep.subr.bf16.mxu0 %v2106
  %3297 = vmatpush2.bf16.msra.mxu0 %v2105
  %3298 = vmatprep.subr.bf16.mxu0 %v2104
  %3299 = vmatpush2.bf16.msra.mxu0 %v2103
  %3300 = vmatprep.subr.bf16.mxu0 %v2102
  %3301 = vmatpush2.bf16.msra.mxu0 %v2101
  %3302 = vmatprep.mubr.bf16.mxu0 %v1405
  %3303 = vmatmul.mubr.bf16.gmra.mxu0 %v1376
  %v3304 = vpop.f32.mrf.mxu0
  %v3305 = vadd.f32 %v3264, %v3304
  %v3306 = vpop.f32.mrf.mxu0
  %v3307 = vadd.f32 %v3266, %v3306
  %v3308 = vpop.f32.mrf.mxu0
  %v3309 = vpop.f32.mrf.mxu0
  %3310 = vdwg.mxu0
  %3311 = vmatprep.subr.bf16.mxu0 %v2132
  %3312 = vmatpush1.bf16.msra.mxu0 %v2131
  %3313 = vmatprep.subr.bf16.mxu0 %v2130
  %3314 = vmatpush1.bf16.msra.mxu0 %v2129
  %3315 = vmatprep.subr.bf16.mxu0 %v2128
  %3316 = vmatpush1.bf16.msra.mxu0 %v2127
  %3317 = vmatprep.subr.bf16.mxu0 %v2126
  %3318 = vmatpush1.bf16.msra.mxu0 %v2125
  %3319 = vmatprep.subr.bf16.mxu0 %v2124
  %3320 = vmatpush1.bf16.msra.mxu0 %v2123
  %3321 = vmatprep.subr.bf16.mxu0 %v2122
  %3322 = vmatpush1.bf16.msra.mxu0 %v2121
  %3323 = vmatprep.subr.bf16.mxu0 %v2120
  %3324 = vmatpush1.bf16.msra.mxu0 %v2119
  %3325 = vmatprep.subr.bf16.mxu0 %v2118
  %3326 = vmatpush1.bf16.msra.mxu0 %v2117
  %3327 = vmatprep.subr.bf16.mxu0 %v2148
  %3328 = vmatpush2.bf16.msra.mxu0 %v2147
  %3329 = vmatprep.subr.bf16.mxu0 %v2146
  %3330 = vmatpush2.bf16.msra.mxu0 %v2145
  %3331 = vmatprep.subr.bf16.mxu0 %v2144
  %3332 = vmatpush2.bf16.msra.mxu0 %v2143
  %3333 = vmatprep.subr.bf16.mxu0 %v2142
  %3334 = vmatpush2.bf16.msra.mxu0 %v2141
  %3335 = vmatprep.subr.bf16.mxu0 %v2140
  %3336 = vmatpush2.bf16.msra.mxu0 %v2139
  %3337 = vmatprep.subr.bf16.mxu0 %v2138
  %3338 = vmatpush2.bf16.msra.mxu0 %v2137
  %3339 = vmatprep.subr.bf16.mxu0 %v2136
  %3340 = vmatpush2.bf16.msra.mxu0 %v2135
  %3341 = vmatprep.subr.bf16.mxu0 %v2134
  %3342 = vmatpush2.bf16.msra.mxu0 %v2133
  %3343 = vmatprep.mubr.bf16.mxu0 %v1463
  %3344 = vmatmul.mubr.bf16.gmra.mxu0 %v1434
  %v3345 = vpop.f32.mrf.mxu0
  %v3346 = vadd.f32 %v3305, %v3345
  %v3347 = vpop.f32.mrf.mxu0
  %v3348 = vadd.f32 %v3307, %v3347
  %v3349 = vpop.f32.mrf.mxu0
  %v3350 = vpop.f32.mrf.mxu0
  %3351 = vdwg.mxu0
  %3352 = vmatprep.subr.bf16.mxu0 %v2164
  %3353 = vmatpush1.bf16.msra.mxu0 %v2163
  %3354 = vmatprep.subr.bf16.mxu0 %v2162
  %3355 = vmatpush1.bf16.msra.mxu0 %v2161
  %3356 = vmatprep.subr.bf16.mxu0 %v2160
  %3357 = vmatpush1.bf16.msra.mxu0 %v2159
  %3358 = vmatprep.subr.bf16.mxu0 %v2158
  %3359 = vmatpush1.bf16.msra.mxu0 %v2157
  %3360 = vmatprep.subr.bf16.mxu0 %v2156
  %3361 = vmatpush1.bf16.msra.mxu0 %v2155
  %3362 = vmatprep.subr.bf16.mxu0 %v2154
  %3363 = vmatpush1.bf16.msra.mxu0 %v2153
  %3364 = vmatprep.subr.bf16.mxu0 %v2152
  %3365 = vmatpush1.bf16.msra.mxu0 %v2151
  %3366 = vmatprep.subr.bf16.mxu0 %v2150
  %3367 = vmatpush1.bf16.msra.mxu0 %v2149
  %3368 = vmatprep.subr.bf16.mxu0 %v2180
  %3369 = vmatpush2.bf16.msra.mxu0 %v2179
  %3370 = vmatprep.subr.bf16.mxu0 %v2178
  %3371 = vmatpush2.bf16.msra.mxu0 %v2177
  %3372 = vmatprep.subr.bf16.mxu0 %v2176
  %3373 = vmatpush2.bf16.msra.mxu0 %v2175
  %3374 = vmatprep.subr.bf16.mxu0 %v2174
  %3375 = vmatpush2.bf16.msra.mxu0 %v2173
  %3376 = vmatprep.subr.bf16.mxu0 %v2172
  %3377 = vmatpush2.bf16.msra.mxu0 %v2171
  %3378 = vmatprep.subr.bf16.mxu0 %v2170
  %3379 = vmatpush2.bf16.msra.mxu0 %v2169
  %3380 = vmatprep.subr.bf16.mxu0 %v2168
  %3381 = vmatpush2.bf16.msra.mxu0 %v2167
  %3382 = vmatprep.subr.bf16.mxu0 %v2166
  %3383 = vmatpush2.bf16.msra.mxu0 %v2165
  %3384 = vmatprep.mubr.bf16.mxu0 %v3198
  %3385 = vmatmul.mubr.bf16.gmra.mxu0 %v3169
  %v3386 = vpop.f32.mrf.mxu0
  %v3387 = vadd.f32 %v3346, %v3386
  %v3388 = vpop.f32.mrf.mxu0
  %v3389 = vadd.f32 %v3348, %v3388
  %v3390 = vpop.f32.mrf.mxu0
  %v3391 = vpop.f32.mrf.mxu0
  %3392 = vdwg.mxu0
  %3393 = vmatprep.subr.bf16.mxu0 %v2196
  %3394 = vmatpush1.bf16.msra.mxu0 %v2195
  %3395 = vmatprep.subr.bf16.mxu0 %v2194
  %3396 = vmatpush1.bf16.msra.mxu0 %v2193
  %3397 = vmatprep.subr.bf16.mxu0 %v2192
  %3398 = vmatpush1.bf16.msra.mxu0 %v2191
  %3399 = vmatprep.subr.bf16.mxu0 %v2190
  %3400 = vmatpush1.bf16.msra.mxu0 %v2189
  %3401 = vmatprep.subr.bf16.mxu0 %v2188
  %3402 = vmatpush1.bf16.msra.mxu0 %v2187
  %3403 = vmatprep.subr.bf16.mxu0 %v2186
  %3404 = vmatpush1.bf16.msra.mxu0 %v2185
  %3405 = vmatprep.subr.bf16.mxu0 %v2184
  %3406 = vmatpush1.bf16.msra.mxu0 %v2183
  %3407 = vmatprep.subr.bf16.mxu0 %v2182
  %3408 = vmatpush1.bf16.msra.mxu0 %v2181
  %3409 = vmatprep.subr.bf16.mxu0 0
  %3410 = vmatpush2.bf16.msra.mxu0 0
  %3411 = vmatprep.subr.bf16.mxu0 0
  %3412 = vmatpush2.bf16.msra.mxu0 0
  %3413 = vmatprep.subr.bf16.mxu0 0
  %3414 = vmatpush2.bf16.msra.mxu0 0
  %3415 = vmatprep.subr.bf16.mxu0 0
  %3416 = vmatpush2.bf16.msra.mxu0 0
  %3417 = vmatprep.subr.bf16.mxu0 0
  %3418 = vmatpush2.bf16.msra.mxu0 0
  %3419 = vmatprep.subr.bf16.mxu0 0
  %3420 = vmatpush2.bf16.msra.mxu0 0
  %3421 = vmatprep.subr.bf16.mxu0 0
  %3422 = vmatpush2.bf16.msra.mxu0 0
  %3423 = vmatprep.subr.bf16.mxu0 0
  %3424 = vmatpush2.bf16.msra.mxu0 0
  %3425 = vmatprep.mubr.bf16.mxu0 0
  %3426 = vmatmul.mubr.bf16.gmra.mxu0 %v3227
  %v3427 = vpop.f32.mrf.mxu0
  %v3428 = vadd.f32 %v3387, %v3427
  %v3429 = vpop.f32.mrf.mxu0
  %v3430 = vadd.f32 %v3389, %v3429
  %v3431 = vpop.f32.mrf.mxu0
  %v3432 = vpop.f32.mrf.mxu0
  %3433 = vdwg.mxu0
  %v3434 = vmax.f32 %v3428, 0.0
  %v3435 = vmax.f32 %v3430, 0.0
  %v3436 = vpack.c.bf16 %v3434, %v3434
  %v3437 = vpack.c.bf16 %v3435, %v3435
  %v3438 = vpack.i.b16 %v1047, %v1022
  %v3439 = vpack.i.b16 %v1097, %v1072
  %v3440 = vpack.i.b16 %v1147, %v1122
  %v3441 = vpack.i.b16 %v1197, %v1172
  %v3442 = vcombine.low %v3438, %v3439
  %v3443 = vcombine.low %v3440, %v3441
  %v3445 = vunpack.c.l.s4 1966171168
  %v3446 = vunpack.c.0.s8 %v3445
  %v3447 = vlaneseq
  %v3448 = vshrl.u32 %v3447, 7
  %v3449 = vsub.s32 %v3446, %v3448
  %v3450 = vrot.slane %v3442, %v3449
  %v3452 = vunpack.c.l.s4 1966171168
  %v3453 = vunpack.c.0.s8 %v3452
  %v3454 = vlaneseq
  %v3455 = vshrl.u32 %v3454, 7
  %v3456 = vsub.s32 %v3453, %v3455
  %v3457 = vrot.slane %v3443, %v3456
  %v3458 = vcombine.low %v3450, %v3457
  %v3460 = vunpack.c.l.s4 1966171168
  %v3461 = vunpack.c.0.s8 %v3460
  %v3462 = vlaneseq
  %v3463 = vshrl.u32 %v3462, 7
  %v3464 = vsub.s32 %v3461, %v3463
  %v3465 = vrot.slane %v3458, %v3464
  %3467 = vmatprep.subr.bf16.mxu0 %v2068
  %3468 = vmatpush1.bf16.msra.mxu0 %v2067
  %3469 = vmatprep.subr.bf16.mxu0 %v2066
  %3470 = vmatpush1.bf16.msra.mxu0 %v2065
  %3471 = vmatprep.subr.bf16.mxu0 %v2064
  %3472 = vmatpush1.bf16.msra.mxu0 %v2063
  %3473 = vmatprep.subr.bf16.mxu0 %v2062
  %3474 = vmatpush1.bf16.msra.mxu0 %v2061
  %3475 = vmatprep.subr.bf16.mxu0 %v2060
  %3476 = vmatpush1.bf16.msra.mxu0 %v2059
  %3477 = vmatprep.subr.bf16.mxu0 %v2058
  %3478 = vmatpush1.bf16.msra.mxu0 %v2057
  %3479 = vmatprep.subr.bf16.mxu0 %v2056
  %3480 = vmatpush1.bf16.msra.mxu0 %v2055
  %3481 = vmatprep.subr.bf16.mxu0 %v2054
  %3482 = vmatpush1.bf16.msra.mxu0 %v2053
  %3483 = vmatprep.subr.bf16.mxu0 %v2084
  %3484 = vmatpush2.bf16.msra.mxu0 %v2083
  %3485 = vmatprep.subr.bf16.mxu0 %v2082
  %3486 = vmatpush2.bf16.msra.mxu0 %v2081
  %3487 = vmatprep.subr.bf16.mxu0 %v2080
  %3488 = vmatpush2.bf16.msra.mxu0 %v2079
  %3489 = vmatprep.subr.bf16.mxu0 %v2078
  %3490 = vmatpush2.bf16.msra.mxu0 %v2077
  %3491 = vmatprep.subr.bf16.mxu0 %v2076
  %3492 = vmatpush2.bf16.msra.mxu0 %v2075
  %3493 = vmatprep.subr.bf16.mxu0 %v2074
  %3494 = vmatpush2.bf16.msra.mxu0 %v2073
  %3495 = vmatprep.subr.bf16.mxu0 %v2072
  %3496 = vmatpush2.bf16.msra.mxu0 %v2071
  %3497 = vmatprep.subr.bf16.mxu0 %v2070
  %3498 = vmatpush2.bf16.msra.mxu0 %v2069
  %3499 = vmatprep.mubr.bf16.mxu0 %v1376
  %3500 = vmatmul.mubr.bf16.gmra.mxu0 %v1347
  %v3501 = vpop.f32.mrf.mxu0
  %v3502 = vadd.f32 %v1614, %v3501
  %v3503 = vpop.f32.mrf.mxu0
  %v3504 = vadd.f32 %v1618, %v3503
  %v3505 = vpop.f32.mrf.mxu0
  %v3506 = vpop.f32.mrf.mxu0
  %3507 = vdwg.mxu0
  %3508 = vmatprep.subr.bf16.mxu0 %v2100
  %3509 = vmatpush1.bf16.msra.mxu0 %v2099
  %3510 = vmatprep.subr.bf16.mxu0 %v2098
  %3511 = vmatpush1.bf16.msra.mxu0 %v2097
  %3512 = vmatprep.subr.bf16.mxu0 %v2096
  %3513 = vmatpush1.bf16.msra.mxu0 %v2095
  %3514 = vmatprep.subr.bf16.mxu0 %v2094
  %3515 = vmatpush1.bf16.msra.mxu0 %v2093
  %3516 = vmatprep.subr.bf16.mxu0 %v2092
  %3517 = vmatpush1.bf16.msra.mxu0 %v2091
  %3518 = vmatprep.subr.bf16.mxu0 %v2090
  %3519 = vmatpush1.bf16.msra.mxu0 %v2089
  %3520 = vmatprep.subr.bf16.mxu0 %v2088
  %3521 = vmatpush1.bf16.msra.mxu0 %v2087
  %3522 = vmatprep.subr.bf16.mxu0 %v2086
  %3523 = vmatpush1.bf16.msra.mxu0 %v2085
  %3524 = vmatprep.subr.bf16.mxu0 %v2116
  %3525 = vmatpush2.bf16.msra.mxu0 %v2115
  %3526 = vmatprep.subr.bf16.mxu0 %v2114
  %3527 = vmatpush2.bf16.msra.mxu0 %v2113
  %3528 = vmatprep.subr.bf16.mxu0 %v2112
  %3529 = vmatpush2.bf16.msra.mxu0 %v2111
  %3530 = vmatprep.subr.bf16.mxu0 %v2110
  %3531 = vmatpush2.bf16.msra.mxu0 %v2109
  %3532 = vmatprep.subr.bf16.mxu0 %v2108
  %3533 = vmatpush2.bf16.msra.mxu0 %v2107
  %3534 = vmatprep.subr.bf16.mxu0 %v2106
  %3535 = vmatpush2.bf16.msra.mxu0 %v2105
  %3536 = vmatprep.subr.bf16.mxu0 %v2104
  %3537 = vmatpush2.bf16.msra.mxu0 %v2103
  %3538 = vmatprep.subr.bf16.mxu0 %v2102
  %3539 = vmatpush2.bf16.msra.mxu0 %v2101
  %3540 = vmatprep.mubr.bf16.mxu0 %v1434
  %3541 = vmatmul.mubr.bf16.gmra.mxu0 %v2606
  %v3542 = vpop.f32.mrf.mxu0
  %v3543 = vadd.f32 %v3502, %v3542
  %v3544 = vpop.f32.mrf.mxu0
  %v3545 = vadd.f32 %v3504, %v3544
  %v3546 = vpop.f32.mrf.mxu0
  %v3547 = vpop.f32.mrf.mxu0
  %3548 = vdwg.mxu0
  %3549 = vmatprep.subr.bf16.mxu0 %v2132
  %3550 = vmatpush1.bf16.msra.mxu0 %v2131
  %3551 = vmatprep.subr.bf16.mxu0 %v2130
  %3552 = vmatpush1.bf16.msra.mxu0 %v2129
  %3553 = vmatprep.subr.bf16.mxu0 %v2128
  %3554 = vmatpush1.bf16.msra.mxu0 %v2127
  %3555 = vmatprep.subr.bf16.mxu0 %v2126
  %3556 = vmatpush1.bf16.msra.mxu0 %v2125
  %3557 = vmatprep.subr.bf16.mxu0 %v2124
  %3558 = vmatpush1.bf16.msra.mxu0 %v2123
  %3559 = vmatprep.subr.bf16.mxu0 %v2122
  %3560 = vmatpush1.bf16.msra.mxu0 %v2121
  %3561 = vmatprep.subr.bf16.mxu0 %v2120
  %3562 = vmatpush1.bf16.msra.mxu0 %v2119
  %3563 = vmatprep.subr.bf16.mxu0 %v2118
  %3564 = vmatpush1.bf16.msra.mxu0 %v2117
  %3565 = vmatprep.subr.bf16.mxu0 %v2148
  %3566 = vmatpush2.bf16.msra.mxu0 %v2147
  %3567 = vmatprep.subr.bf16.mxu0 %v2146
  %3568 = vmatpush2.bf16.msra.mxu0 %v2145
  %3569 = vmatprep.subr.bf16.mxu0 %v2144
  %3570 = vmatpush2.bf16.msra.mxu0 %v2143
  %3571 = vmatprep.subr.bf16.mxu0 %v2142
  %3572 = vmatpush2.bf16.msra.mxu0 %v2141
  %3573 = vmatprep.subr.bf16.mxu0 %v2140
  %3574 = vmatpush2.bf16.msra.mxu0 %v2139
  %3575 = vmatprep.subr.bf16.mxu0 %v2138
  %3576 = vmatpush2.bf16.msra.mxu0 %v2137
  %3577 = vmatprep.subr.bf16.mxu0 %v2136
  %3578 = vmatpush2.bf16.msra.mxu0 %v2135
  %3579 = vmatprep.subr.bf16.mxu0 %v2134
  %3580 = vmatpush2.bf16.msra.mxu0 %v2133
  %3581 = vmatprep.mubr.bf16.mxu0 %v2635
  %3582 = vmatmul.mubr.bf16.gmra.mxu0 %v1463
  %v3583 = vpop.f32.mrf.mxu0
  %v3584 = vadd.f32 %v3543, %v3583
  %v3585 = vpop.f32.mrf.mxu0
  %v3586 = vadd.f32 %v3545, %v3585
  %v3587 = vpop.f32.mrf.mxu0
  %v3588 = vpop.f32.mrf.mxu0
  %3589 = vdwg.mxu0
  %3590 = vmatprep.subr.bf16.mxu0 %v2164
  %3591 = vmatpush1.bf16.msra.mxu0 %v2163
  %3592 = vmatprep.subr.bf16.mxu0 %v2162
  %3593 = vmatpush1.bf16.msra.mxu0 %v2161
  %3594 = vmatprep.subr.bf16.mxu0 %v2160
  %3595 = vmatpush1.bf16.msra.mxu0 %v2159
  %3596 = vmatprep.subr.bf16.mxu0 %v2158
  %3597 = vmatpush1.bf16.msra.mxu0 %v2157
  %3598 = vmatprep.subr.bf16.mxu0 %v2156
  %3599 = vmatpush1.bf16.msra.mxu0 %v2155
  %3600 = vmatprep.subr.bf16.mxu0 %v2154
  %3601 = vmatpush1.bf16.msra.mxu0 %v2153
  %3602 = vmatprep.subr.bf16.mxu0 %v2152
  %3603 = vmatpush1.bf16.msra.mxu0 %v2151
  %3604 = vmatprep.subr.bf16.mxu0 %v2150
  %3605 = vmatpush1.bf16.msra.mxu0 %v2149
  %3606 = vmatprep.subr.bf16.mxu0 %v2180
  %3607 = vmatpush2.bf16.msra.mxu0 %v2179
  %3608 = vmatprep.subr.bf16.mxu0 %v2178
  %3609 = vmatpush2.bf16.msra.mxu0 %v2177
  %3610 = vmatprep.subr.bf16.mxu0 %v2176
  %3611 = vmatpush2.bf16.msra.mxu0 %v2175
  %3612 = vmatprep.subr.bf16.mxu0 %v2174
  %3613 = vmatpush2.bf16.msra.mxu0 %v2173
  %3614 = vmatprep.subr.bf16.mxu0 %v2172
  %3615 = vmatpush2.bf16.msra.mxu0 %v2171
  %3616 = vmatprep.subr.bf16.mxu0 %v2170
  %3617 = vmatpush2.bf16.msra.mxu0 %v2169
  %3618 = vmatprep.subr.bf16.mxu0 %v2168
  %3619 = vmatpush2.bf16.msra.mxu0 %v2167
  %3620 = vmatprep.subr.bf16.mxu0 %v2166
  %3621 = vmatpush2.bf16.msra.mxu0 %v2165
  %3622 = vmatprep.mubr.bf16.mxu0 %v3227
  %3623 = vmatmul.mubr.bf16.gmra.mxu0 %v3198
  %v3624 = vpop.f32.mrf.mxu0
  %v3625 = vadd.f32 %v3584, %v3624
  %v3626 = vpop.f32.mrf.mxu0
  %v3627 = vadd.f32 %v3586, %v3626
  %v3628 = vpop.f32.mrf.mxu0
  %v3629 = vpop.f32.mrf.mxu0
  %3630 = vdwg.mxu0
  %3631 = vmatprep.subr.bf16.mxu0 %v2196
  %3632 = vmatpush1.bf16.msra.mxu0 %v2195
  %3633 = vmatprep.subr.bf16.mxu0 %v2194
  %3634 = vmatpush1.bf16.msra.mxu0 %v2193
  %3635 = vmatprep.subr.bf16.mxu0 %v2192
  %3636 = vmatpush1.bf16.msra.mxu0 %v2191
  %3637 = vmatprep.subr.bf16.mxu0 %v2190
  %3638 = vmatpush1.bf16.msra.mxu0 %v2189
  %3639 = vmatprep.subr.bf16.mxu0 %v2188
  %3640 = vmatpush1.bf16.msra.mxu0 %v2187
  %3641 = vmatprep.subr.bf16.mxu0 %v2186
  %3642 = vmatpush1.bf16.msra.mxu0 %v2185
  %3643 = vmatprep.subr.bf16.mxu0 %v2184
  %3644 = vmatpush1.bf16.msra.mxu0 %v2183
  %3645 = vmatprep.subr.bf16.mxu0 %v2182
  %3646 = vmatpush1.bf16.msra.mxu0 %v2181
  %3647 = vmatprep.subr.bf16.mxu0 0
  %3648 = vmatpush2.bf16.msra.mxu0 0
  %3649 = vmatprep.subr.bf16.mxu0 0
  %3650 = vmatpush2.bf16.msra.mxu0 0
  %3651 = vmatprep.subr.bf16.mxu0 0
  %3652 = vmatpush2.bf16.msra.mxu0 0
  %3653 = vmatprep.subr.bf16.mxu0 0
  %3654 = vmatpush2.bf16.msra.mxu0 0
  %3655 = vmatprep.subr.bf16.mxu0 0
  %3656 = vmatpush2.bf16.msra.mxu0 0
  %3657 = vmatprep.subr.bf16.mxu0 0
  %3658 = vmatpush2.bf16.msra.mxu0 0
  %3659 = vmatprep.subr.bf16.mxu0 0
  %3660 = vmatpush2.bf16.msra.mxu0 0
  %3661 = vmatprep.subr.bf16.mxu0 0
  %3662 = vmatpush2.bf16.msra.mxu0 0
  %3663 = vmatprep.mubr.bf16.mxu0 0
  %3664 = vmatmul.mubr.bf16.gmra.mxu0 %v3465
  %v3665 = vpop.f32.mrf.mxu0
  %v3666 = vadd.f32 %v3625, %v3665
  %v3667 = vpop.f32.mrf.mxu0
  %v3668 = vadd.f32 %v3627, %v3667
  %v3669 = vpop.f32.mrf.mxu0
  %v3670 = vpop.f32.mrf.mxu0
  %3671 = vdwg.mxu0
  %v3672 = vmax.f32 %v3666, 0.0
  %v3673 = vmax.f32 %v3668, 0.0
  %v3674 = vpack.c.bf16 %v3672, %v3672
  %v3675 = vpack.c.bf16 %v3673, %v3673
  %v3676 = vpack.i.b16 %v1048, %v1023
  %v3677 = vpack.i.b16 %v1098, %v1073
  %v3678 = vpack.i.b16 %v1148, %v1123
  %v3679 = vpack.i.b16 %v1198, %v1173
  %v3680 = vcombine.low %v3676, %v3677
  %v3681 = vcombine.low %v3678, %v3679
  %v3683 = vunpack.c.l.s4 1966171168
  %v3684 = vunpack.c.0.s8 %v3683
  %v3685 = vlaneseq
  %v3686 = vshrl.u32 %v3685, 7
  %v3687 = vsub.s32 %v3684, %v3686
  %v3688 = vrot.slane %v3680, %v3687
  %v3690 = vunpack.c.l.s4 1966171168
  %v3691 = vunpack.c.0.s8 %v3690
  %v3692 = vlaneseq
  %v3693 = vshrl.u32 %v3692, 7
  %v3694 = vsub.s32 %v3691, %v3693
  %v3695 = vrot.slane %v3681, %v3694
  %v3696 = vcombine.low %v3688, %v3695
  %v3698 = vunpack.c.l.s4 1966171168
  %v3699 = vunpack.c.0.s8 %v3698
  %v3700 = vlaneseq
  %v3701 = vshrl.u32 %v3700, 7
  %v3702 = vsub.s32 %v3699, %v3701
  %v3703 = vrot.slane %v3696, %v3702
  %3705 = vmatprep.subr.bf16.mxu0 %v2068
  %3706 = vmatpush1.bf16.msra.mxu0 %v2067
  %3707 = vmatprep.subr.bf16.mxu0 %v2066
  %3708 = vmatpush1.bf16.msra.mxu0 %v2065
  %3709 = vmatprep.subr.bf16.mxu0 %v2064
  %3710 = vmatpush1.bf16.msra.mxu0 %v2063
  %3711 = vmatprep.subr.bf16.mxu0 %v2062
  %3712 = vmatpush1.bf16.msra.mxu0 %v2061
  %3713 = vmatprep.subr.bf16.mxu0 %v2060
  %3714 = vmatpush1.bf16.msra.mxu0 %v2059
  %3715 = vmatprep.subr.bf16.mxu0 %v2058
  %3716 = vmatpush1.bf16.msra.mxu0 %v2057
  %3717 = vmatprep.subr.bf16.mxu0 %v2056
  %3718 = vmatpush1.bf16.msra.mxu0 %v2055
  %3719 = vmatprep.subr.bf16.mxu0 %v2054
  %3720 = vmatpush1.bf16.msra.mxu0 %v2053
  %3721 = vmatprep.subr.bf16.mxu0 %v2084
  %3722 = vmatpush2.bf16.msra.mxu0 %v2083
  %3723 = vmatprep.subr.bf16.mxu0 %v2082
  %3724 = vmatpush2.bf16.msra.mxu0 %v2081
  %3725 = vmatprep.subr.bf16.mxu0 %v2080
  %3726 = vmatpush2.bf16.msra.mxu0 %v2079
  %3727 = vmatprep.subr.bf16.mxu0 %v2078
  %3728 = vmatpush2.bf16.msra.mxu0 %v2077
  %3729 = vmatprep.subr.bf16.mxu0 %v2076
  %3730 = vmatpush2.bf16.msra.mxu0 %v2075
  %3731 = vmatprep.subr.bf16.mxu0 %v2074
  %3732 = vmatpush2.bf16.msra.mxu0 %v2073
  %3733 = vmatprep.subr.bf16.mxu0 %v2072
  %3734 = vmatpush2.bf16.msra.mxu0 %v2071
  %3735 = vmatprep.subr.bf16.mxu0 %v2070
  %3736 = vmatpush2.bf16.msra.mxu0 %v2069
  %3737 = vmatprep.mubr.bf16.mxu0 %v2606
  %3738 = vmatmul.mubr.bf16.gmra.mxu0 %v1376
  %v3739 = vpop.f32.mrf.mxu0
  %v3740 = vadd.f32 %v1614, %v3739
  %v3741 = vpop.f32.mrf.mxu0
  %v3742 = vadd.f32 %v1618, %v3741
  %v3743 = vpop.f32.mrf.mxu0
  %v3744 = vpop.f32.mrf.mxu0
  %3745 = vdwg.mxu0
  %3746 = vmatprep.subr.bf16.mxu0 %v2100
  %3747 = vmatpush1.bf16.msra.mxu0 %v2099
  %3748 = vmatprep.subr.bf16.mxu0 %v2098
  %3749 = vmatpush1.bf16.msra.mxu0 %v2097
  %3750 = vmatprep.subr.bf16.mxu0 %v2096
  %3751 = vmatpush1.bf16.msra.mxu0 %v2095
  %3752 = vmatprep.subr.bf16.mxu0 %v2094
  %3753 = vmatpush1.bf16.msra.mxu0 %v2093
  %3754 = vmatprep.subr.bf16.mxu0 %v2092
  %3755 = vmatpush1.bf16.msra.mxu0 %v2091
  %3756 = vmatprep.subr.bf16.mxu0 %v2090
  %3757 = vmatpush1.bf16.msra.mxu0 %v2089
  %3758 = vmatprep.subr.bf16.mxu0 %v2088
  %3759 = vmatpush1.bf16.msra.mxu0 %v2087
  %3760 = vmatprep.subr.bf16.mxu0 %v2086
  %3761 = vmatpush1.bf16.msra.mxu0 %v2085
  %3762 = vmatprep.subr.bf16.mxu0 %v2116
  %3763 = vmatpush2.bf16.msra.mxu0 %v2115
  %3764 = vmatprep.subr.bf16.mxu0 %v2114
  %3765 = vmatpush2.bf16.msra.mxu0 %v2113
  %3766 = vmatprep.subr.bf16.mxu0 %v2112
  %3767 = vmatpush2.bf16.msra.mxu0 %v2111
  %3768 = vmatprep.subr.bf16.mxu0 %v2110
  %3769 = vmatpush2.bf16.msra.mxu0 %v2109
  %3770 = vmatprep.subr.bf16.mxu0 %v2108
  %3771 = vmatpush2.bf16.msra.mxu0 %v2107
  %3772 = vmatprep.subr.bf16.mxu0 %v2106
  %3773 = vmatpush2.bf16.msra.mxu0 %v2105
  %3774 = vmatprep.subr.bf16.mxu0 %v2104
  %3775 = vmatpush2.bf16.msra.mxu0 %v2103
  %3776 = vmatprep.subr.bf16.mxu0 %v2102
  %3777 = vmatpush2.bf16.msra.mxu0 %v2101
  %3778 = vmatprep.mubr.bf16.mxu0 %v1463
  %3779 = vmatmul.mubr.bf16.gmra.mxu0 %v2902
  %v3780 = vpop.f32.mrf.mxu0
  %v3781 = vadd.f32 %v3740, %v3780
  %v3782 = vpop.f32.mrf.mxu0
  %v3783 = vadd.f32 %v3742, %v3782
  %v3784 = vpop.f32.mrf.mxu0
  %v3785 = vpop.f32.mrf.mxu0
  %3786 = vdwg.mxu0
  %3787 = vmatprep.subr.bf16.mxu0 %v2132
  %3788 = vmatpush1.bf16.msra.mxu0 %v2131
  %3789 = vmatprep.subr.bf16.mxu0 %v2130
  %3790 = vmatpush1.bf16.msra.mxu0 %v2129
  %3791 = vmatprep.subr.bf16.mxu0 %v2128
  %3792 = vmatpush1.bf16.msra.mxu0 %v2127
  %3793 = vmatprep.subr.bf16.mxu0 %v2126
  %3794 = vmatpush1.bf16.msra.mxu0 %v2125
  %3795 = vmatprep.subr.bf16.mxu0 %v2124
  %3796 = vmatpush1.bf16.msra.mxu0 %v2123
  %3797 = vmatprep.subr.bf16.mxu0 %v2122
  %3798 = vmatpush1.bf16.msra.mxu0 %v2121
  %3799 = vmatprep.subr.bf16.mxu0 %v2120
  %3800 = vmatpush1.bf16.msra.mxu0 %v2119
  %3801 = vmatprep.subr.bf16.mxu0 %v2118
  %3802 = vmatpush1.bf16.msra.mxu0 %v2117
  %3803 = vmatprep.subr.bf16.mxu0 %v2148
  %3804 = vmatpush2.bf16.msra.mxu0 %v2147
  %3805 = vmatprep.subr.bf16.mxu0 %v2146
  %3806 = vmatpush2.bf16.msra.mxu0 %v2145
  %3807 = vmatprep.subr.bf16.mxu0 %v2144
  %3808 = vmatpush2.bf16.msra.mxu0 %v2143
  %3809 = vmatprep.subr.bf16.mxu0 %v2142
  %3810 = vmatpush2.bf16.msra.mxu0 %v2141
  %3811 = vmatprep.subr.bf16.mxu0 %v2140
  %3812 = vmatpush2.bf16.msra.mxu0 %v2139
  %3813 = vmatprep.subr.bf16.mxu0 %v2138
  %3814 = vmatpush2.bf16.msra.mxu0 %v2137
  %3815 = vmatprep.subr.bf16.mxu0 %v2136
  %3816 = vmatpush2.bf16.msra.mxu0 %v2135
  %3817 = vmatprep.subr.bf16.mxu0 %v2134
  %3818 = vmatpush2.bf16.msra.mxu0 %v2133
  %3819 = vmatprep.mubr.bf16.mxu0 %v2931
  %3820 = vmatmul.mubr.bf16.gmra.mxu0 %v2635
  %v3821 = vpop.f32.mrf.mxu0
  %v3822 = vadd.f32 %v3781, %v3821
  %v3823 = vpop.f32.mrf.mxu0
  %v3824 = vadd.f32 %v3783, %v3823
  %v3825 = vpop.f32.mrf.mxu0
  %v3826 = vpop.f32.mrf.mxu0
  %3827 = vdwg.mxu0
  %3828 = vmatprep.subr.bf16.mxu0 %v2164
  %3829 = vmatpush1.bf16.msra.mxu0 %v2163
  %3830 = vmatprep.subr.bf16.mxu0 %v2162
  %3831 = vmatpush1.bf16.msra.mxu0 %v2161
  %3832 = vmatprep.subr.bf16.mxu0 %v2160
  %3833 = vmatpush1.bf16.msra.mxu0 %v2159
  %3834 = vmatprep.subr.bf16.mxu0 %v2158
  %3835 = vmatpush1.bf16.msra.mxu0 %v2157
  %3836 = vmatprep.subr.bf16.mxu0 %v2156
  %3837 = vmatpush1.bf16.msra.mxu0 %v2155
  %3838 = vmatprep.subr.bf16.mxu0 %v2154
  %3839 = vmatpush1.bf16.msra.mxu0 %v2153
  %3840 = vmatprep.subr.bf16.mxu0 %v2152
  %3841 = vmatpush1.bf16.msra.mxu0 %v2151
  %3842 = vmatprep.subr.bf16.mxu0 %v2150
  %3843 = vmatpush1.bf16.msra.mxu0 %v2149
  %3844 = vmatprep.subr.bf16.mxu0 %v2180
  %3845 = vmatpush2.bf16.msra.mxu0 %v2179
  %3846 = vmatprep.subr.bf16.mxu0 %v2178
  %3847 = vmatpush2.bf16.msra.mxu0 %v2177
  %3848 = vmatprep.subr.bf16.mxu0 %v2176
  %3849 = vmatpush2.bf16.msra.mxu0 %v2175
  %3850 = vmatprep.subr.bf16.mxu0 %v2174
  %3851 = vmatpush2.bf16.msra.mxu0 %v2173
  %3852 = vmatprep.subr.bf16.mxu0 %v2172
  %3853 = vmatpush2.bf16.msra.mxu0 %v2171
  %3854 = vmatprep.subr.bf16.mxu0 %v2170
  %3855 = vmatpush2.bf16.msra.mxu0 %v2169
  %3856 = vmatprep.subr.bf16.mxu0 %v2168
  %3857 = vmatpush2.bf16.msra.mxu0 %v2167
  %3858 = vmatprep.subr.bf16.mxu0 %v2166
  %3859 = vmatpush2.bf16.msra.mxu0 %v2165
  %3860 = vmatprep.mubr.bf16.mxu0 %v3465
  %3861 = vmatmul.mubr.bf16.gmra.mxu0 %v3227
  %v3862 = vpop.f32.mrf.mxu0
  %v3863 = vadd.f32 %v3822, %v3862
  %v3864 = vpop.f32.mrf.mxu0
  %v3865 = vadd.f32 %v3824, %v3864
  %v3866 = vpop.f32.mrf.mxu0
  %v3867 = vpop.f32.mrf.mxu0
  %3868 = vdwg.mxu0
  %3869 = vmatprep.subr.bf16.mxu0 %v2196
  %3870 = vmatpush1.bf16.msra.mxu0 %v2195
  %3871 = vmatprep.subr.bf16.mxu0 %v2194
  %3872 = vmatpush1.bf16.msra.mxu0 %v2193
  %3873 = vmatprep.subr.bf16.mxu0 %v2192
  %3874 = vmatpush1.bf16.msra.mxu0 %v2191
  %3875 = vmatprep.subr.bf16.mxu0 %v2190
  %3876 = vmatpush1.bf16.msra.mxu0 %v2189
  %3877 = vmatprep.subr.bf16.mxu0 %v2188
  %3878 = vmatpush1.bf16.msra.mxu0 %v2187
  %3879 = vmatprep.subr.bf16.mxu0 %v2186
  %3880 = vmatpush1.bf16.msra.mxu0 %v2185
  %3881 = vmatprep.subr.bf16.mxu0 %v2184
  %3882 = vmatpush1.bf16.msra.mxu0 %v2183
  %3883 = vmatprep.subr.bf16.mxu0 %v2182
  %3884 = vmatpush1.bf16.msra.mxu0 %v2181
  %3885 = vmatprep.subr.bf16.mxu0 0
  %3886 = vmatpush2.bf16.msra.mxu0 0
  %3887 = vmatprep.subr.bf16.mxu0 0
  %3888 = vmatpush2.bf16.msra.mxu0 0
  %3889 = vmatprep.subr.bf16.mxu0 0
  %3890 = vmatpush2.bf16.msra.mxu0 0
  %3891 = vmatprep.subr.bf16.mxu0 0
  %3892 = vmatpush2.bf16.msra.mxu0 0
  %3893 = vmatprep.subr.bf16.mxu0 0
  %3894 = vmatpush2.bf16.msra.mxu0 0
  %3895 = vmatprep.subr.bf16.mxu0 0
  %3896 = vmatpush2.bf16.msra.mxu0 0
  %3897 = vmatprep.subr.bf16.mxu0 0
  %3898 = vmatpush2.bf16.msra.mxu0 0
  %3899 = vmatprep.subr.bf16.mxu0 0
  %3900 = vmatpush2.bf16.msra.mxu0 0
  %3901 = vmatprep.mubr.bf16.mxu0 0
  %3902 = vmatmul.mubr.bf16.gmra.mxu0 %v3703
  %v3903 = vpop.f32.mrf.mxu0
  %v3904 = vadd.f32 %v3863, %v3903
  %v3905 = vpop.f32.mrf.mxu0
  %v3906 = vadd.f32 %v3865, %v3905
  %v3907 = vpop.f32.mrf.mxu0
  %v3908 = vpop.f32.mrf.mxu0
  %3909 = vdwg.mxu0
  %v3910 = vmax.f32 %v3904, 0.0
  %v3911 = vmax.f32 %v3906, 0.0
  %v3912 = vpack.c.bf16 %v3910, %v3910
  %v3913 = vpack.c.bf16 %v3911, %v3911
  %v3914 = vpack.i.b16 %v1049, %v1024
  %v3915 = vpack.i.b16 %v1099, %v1074
  %v3916 = vpack.i.b16 %v1149, %v1124
  %v3917 = vpack.i.b16 %v1199, %v1174
  %v3918 = vcombine.low %v3914, %v3915
  %v3919 = vcombine.low %v3916, %v3917
  %v3921 = vunpack.c.l.s4 1966171168
  %v3922 = vunpack.c.0.s8 %v3921
  %v3923 = vlaneseq
  %v3924 = vshrl.u32 %v3923, 7
  %v3925 = vsub.s32 %v3922, %v3924
  %v3926 = vrot.slane %v3918, %v3925
  %v3928 = vunpack.c.l.s4 1966171168
  %v3929 = vunpack.c.0.s8 %v3928
  %v3930 = vlaneseq
  %v3931 = vshrl.u32 %v3930, 7
  %v3932 = vsub.s32 %v3929, %v3931
  %v3933 = vrot.slane %v3919, %v3932
  %v3934 = vcombine.low %v3926, %v3933
  %v3936 = vunpack.c.l.s4 1966171168
  %v3937 = vunpack.c.0.s8 %v3936
  %v3938 = vlaneseq
  %v3939 = vshrl.u32 %v3938, 7
  %v3940 = vsub.s32 %v3937, %v3939
  %v3941 = vrot.slane %v3934, %v3940
  %v3943 = vpack.i.b16 %v1050, %v1025
  %v3944 = vpack.i.b16 %v1100, %v1075
  %v3945 = vpack.i.b16 %v1150, %v1125
  %v3946 = vpack.i.b16 %v1200, %v1175
  %v3947 = vcombine.low %v3943, %v3944
  %v3948 = vcombine.low %v3945, %v3946
  %v3950 = vunpack.c.l.s4 1966171168
  %v3951 = vunpack.c.0.s8 %v3950
  %v3952 = vlaneseq
  %v3953 = vshrl.u32 %v3952, 7
  %v3954 = vsub.s32 %v3951, %v3953
  %v3955 = vrot.slane %v3947, %v3954
  %v3957 = vunpack.c.l.s4 1966171168
  %v3958 = vunpack.c.0.s8 %v3957
  %v3959 = vlaneseq
  %v3960 = vshrl.u32 %v3959, 7
  %v3961 = vsub.s32 %v3958, %v3960
  %v3962 = vrot.slane %v3948, %v3961
  %v3963 = vcombine.low %v3955, %v3962
  %v3965 = vunpack.c.l.s4 1966171168
  %v3966 = vunpack.c.0.s8 %v3965
  %v3967 = vlaneseq
  %v3968 = vshrl.u32 %v3967, 7
  %v3969 = vsub.s32 %v3966, %v3968
  %v3970 = vrot.slane %v3963, %v3969
  %v3972 = vpack.i.b16 %v1051, %v1026
  %v3973 = vpack.i.b16 %v1101, %v1076
  %v3974 = vpack.i.b16 %v1151, %v1126
  %v3975 = vpack.i.b16 %v1201, %v1176
  %v3976 = vcombine.low %v3972, %v3973
  %v3977 = vcombine.low %v3974, %v3975
  %v3979 = vunpack.c.l.s4 1966171168
  %v3980 = vunpack.c.0.s8 %v3979
  %v3981 = vlaneseq
  %v3982 = vshrl.u32 %v3981, 7
  %v3983 = vsub.s32 %v3980, %v3982
  %v3984 = vrot.slane %v3976, %v3983
  %v3986 = vunpack.c.l.s4 1966171168
  %v3987 = vunpack.c.0.s8 %v3986
  %v3988 = vlaneseq
  %v3989 = vshrl.u32 %v3988, 7
  %v3990 = vsub.s32 %v3987, %v3989
  %v3991 = vrot.slane %v3977, %v3990
  %v3992 = vcombine.low %v3984, %v3991
  %v3994 = vunpack.c.l.s4 1966171168
  %v3995 = vunpack.c.0.s8 %v3994
  %v3996 = vlaneseq
  %v3997 = vshrl.u32 %v3996, 7
  %v3998 = vsub.s32 %v3995, %v3997
  %v3999 = vrot.slane %v3992, %v3998
  %4001 = vmatprep.subr.bf16.mxu0 %v2068
  %4002 = vmatpush1.bf16.msra.mxu0 %v2067
  %4003 = vmatprep.subr.bf16.mxu0 %v2066
  %4004 = vmatpush1.bf16.msra.mxu0 %v2065
  %4005 = vmatprep.subr.bf16.mxu0 %v2064
  %4006 = vmatpush1.bf16.msra.mxu0 %v2063
  %4007 = vmatprep.subr.bf16.mxu0 %v2062
  %4008 = vmatpush1.bf16.msra.mxu0 %v2061
  %4009 = vmatprep.subr.bf16.mxu0 %v2060
  %4010 = vmatpush1.bf16.msra.mxu0 %v2059
  %4011 = vmatprep.subr.bf16.mxu0 %v2058
  %4012 = vmatpush1.bf16.msra.mxu0 %v2057
  %4013 = vmatprep.subr.bf16.mxu0 %v2056
  %4014 = vmatpush1.bf16.msra.mxu0 %v2055
  %4015 = vmatprep.subr.bf16.mxu0 %v2054
  %4016 = vmatpush1.bf16.msra.mxu0 %v2053
  %4017 = vmatprep.subr.bf16.mxu0 %v2084
  %4018 = vmatpush2.bf16.msra.mxu0 %v2083
  %4019 = vmatprep.subr.bf16.mxu0 %v2082
  %4020 = vmatpush2.bf16.msra.mxu0 %v2081
  %4021 = vmatprep.subr.bf16.mxu0 %v2080
  %4022 = vmatpush2.bf16.msra.mxu0 %v2079
  %4023 = vmatprep.subr.bf16.mxu0 %v2078
  %4024 = vmatpush2.bf16.msra.mxu0 %v2077
  %4025 = vmatprep.subr.bf16.mxu0 %v2076
  %4026 = vmatpush2.bf16.msra.mxu0 %v2075
  %4027 = vmatprep.subr.bf16.mxu0 %v2074
  %4028 = vmatpush2.bf16.msra.mxu0 %v2073
  %4029 = vmatprep.subr.bf16.mxu0 %v2072
  %4030 = vmatpush2.bf16.msra.mxu0 %v2071
  %4031 = vmatprep.subr.bf16.mxu0 %v2070
  %4032 = vmatpush2.bf16.msra.mxu0 %v2069
  %4033 = vmatprep.mubr.bf16.mxu0 %v1434
  %4034 = vmatmul.mubr.bf16.gmra.mxu0 %v1405
  %v4035 = vpop.f32.mrf.mxu0
  %v4036 = vadd.f32 %v1614, %v4035
  %v4037 = vpop.f32.mrf.mxu0
  %v4038 = vadd.f32 %v1618, %v4037
  %v4039 = vpop.f32.mrf.mxu0
  %v4040 = vpop.f32.mrf.mxu0
  %4041 = vdwg.mxu0
  %4042 = vmatprep.subr.bf16.mxu0 %v2100
  %4043 = vmatpush1.bf16.msra.mxu0 %v2099
  %4044 = vmatprep.subr.bf16.mxu0 %v2098
  %4045 = vmatpush1.bf16.msra.mxu0 %v2097
  %4046 = vmatprep.subr.bf16.mxu0 %v2096
  %4047 = vmatpush1.bf16.msra.mxu0 %v2095
  %4048 = vmatprep.subr.bf16.mxu0 %v2094
  %4049 = vmatpush1.bf16.msra.mxu0 %v2093
  %4050 = vmatprep.subr.bf16.mxu0 %v2092
  %4051 = vmatpush1.bf16.msra.mxu0 %v2091
  %4052 = vmatprep.subr.bf16.mxu0 %v2090
  %4053 = vmatpush1.bf16.msra.mxu0 %v2089
  %4054 = vmatprep.subr.bf16.mxu0 %v2088
  %4055 = vmatpush1.bf16.msra.mxu0 %v2087
  %4056 = vmatprep.subr.bf16.mxu0 %v2086
  %4057 = vmatpush1.bf16.msra.mxu0 %v2085
  %4058 = vmatprep.subr.bf16.mxu0 %v2116
  %4059 = vmatpush2.bf16.msra.mxu0 %v2115
  %4060 = vmatprep.subr.bf16.mxu0 %v2114
  %4061 = vmatpush2.bf16.msra.mxu0 %v2113
  %4062 = vmatprep.subr.bf16.mxu0 %v2112
  %4063 = vmatpush2.bf16.msra.mxu0 %v2111
  %4064 = vmatprep.subr.bf16.mxu0 %v2110
  %4065 = vmatpush2.bf16.msra.mxu0 %v2109
  %4066 = vmatprep.subr.bf16.mxu0 %v2108
  %4067 = vmatpush2.bf16.msra.mxu0 %v2107
  %4068 = vmatprep.subr.bf16.mxu0 %v2106
  %4069 = vmatpush2.bf16.msra.mxu0 %v2105
  %4070 = vmatprep.subr.bf16.mxu0 %v2104
  %4071 = vmatpush2.bf16.msra.mxu0 %v2103
  %4072 = vmatprep.subr.bf16.mxu0 %v2102
  %4073 = vmatpush2.bf16.msra.mxu0 %v2101
  %4074 = vmatprep.mubr.bf16.mxu0 %v3169
  %4075 = vmatmul.mubr.bf16.gmra.mxu0 %v1463
  %v4076 = vpop.f32.mrf.mxu0
  %v4077 = vadd.f32 %v4036, %v4076
  %v4078 = vpop.f32.mrf.mxu0
  %v4079 = vadd.f32 %v4038, %v4078
  %v4080 = vpop.f32.mrf.mxu0
  %v4081 = vpop.f32.mrf.mxu0
  %4082 = vdwg.mxu0
  %4083 = vmatprep.subr.bf16.mxu0 %v2132
  %4084 = vmatpush1.bf16.msra.mxu0 %v2131
  %4085 = vmatprep.subr.bf16.mxu0 %v2130
  %4086 = vmatpush1.bf16.msra.mxu0 %v2129
  %4087 = vmatprep.subr.bf16.mxu0 %v2128
  %4088 = vmatpush1.bf16.msra.mxu0 %v2127
  %4089 = vmatprep.subr.bf16.mxu0 %v2126
  %4090 = vmatpush1.bf16.msra.mxu0 %v2125
  %4091 = vmatprep.subr.bf16.mxu0 %v2124
  %4092 = vmatpush1.bf16.msra.mxu0 %v2123
  %4093 = vmatprep.subr.bf16.mxu0 %v2122
  %4094 = vmatpush1.bf16.msra.mxu0 %v2121
  %4095 = vmatprep.subr.bf16.mxu0 %v2120
  %4096 = vmatpush1.bf16.msra.mxu0 %v2119
  %4097 = vmatprep.subr.bf16.mxu0 %v2118
  %4098 = vmatpush1.bf16.msra.mxu0 %v2117
  %4099 = vmatprep.subr.bf16.mxu0 %v2148
  %4100 = vmatpush2.bf16.msra.mxu0 %v2147
  %4101 = vmatprep.subr.bf16.mxu0 %v2146
  %4102 = vmatpush2.bf16.msra.mxu0 %v2145
  %4103 = vmatprep.subr.bf16.mxu0 %v2144
  %4104 = vmatpush2.bf16.msra.mxu0 %v2143
  %4105 = vmatprep.subr.bf16.mxu0 %v2142
  %4106 = vmatpush2.bf16.msra.mxu0 %v2141
  %4107 = vmatprep.subr.bf16.mxu0 %v2140
  %4108 = vmatpush2.bf16.msra.mxu0 %v2139
  %4109 = vmatprep.subr.bf16.mxu0 %v2138
  %4110 = vmatpush2.bf16.msra.mxu0 %v2137
  %4111 = vmatprep.subr.bf16.mxu0 %v2136
  %4112 = vmatpush2.bf16.msra.mxu0 %v2135
  %4113 = vmatprep.subr.bf16.mxu0 %v2134
  %4114 = vmatpush2.bf16.msra.mxu0 %v2133
  %4115 = vmatprep.mubr.bf16.mxu0 %v3227
  %4116 = vmatmul.mubr.bf16.gmra.mxu0 %v3198
  %v4117 = vpop.f32.mrf.mxu0
  %v4118 = vadd.f32 %v4077, %v4117
  %v4119 = vpop.f32.mrf.mxu0
  %v4120 = vadd.f32 %v4079, %v4119
  %v4121 = vpop.f32.mrf.mxu0
  %v4122 = vpop.f32.mrf.mxu0
  %4123 = vdwg.mxu0
  %4124 = vmatprep.subr.bf16.mxu0 %v2164
  %4125 = vmatpush1.bf16.msra.mxu0 %v2163
  %4126 = vmatprep.subr.bf16.mxu0 %v2162
  %4127 = vmatpush1.bf16.msra.mxu0 %v2161
  %4128 = vmatprep.subr.bf16.mxu0 %v2160
  %4129 = vmatpush1.bf16.msra.mxu0 %v2159
  %4130 = vmatprep.subr.bf16.mxu0 %v2158
  %4131 = vmatpush1.bf16.msra.mxu0 %v2157
  %4132 = vmatprep.subr.bf16.mxu0 %v2156
  %4133 = vmatpush1.bf16.msra.mxu0 %v2155
  %4134 = vmatprep.subr.bf16.mxu0 %v2154
  %4135 = vmatpush1.bf16.msra.mxu0 %v2153
  %4136 = vmatprep.subr.bf16.mxu0 %v2152
  %4137 = vmatpush1.bf16.msra.mxu0 %v2151
  %4138 = vmatprep.subr.bf16.mxu0 %v2150
  %4139 = vmatpush1.bf16.msra.mxu0 %v2149
  %4140 = vmatprep.subr.bf16.mxu0 %v2180
  %4141 = vmatpush2.bf16.msra.mxu0 %v2179
  %4142 = vmatprep.subr.bf16.mxu0 %v2178
  %4143 = vmatpush2.bf16.msra.mxu0 %v2177
  %4144 = vmatprep.subr.bf16.mxu0 %v2176
  %4145 = vmatpush2.bf16.msra.mxu0 %v2175
  %4146 = vmatprep.subr.bf16.mxu0 %v2174
  %4147 = vmatpush2.bf16.msra.mxu0 %v2173
  %4148 = vmatprep.subr.bf16.mxu0 %v2172
  %4149 = vmatpush2.bf16.msra.mxu0 %v2171
  %4150 = vmatprep.subr.bf16.mxu0 %v2170
  %4151 = vmatpush2.bf16.msra.mxu0 %v2169
  %4152 = vmatprep.subr.bf16.mxu0 %v2168
  %4153 = vmatpush2.bf16.msra.mxu0 %v2167
  %4154 = vmatprep.subr.bf16.mxu0 %v2166
  %4155 = vmatpush2.bf16.msra.mxu0 %v2165
  %4156 = vmatprep.mubr.bf16.mxu0 %v3970
  %4157 = vmatmul.mubr.bf16.gmra.mxu0 %v3941
  %v4158 = vpop.f32.mrf.mxu0
  %v4159 = vadd.f32 %v4118, %v4158
  %v4160 = vpop.f32.mrf.mxu0
  %v4161 = vadd.f32 %v4120, %v4160
  %v4162 = vpop.f32.mrf.mxu0
  %v4163 = vpop.f32.mrf.mxu0
  %4164 = vdwg.mxu0
  %4165 = vmatprep.subr.bf16.mxu0 %v2196
  %4166 = vmatpush1.bf16.msra.mxu0 %v2195
  %4167 = vmatprep.subr.bf16.mxu0 %v2194
  %4168 = vmatpush1.bf16.msra.mxu0 %v2193
  %4169 = vmatprep.subr.bf16.mxu0 %v2192
  %4170 = vmatpush1.bf16.msra.mxu0 %v2191
  %4171 = vmatprep.subr.bf16.mxu0 %v2190
  %4172 = vmatpush1.bf16.msra.mxu0 %v2189
  %4173 = vmatprep.subr.bf16.mxu0 %v2188
  %4174 = vmatpush1.bf16.msra.mxu0 %v2187
  %4175 = vmatprep.subr.bf16.mxu0 %v2186
  %4176 = vmatpush1.bf16.msra.mxu0 %v2185
  %4177 = vmatprep.subr.bf16.mxu0 %v2184
  %4178 = vmatpush1.bf16.msra.mxu0 %v2183
  %4179 = vmatprep.subr.bf16.mxu0 %v2182
  %4180 = vmatpush1.bf16.msra.mxu0 %v2181
  %4181 = vmatprep.subr.bf16.mxu0 0
  %4182 = vmatpush2.bf16.msra.mxu0 0
  %4183 = vmatprep.subr.bf16.mxu0 0
  %4184 = vmatpush2.bf16.msra.mxu0 0
  %4185 = vmatprep.subr.bf16.mxu0 0
  %4186 = vmatpush2.bf16.msra.mxu0 0
  %4187 = vmatprep.subr.bf16.mxu0 0
  %4188 = vmatpush2.bf16.msra.mxu0 0
  %4189 = vmatprep.subr.bf16.mxu0 0
  %4190 = vmatpush2.bf16.msra.mxu0 0
  %4191 = vmatprep.subr.bf16.mxu0 0
  %4192 = vmatpush2.bf16.msra.mxu0 0
  %4193 = vmatprep.subr.bf16.mxu0 0
  %4194 = vmatpush2.bf16.msra.mxu0 0
  %4195 = vmatprep.subr.bf16.mxu0 0
  %4196 = vmatpush2.bf16.msra.mxu0 0
  %4197 = vmatprep.mubr.bf16.mxu0 0
  %4198 = vmatmul.mubr.bf16.gmra.mxu0 %v3999
  %v4199 = vpop.f32.mrf.mxu0
  %v4200 = vadd.f32 %v4159, %v4199
  %v4201 = vpop.f32.mrf.mxu0
  %v4202 = vadd.f32 %v4161, %v4201
  %v4203 = vpop.f32.mrf.mxu0
  %v4204 = vpop.f32.mrf.mxu0
  %4205 = vdwg.mxu0
  %v4206 = vmax.f32 %v4200, 0.0
  %v4207 = vmax.f32 %v4202, 0.0
  %v4208 = vpack.c.bf16 %v4206, %v4206
  %v4209 = vpack.c.bf16 %v4207, %v4207
  %v4210 = vpack.i.b16 %v1052, %v1027
  %v4211 = vpack.i.b16 %v1102, %v1077
  %v4212 = vpack.i.b16 %v1152, %v1127
  %v4213 = vpack.i.b16 %v1202, %v1177
  %v4214 = vcombine.low %v4210, %v4211
  %v4215 = vcombine.low %v4212, %v4213
  %v4217 = vunpack.c.l.s4 1966171168
  %v4218 = vunpack.c.0.s8 %v4217
  %v4219 = vlaneseq
  %v4220 = vshrl.u32 %v4219, 7
  %v4221 = vsub.s32 %v4218, %v4220
  %v4222 = vrot.slane %v4214, %v4221
  %v4224 = vunpack.c.l.s4 1966171168
  %v4225 = vunpack.c.0.s8 %v4224
  %v4226 = vlaneseq
  %v4227 = vshrl.u32 %v4226, 7
  %v4228 = vsub.s32 %v4225, %v4227
  %v4229 = vrot.slane %v4215, %v4228
  %v4230 = vcombine.low %v4222, %v4229
  %v4232 = vunpack.c.l.s4 1966171168
  %v4233 = vunpack.c.0.s8 %v4232
  %v4234 = vlaneseq
  %v4235 = vshrl.u32 %v4234, 7
  %v4236 = vsub.s32 %v4233, %v4235
  %v4237 = vrot.slane %v4230, %v4236
  %4239 = vmatprep.subr.bf16.mxu0 %v2068
  %4240 = vmatpush1.bf16.msra.mxu0 %v2067
  %4241 = vmatprep.subr.bf16.mxu0 %v2066
  %4242 = vmatpush1.bf16.msra.mxu0 %v2065
  %4243 = vmatprep.subr.bf16.mxu0 %v2064
  %4244 = vmatpush1.bf16.msra.mxu0 %v2063
  %4245 = vmatprep.subr.bf16.mxu0 %v2062
  %4246 = vmatpush1.bf16.msra.mxu0 %v2061
  %4247 = vmatprep.subr.bf16.mxu0 %v2060
  %4248 = vmatpush1.bf16.msra.mxu0 %v2059
  %4249 = vmatprep.subr.bf16.mxu0 %v2058
  %4250 = vmatpush1.bf16.msra.mxu0 %v2057
  %4251 = vmatprep.subr.bf16.mxu0 %v2056
  %4252 = vmatpush1.bf16.msra.mxu0 %v2055
  %4253 = vmatprep.subr.bf16.mxu0 %v2054
  %4254 = vmatpush1.bf16.msra.mxu0 %v2053
  %4255 = vmatprep.subr.bf16.mxu0 %v2084
  %4256 = vmatpush2.bf16.msra.mxu0 %v2083
  %4257 = vmatprep.subr.bf16.mxu0 %v2082
  %4258 = vmatpush2.bf16.msra.mxu0 %v2081
  %4259 = vmatprep.subr.bf16.mxu0 %v2080
  %4260 = vmatpush2.bf16.msra.mxu0 %v2079
  %4261 = vmatprep.subr.bf16.mxu0 %v2078
  %4262 = vmatpush2.bf16.msra.mxu0 %v2077
  %4263 = vmatprep.subr.bf16.mxu0 %v2076
  %4264 = vmatpush2.bf16.msra.mxu0 %v2075
  %4265 = vmatprep.subr.bf16.mxu0 %v2074
  %4266 = vmatpush2.bf16.msra.mxu0 %v2073
  %4267 = vmatprep.subr.bf16.mxu0 %v2072
  %4268 = vmatpush2.bf16.msra.mxu0 %v2071
  %4269 = vmatprep.subr.bf16.mxu0 %v2070
  %4270 = vmatpush2.bf16.msra.mxu0 %v2069
  %4271 = vmatprep.mubr.bf16.mxu0 %v1463
  %4272 = vmatmul.mubr.bf16.gmra.mxu0 %v1434
  %v4273 = vpop.f32.mrf.mxu0
  %v4274 = vadd.f32 %v1614, %v4273
  %v4275 = vpop.f32.mrf.mxu0
  %v4276 = vadd.f32 %v1618, %v4275
  %v4277 = vpop.f32.mrf.mxu0
  %v4278 = vpop.f32.mrf.mxu0
  %4279 = vdwg.mxu0
  %4280 = vmatprep.subr.bf16.mxu0 %v2100
  %4281 = vmatpush1.bf16.msra.mxu0 %v2099
  %4282 = vmatprep.subr.bf16.mxu0 %v2098
  %4283 = vmatpush1.bf16.msra.mxu0 %v2097
  %4284 = vmatprep.subr.bf16.mxu0 %v2096
  %4285 = vmatpush1.bf16.msra.mxu0 %v2095
  %4286 = vmatprep.subr.bf16.mxu0 %v2094
  %4287 = vmatpush1.bf16.msra.mxu0 %v2093
  %4288 = vmatprep.subr.bf16.mxu0 %v2092
  %4289 = vmatpush1.bf16.msra.mxu0 %v2091
  %4290 = vmatprep.subr.bf16.mxu0 %v2090
  %4291 = vmatpush1.bf16.msra.mxu0 %v2089
  %4292 = vmatprep.subr.bf16.mxu0 %v2088
  %4293 = vmatpush1.bf16.msra.mxu0 %v2087
  %4294 = vmatprep.subr.bf16.mxu0 %v2086
  %4295 = vmatpush1.bf16.msra.mxu0 %v2085
  %4296 = vmatprep.subr.bf16.mxu0 %v2116
  %4297 = vmatpush2.bf16.msra.mxu0 %v2115
  %4298 = vmatprep.subr.bf16.mxu0 %v2114
  %4299 = vmatpush2.bf16.msra.mxu0 %v2113
  %4300 = vmatprep.subr.bf16.mxu0 %v2112
  %4301 = vmatpush2.bf16.msra.mxu0 %v2111
  %4302 = vmatprep.subr.bf16.mxu0 %v2110
  %4303 = vmatpush2.bf16.msra.mxu0 %v2109
  %4304 = vmatprep.subr.bf16.mxu0 %v2108
  %4305 = vmatpush2.bf16.msra.mxu0 %v2107
  %4306 = vmatprep.subr.bf16.mxu0 %v2106
  %4307 = vmatpush2.bf16.msra.mxu0 %v2105
  %4308 = vmatprep.subr.bf16.mxu0 %v2104
  %4309 = vmatpush2.bf16.msra.mxu0 %v2103
  %4310 = vmatprep.subr.bf16.mxu0 %v2102
  %4311 = vmatpush2.bf16.msra.mxu0 %v2101
  %4312 = vmatprep.mubr.bf16.mxu0 %v3198
  %4313 = vmatmul.mubr.bf16.gmra.mxu0 %v2635
  %v4314 = vpop.f32.mrf.mxu0
  %v4315 = vadd.f32 %v4274, %v4314
  %v4316 = vpop.f32.mrf.mxu0
  %v4317 = vadd.f32 %v4276, %v4316
  %v4318 = vpop.f32.mrf.mxu0
  %v4319 = vpop.f32.mrf.mxu0
  %4320 = vdwg.mxu0
  %4321 = vmatprep.subr.bf16.mxu0 %v2132
  %4322 = vmatpush1.bf16.msra.mxu0 %v2131
  %4323 = vmatprep.subr.bf16.mxu0 %v2130
  %4324 = vmatpush1.bf16.msra.mxu0 %v2129
  %4325 = vmatprep.subr.bf16.mxu0 %v2128
  %4326 = vmatpush1.bf16.msra.mxu0 %v2127
  %4327 = vmatprep.subr.bf16.mxu0 %v2126
  %4328 = vmatpush1.bf16.msra.mxu0 %v2125
  %4329 = vmatprep.subr.bf16.mxu0 %v2124
  %4330 = vmatpush1.bf16.msra.mxu0 %v2123
  %4331 = vmatprep.subr.bf16.mxu0 %v2122
  %4332 = vmatpush1.bf16.msra.mxu0 %v2121
  %4333 = vmatprep.subr.bf16.mxu0 %v2120
  %4334 = vmatpush1.bf16.msra.mxu0 %v2119
  %4335 = vmatprep.subr.bf16.mxu0 %v2118
  %4336 = vmatpush1.bf16.msra.mxu0 %v2117
  %4337 = vmatprep.subr.bf16.mxu0 %v2148
  %4338 = vmatpush2.bf16.msra.mxu0 %v2147
  %4339 = vmatprep.subr.bf16.mxu0 %v2146
  %4340 = vmatpush2.bf16.msra.mxu0 %v2145
  %4341 = vmatprep.subr.bf16.mxu0 %v2144
  %4342 = vmatpush2.bf16.msra.mxu0 %v2143
  %4343 = vmatprep.subr.bf16.mxu0 %v2142
  %4344 = vmatpush2.bf16.msra.mxu0 %v2141
  %4345 = vmatprep.subr.bf16.mxu0 %v2140
  %4346 = vmatpush2.bf16.msra.mxu0 %v2139
  %4347 = vmatprep.subr.bf16.mxu0 %v2138
  %4348 = vmatpush2.bf16.msra.mxu0 %v2137
  %4349 = vmatprep.subr.bf16.mxu0 %v2136
  %4350 = vmatpush2.bf16.msra.mxu0 %v2135
  %4351 = vmatprep.subr.bf16.mxu0 %v2134
  %4352 = vmatpush2.bf16.msra.mxu0 %v2133
  %4353 = vmatprep.mubr.bf16.mxu0 %v3465
  %4354 = vmatmul.mubr.bf16.gmra.mxu0 %v3227
  %v4355 = vpop.f32.mrf.mxu0
  %v4356 = vadd.f32 %v4315, %v4355
  %v4357 = vpop.f32.mrf.mxu0
  %v4358 = vadd.f32 %v4317, %v4357
  %v4359 = vpop.f32.mrf.mxu0
  %v4360 = vpop.f32.mrf.mxu0
  %4361 = vdwg.mxu0
  %4362 = vmatprep.subr.bf16.mxu0 %v2164
  %4363 = vmatpush1.bf16.msra.mxu0 %v2163
  %4364 = vmatprep.subr.bf16.mxu0 %v2162
  %4365 = vmatpush1.bf16.msra.mxu0 %v2161
  %4366 = vmatprep.subr.bf16.mxu0 %v2160
  %4367 = vmatpush1.bf16.msra.mxu0 %v2159
  %4368 = vmatprep.subr.bf16.mxu0 %v2158
  %4369 = vmatpush1.bf16.msra.mxu0 %v2157
  %4370 = vmatprep.subr.bf16.mxu0 %v2156
  %4371 = vmatpush1.bf16.msra.mxu0 %v2155
  %4372 = vmatprep.subr.bf16.mxu0 %v2154
  %4373 = vmatpush1.bf16.msra.mxu0 %v2153
  %4374 = vmatprep.subr.bf16.mxu0 %v2152
  %4375 = vmatpush1.bf16.msra.mxu0 %v2151
  %4376 = vmatprep.subr.bf16.mxu0 %v2150
  %4377 = vmatpush1.bf16.msra.mxu0 %v2149
  %4378 = vmatprep.subr.bf16.mxu0 %v2180
  %4379 = vmatpush2.bf16.msra.mxu0 %v2179
  %4380 = vmatprep.subr.bf16.mxu0 %v2178
  %4381 = vmatpush2.bf16.msra.mxu0 %v2177
  %4382 = vmatprep.subr.bf16.mxu0 %v2176
  %4383 = vmatpush2.bf16.msra.mxu0 %v2175
  %4384 = vmatprep.subr.bf16.mxu0 %v2174
  %4385 = vmatpush2.bf16.msra.mxu0 %v2173
  %4386 = vmatprep.subr.bf16.mxu0 %v2172
  %4387 = vmatpush2.bf16.msra.mxu0 %v2171
  %4388 = vmatprep.subr.bf16.mxu0 %v2170
  %4389 = vmatpush2.bf16.msra.mxu0 %v2169
  %4390 = vmatprep.subr.bf16.mxu0 %v2168
  %4391 = vmatpush2.bf16.msra.mxu0 %v2167
  %4392 = vmatprep.subr.bf16.mxu0 %v2166
  %4393 = vmatpush2.bf16.msra.mxu0 %v2165
  %4394 = vmatprep.mubr.bf16.mxu0 %v3999
  %4395 = vmatmul.mubr.bf16.gmra.mxu0 %v3970
  %v4396 = vpop.f32.mrf.mxu0
  %v4397 = vadd.f32 %v4356, %v4396
  %v4398 = vpop.f32.mrf.mxu0
  %v4399 = vadd.f32 %v4358, %v4398
  %v4400 = vpop.f32.mrf.mxu0
  %v4401 = vpop.f32.mrf.mxu0
  %4402 = vdwg.mxu0
  %4403 = vmatprep.subr.bf16.mxu0 %v2196
  %4404 = vmatpush1.bf16.msra.mxu0 %v2195
  %4405 = vmatprep.subr.bf16.mxu0 %v2194
  %4406 = vmatpush1.bf16.msra.mxu0 %v2193
  %4407 = vmatprep.subr.bf16.mxu0 %v2192
  %4408 = vmatpush1.bf16.msra.mxu0 %v2191
  %4409 = vmatprep.subr.bf16.mxu0 %v2190
  %4410 = vmatpush1.bf16.msra.mxu0 %v2189
  %4411 = vmatprep.subr.bf16.mxu0 %v2188
  %4412 = vmatpush1.bf16.msra.mxu0 %v2187
  %4413 = vmatprep.subr.bf16.mxu0 %v2186
  %4414 = vmatpush1.bf16.msra.mxu0 %v2185
  %4415 = vmatprep.subr.bf16.mxu0 %v2184
  %4416 = vmatpush1.bf16.msra.mxu0 %v2183
  %4417 = vmatprep.subr.bf16.mxu0 %v2182
  %4418 = vmatpush1.bf16.msra.mxu0 %v2181
  %4419 = vmatprep.subr.bf16.mxu0 0
  %4420 = vmatpush2.bf16.msra.mxu0 0
  %4421 = vmatprep.subr.bf16.mxu0 0
  %4422 = vmatpush2.bf16.msra.mxu0 0
  %4423 = vmatprep.subr.bf16.mxu0 0
  %4424 = vmatpush2.bf16.msra.mxu0 0
  %4425 = vmatprep.subr.bf16.mxu0 0
  %4426 = vmatpush2.bf16.msra.mxu0 0
  %4427 = vmatprep.subr.bf16.mxu0 0
  %4428 = vmatpush2.bf16.msra.mxu0 0
  %4429 = vmatprep.subr.bf16.mxu0 0
  %4430 = vmatpush2.bf16.msra.mxu0 0
  %4431 = vmatprep.subr.bf16.mxu0 0
  %4432 = vmatpush2.bf16.msra.mxu0 0
  %4433 = vmatprep.subr.bf16.mxu0 0
  %4434 = vmatpush2.bf16.msra.mxu0 0
  %4435 = vmatprep.mubr.bf16.mxu0 0
  %4436 = vmatmul.mubr.bf16.gmra.mxu0 %v4237
  %v4437 = vpop.f32.mrf.mxu0
  %v4438 = vadd.f32 %v4397, %v4437
  %v4439 = vpop.f32.mrf.mxu0
  %v4440 = vadd.f32 %v4399, %v4439
  %v4441 = vpop.f32.mrf.mxu0
  %v4442 = vpop.f32.mrf.mxu0
  %4443 = vdwg.mxu0
  %v4444 = vmax.f32 %v4438, 0.0
  %v4445 = vmax.f32 %v4440, 0.0
  %v4446 = vpack.c.bf16 %v4444, %v4444
  %v4447 = vpack.c.bf16 %v4445, %v4445
  %v4448 = vpack.i.b16 %v1053, %v1028
  %v4449 = vpack.i.b16 %v1103, %v1078
  %v4450 = vpack.i.b16 %v1153, %v1128
  %v4451 = vpack.i.b16 %v1203, %v1178
  %v4452 = vcombine.low %v4448, %v4449
  %v4453 = vcombine.low %v4450, %v4451
  %v4455 = vunpack.c.l.s4 1966171168
  %v4456 = vunpack.c.0.s8 %v4455
  %v4457 = vlaneseq
  %v4458 = vshrl.u32 %v4457, 7
  %v4459 = vsub.s32 %v4456, %v4458
  %v4460 = vrot.slane %v4452, %v4459
  %v4462 = vunpack.c.l.s4 1966171168
  %v4463 = vunpack.c.0.s8 %v4462
  %v4464 = vlaneseq
  %v4465 = vshrl.u32 %v4464, 7
  %v4466 = vsub.s32 %v4463, %v4465
  %v4467 = vrot.slane %v4453, %v4466
  %v4468 = vcombine.low %v4460, %v4467
  %v4470 = vunpack.c.l.s4 1966171168
  %v4471 = vunpack.c.0.s8 %v4470
  %v4472 = vlaneseq
  %v4473 = vshrl.u32 %v4472, 7
  %v4474 = vsub.s32 %v4471, %v4473
  %v4475 = vrot.slane %v4468, %v4474
  %4477 = vmatprep.subr.bf16.mxu0 %v2068
  %4478 = vmatpush1.bf16.msra.mxu0 %v2067
  %4479 = vmatprep.subr.bf16.mxu0 %v2066
  %4480 = vmatpush1.bf16.msra.mxu0 %v2065
  %4481 = vmatprep.subr.bf16.mxu0 %v2064
  %4482 = vmatpush1.bf16.msra.mxu0 %v2063
  %4483 = vmatprep.subr.bf16.mxu0 %v2062
  %4484 = vmatpush1.bf16.msra.mxu0 %v2061
  %4485 = vmatprep.subr.bf16.mxu0 %v2060
  %4486 = vmatpush1.bf16.msra.mxu0 %v2059
  %4487 = vmatprep.subr.bf16.mxu0 %v2058
  %4488 = vmatpush1.bf16.msra.mxu0 %v2057
  %4489 = vmatprep.subr.bf16.mxu0 %v2056
  %4490 = vmatpush1.bf16.msra.mxu0 %v2055
  %4491 = vmatprep.subr.bf16.mxu0 %v2054
  %4492 = vmatpush1.bf16.msra.mxu0 %v2053
  %4493 = vmatprep.subr.bf16.mxu0 %v2084
  %4494 = vmatpush2.bf16.msra.mxu0 %v2083
  %4495 = vmatprep.subr.bf16.mxu0 %v2082
  %4496 = vmatpush2.bf16.msra.mxu0 %v2081
  %4497 = vmatprep.subr.bf16.mxu0 %v2080
  %4498 = vmatpush2.bf16.msra.mxu0 %v2079
  %4499 = vmatprep.subr.bf16.mxu0 %v2078
  %4500 = vmatpush2.bf16.msra.mxu0 %v2077
  %4501 = vmatprep.subr.bf16.mxu0 %v2076
  %4502 = vmatpush2.bf16.msra.mxu0 %v2075
  %4503 = vmatprep.subr.bf16.mxu0 %v2074
  %4504 = vmatpush2.bf16.msra.mxu0 %v2073
  %4505 = vmatprep.subr.bf16.mxu0 %v2072
  %4506 = vmatpush2.bf16.msra.mxu0 %v2071
  %4507 = vmatprep.subr.bf16.mxu0 %v2070
  %4508 = vmatpush2.bf16.msra.mxu0 %v2069
  %4509 = vmatprep.mubr.bf16.mxu0 %v2635
  %4510 = vmatmul.mubr.bf16.gmra.mxu0 %v1463
  %v4511 = vpop.f32.mrf.mxu0
  %v4512 = vadd.f32 %v1614, %v4511
  %v4513 = vpop.f32.mrf.mxu0
  %v4514 = vadd.f32 %v1618, %v4513
  %v4515 = vpop.f32.mrf.mxu0
  %v4516 = vpop.f32.mrf.mxu0
  %4517 = vdwg.mxu0
  %4518 = vmatprep.subr.bf16.mxu0 %v2100
  %4519 = vmatpush1.bf16.msra.mxu0 %v2099
  %4520 = vmatprep.subr.bf16.mxu0 %v2098
  %4521 = vmatpush1.bf16.msra.mxu0 %v2097
  %4522 = vmatprep.subr.bf16.mxu0 %v2096
  %4523 = vmatpush1.bf16.msra.mxu0 %v2095
  %4524 = vmatprep.subr.bf16.mxu0 %v2094
  %4525 = vmatpush1.bf16.msra.mxu0 %v2093
  %4526 = vmatprep.subr.bf16.mxu0 %v2092
  %4527 = vmatpush1.bf16.msra.mxu0 %v2091
  %4528 = vmatprep.subr.bf16.mxu0 %v2090
  %4529 = vmatpush1.bf16.msra.mxu0 %v2089
  %4530 = vmatprep.subr.bf16.mxu0 %v2088
  %4531 = vmatpush1.bf16.msra.mxu0 %v2087
  %4532 = vmatprep.subr.bf16.mxu0 %v2086
  %4533 = vmatpush1.bf16.msra.mxu0 %v2085
  %4534 = vmatprep.subr.bf16.mxu0 %v2116
  %4535 = vmatpush2.bf16.msra.mxu0 %v2115
  %4536 = vmatprep.subr.bf16.mxu0 %v2114
  %4537 = vmatpush2.bf16.msra.mxu0 %v2113
  %4538 = vmatprep.subr.bf16.mxu0 %v2112
  %4539 = vmatpush2.bf16.msra.mxu0 %v2111
  %4540 = vmatprep.subr.bf16.mxu0 %v2110
  %4541 = vmatpush2.bf16.msra.mxu0 %v2109
  %4542 = vmatprep.subr.bf16.mxu0 %v2108
  %4543 = vmatpush2.bf16.msra.mxu0 %v2107
  %4544 = vmatprep.subr.bf16.mxu0 %v2106
  %4545 = vmatpush2.bf16.msra.mxu0 %v2105
  %4546 = vmatprep.subr.bf16.mxu0 %v2104
  %4547 = vmatpush2.bf16.msra.mxu0 %v2103
  %4548 = vmatprep.subr.bf16.mxu0 %v2102
  %4549 = vmatpush2.bf16.msra.mxu0 %v2101
  %4550 = vmatprep.mubr.bf16.mxu0 %v3227
  %4551 = vmatmul.mubr.bf16.gmra.mxu0 %v2931
  %v4552 = vpop.f32.mrf.mxu0
  %v4553 = vadd.f32 %v4512, %v4552
  %v4554 = vpop.f32.mrf.mxu0
  %v4555 = vadd.f32 %v4514, %v4554
  %v4556 = vpop.f32.mrf.mxu0
  %v4557 = vpop.f32.mrf.mxu0
  %4558 = vdwg.mxu0
  %4559 = vmatprep.subr.bf16.mxu0 %v2132
  %4560 = vmatpush1.bf16.msra.mxu0 %v2131
  %4561 = vmatprep.subr.bf16.mxu0 %v2130
  %4562 = vmatpush1.bf16.msra.mxu0 %v2129
  %4563 = vmatprep.subr.bf16.mxu0 %v2128
  %4564 = vmatpush1.bf16.msra.mxu0 %v2127
  %4565 = vmatprep.subr.bf16.mxu0 %v2126
  %4566 = vmatpush1.bf16.msra.mxu0 %v2125
  %4567 = vmatprep.subr.bf16.mxu0 %v2124
  %4568 = vmatpush1.bf16.msra.mxu0 %v2123
  %4569 = vmatprep.subr.bf16.mxu0 %v2122
  %4570 = vmatpush1.bf16.msra.mxu0 %v2121
  %4571 = vmatprep.subr.bf16.mxu0 %v2120
  %4572 = vmatpush1.bf16.msra.mxu0 %v2119
  %4573 = vmatprep.subr.bf16.mxu0 %v2118
  %4574 = vmatpush1.bf16.msra.mxu0 %v2117
  %4575 = vmatprep.subr.bf16.mxu0 %v2148
  %4576 = vmatpush2.bf16.msra.mxu0 %v2147
  %4577 = vmatprep.subr.bf16.mxu0 %v2146
  %4578 = vmatpush2.bf16.msra.mxu0 %v2145
  %4579 = vmatprep.subr.bf16.mxu0 %v2144
  %4580 = vmatpush2.bf16.msra.mxu0 %v2143
  %4581 = vmatprep.subr.bf16.mxu0 %v2142
  %4582 = vmatpush2.bf16.msra.mxu0 %v2141
  %4583 = vmatprep.subr.bf16.mxu0 %v2140
  %4584 = vmatpush2.bf16.msra.mxu0 %v2139
  %4585 = vmatprep.subr.bf16.mxu0 %v2138
  %4586 = vmatpush2.bf16.msra.mxu0 %v2137
  %4587 = vmatprep.subr.bf16.mxu0 %v2136
  %4588 = vmatpush2.bf16.msra.mxu0 %v2135
  %4589 = vmatprep.subr.bf16.mxu0 %v2134
  %4590 = vmatpush2.bf16.msra.mxu0 %v2133
  %4591 = vmatprep.mubr.bf16.mxu0 %v3703
  %4592 = vmatmul.mubr.bf16.gmra.mxu0 %v3465
  %v4593 = vpop.f32.mrf.mxu0
  %v4594 = vadd.f32 %v4553, %v4593
  %v4595 = vpop.f32.mrf.mxu0
  %v4596 = vadd.f32 %v4555, %v4595
  %v4597 = vpop.f32.mrf.mxu0
  %v4598 = vpop.f32.mrf.mxu0
  %4599 = vdwg.mxu0
  %4600 = vmatprep.subr.bf16.mxu0 %v2164
  %4601 = vmatpush1.bf16.msra.mxu0 %v2163
  %4602 = vmatprep.subr.bf16.mxu0 %v2162
  %4603 = vmatpush1.bf16.msra.mxu0 %v2161
  %4604 = vmatprep.subr.bf16.mxu0 %v2160
  %4605 = vmatpush1.bf16.msra.mxu0 %v2159
  %4606 = vmatprep.subr.bf16.mxu0 %v2158
  %4607 = vmatpush1.bf16.msra.mxu0 %v2157
  %4608 = vmatprep.subr.bf16.mxu0 %v2156
  %4609 = vmatpush1.bf16.msra.mxu0 %v2155
  %4610 = vmatprep.subr.bf16.mxu0 %v2154
  %4611 = vmatpush1.bf16.msra.mxu0 %v2153
  %4612 = vmatprep.subr.bf16.mxu0 %v2152
  %4613 = vmatpush1.bf16.msra.mxu0 %v2151
  %4614 = vmatprep.subr.bf16.mxu0 %v2150
  %4615 = vmatpush1.bf16.msra.mxu0 %v2149
  %4616 = vmatprep.subr.bf16.mxu0 %v2180
  %4617 = vmatpush2.bf16.msra.mxu0 %v2179
  %4618 = vmatprep.subr.bf16.mxu0 %v2178
  %4619 = vmatpush2.bf16.msra.mxu0 %v2177
  %4620 = vmatprep.subr.bf16.mxu0 %v2176
  %4621 = vmatpush2.bf16.msra.mxu0 %v2175
  %4622 = vmatprep.subr.bf16.mxu0 %v2174
  %4623 = vmatpush2.bf16.msra.mxu0 %v2173
  %4624 = vmatprep.subr.bf16.mxu0 %v2172
  %4625 = vmatpush2.bf16.msra.mxu0 %v2171
  %4626 = vmatprep.subr.bf16.mxu0 %v2170
  %4627 = vmatpush2.bf16.msra.mxu0 %v2169
  %4628 = vmatprep.subr.bf16.mxu0 %v2168
  %4629 = vmatpush2.bf16.msra.mxu0 %v2167
  %4630 = vmatprep.subr.bf16.mxu0 %v2166
  %4631 = vmatpush2.bf16.msra.mxu0 %v2165
  %4632 = vmatprep.mubr.bf16.mxu0 %v4237
  %4633 = vmatmul.mubr.bf16.gmra.mxu0 %v3999
  %v4634 = vpop.f32.mrf.mxu0
  %v4635 = vadd.f32 %v4594, %v4634
  %v4636 = vpop.f32.mrf.mxu0
  %v4637 = vadd.f32 %v4596, %v4636
  %v4638 = vpop.f32.mrf.mxu0
  %v4639 = vpop.f32.mrf.mxu0
  %4640 = vdwg.mxu0
  %4641 = vmatprep.subr.bf16.mxu0 %v2196
  %4642 = vmatpush1.bf16.msra.mxu0 %v2195
  %4643 = vmatprep.subr.bf16.mxu0 %v2194
  %4644 = vmatpush1.bf16.msra.mxu0 %v2193
  %4645 = vmatprep.subr.bf16.mxu0 %v2192
  %4646 = vmatpush1.bf16.msra.mxu0 %v2191
  %4647 = vmatprep.subr.bf16.mxu0 %v2190
  %4648 = vmatpush1.bf16.msra.mxu0 %v2189
  %4649 = vmatprep.subr.bf16.mxu0 %v2188
  %4650 = vmatpush1.bf16.msra.mxu0 %v2187
  %4651 = vmatprep.subr.bf16.mxu0 %v2186
  %4652 = vmatpush1.bf16.msra.mxu0 %v2185
  %4653 = vmatprep.subr.bf16.mxu0 %v2184
  %4654 = vmatpush1.bf16.msra.mxu0 %v2183
  %4655 = vmatprep.subr.bf16.mxu0 %v2182
  %4656 = vmatpush1.bf16.msra.mxu0 %v2181
  %4657 = vmatprep.subr.bf16.mxu0 0
  %4658 = vmatpush2.bf16.msra.mxu0 0
  %4659 = vmatprep.subr.bf16.mxu0 0
  %4660 = vmatpush2.bf16.msra.mxu0 0
  %4661 = vmatprep.subr.bf16.mxu0 0
  %4662 = vmatpush2.bf16.msra.mxu0 0
  %4663 = vmatprep.subr.bf16.mxu0 0
  %4664 = vmatpush2.bf16.msra.mxu0 0
  %4665 = vmatprep.subr.bf16.mxu0 0
  %4666 = vmatpush2.bf16.msra.mxu0 0
  %4667 = vmatprep.subr.bf16.mxu0 0
  %4668 = vmatpush2.bf16.msra.mxu0 0
  %4669 = vmatprep.subr.bf16.mxu0 0
  %4670 = vmatpush2.bf16.msra.mxu0 0
  %4671 = vmatprep.subr.bf16.mxu0 0
  %4672 = vmatpush2.bf16.msra.mxu0 0
  %4673 = vmatprep.mubr.bf16.mxu0 0
  %4674 = vmatmul.mubr.bf16.gmra.mxu0 %v4475
  %v4675 = vpop.f32.mrf.mxu0
  %v4676 = vadd.f32 %v4635, %v4675
  %v4677 = vpop.f32.mrf.mxu0
  %v4678 = vadd.f32 %v4637, %v4677
  %v4679 = vpop.f32.mrf.mxu0
  %v4680 = vpop.f32.mrf.mxu0
  %4681 = vdwg.mxu0
  %v4682 = vmax.f32 %v4676, 0.0
  %v4683 = vmax.f32 %v4678, 0.0
  %v4684 = vpack.c.bf16 %v4682, %v4682
  %v4685 = vpack.c.bf16 %v4683, %v4683
  %v4686 = vld [vmem:[%s5] sm:$0xf]
  %v4687 = vld [vmem:[%s5 + $0x4] sm:$0xf]
  %v4688 = vld [vmem:[%s5 + $0x8] sm:$0xf]
  %v4689 = vld [vmem:[%s5 + $0xc] sm:$0xf]
  %v4690 = vld [vmem:[%s5 + $0x10] sm:$0xf]
  %v4691 = vld [vmem:[%s5 + $0x14] sm:$0xf]
  %v4692 = vld [vmem:[%s5 + $0x18] sm:$0xf]
  %v4693 = vld [vmem:[%s5 + $0x1c] sm:$0xf]
  %v4694 = vld [vmem:[%s5 + $0x20] sm:$0xf]
  %v4695 = vld [vmem:[%s5 + $0x24] sm:$0xf]
  %v4696 = vld [vmem:[%s5 + $0x28] sm:$0xf]
  %v4697 = vld [vmem:[%s5 + $0x2c] sm:$0xf]
  %v4698 = vld [vmem:[%s5 + $0x30] sm:$0xf]
  %v4699 = vld [vmem:[%s5 + $0x34] sm:$0xf]
  %v4700 = vld [vmem:[%s5 + $0x38] sm:$0xf]
  %v4701 = vld [vmem:[%s5 + $0x3c] sm:$0xf]
  %v4702 = vld [vmem:[%s5 + $0x40] sm:$0xf]
  %v4703 = vld [vmem:[%s5 + $0x44] sm:$0xf]
  %v4704 = vld [vmem:[%s5 + $0x48] sm:$0xf]
  %v4705 = vld [vmem:[%s5 + $0x4c] sm:$0xf]
  %v4706 = vld [vmem:[%s5 + $0x50] sm:$0xf]
  %v4707 = vld [vmem:[%s5 + $0x54] sm:$0xf]
  %v4708 = vld [vmem:[%s5 + $0x58] sm:$0xf]
  %v4709 = vld [vmem:[%s5 + $0x5c] sm:$0xf]
  %v4710 = vld [vmem:[%s5 + $0x60] sm:$0xf]
  %v4711 = vld [vmem:[%s5 + $0x64] sm:$0xf]
  %v4712 = vld [vmem:[%s5 + $0x68] sm:$0xf]
  %v4713 = vld [vmem:[%s5 + $0x6c] sm:$0xf]
  %v4714 = vld [vmem:[%s5 + $0x70] sm:$0xf]
  %v4715 = vld [vmem:[%s5 + $0x74] sm:$0xf]
  %v4716 = vld [vmem:[%s5 + $0x78] sm:$0xf]
  %v4717 = vld [vmem:[%s5 + $0x7c] sm:$0xf]
  %v4718 = vld [vmem:[%s5 + $0x80] sm:$0xf]
  %v4719 = vld [vmem:[%s5 + $0x84] sm:$0xf]
  %v4720 = vld [vmem:[%s5 + $0x88] sm:$0xf]
  %v4721 = vld [vmem:[%s5 + $0x8c] sm:$0xf]
  %v4722 = vld [vmem:[%s5 + $0x90] sm:$0xf]
  %v4723 = vld [vmem:[%s5 + $0x94] sm:$0xf]
  %v4724 = vld [vmem:[%s5 + $0x98] sm:$0xf]
  %v4725 = vld [vmem:[%s5 + $0x9c] sm:$0xf]
  %v4726 = vld [vmem:[%s5 + $0xa0] sm:$0xf]
  %v4727 = vld [vmem:[%s5 + $0xa4] sm:$0xf]
  %v4728 = vld [vmem:[%s5 + $0xa8] sm:$0xf]
  %v4729 = vld [vmem:[%s5 + $0xac] sm:$0xf]
  %v4730 = vld [vmem:[%s5 + $0xb0] sm:$0xf]
  %v4731 = vld [vmem:[%s5 + $0xb4] sm:$0xf]
  %v4732 = vld [vmem:[%s5 + $0xb8] sm:$0xf]
  %v4733 = vld [vmem:[%s5 + $0xbc] sm:$0xf]
  %v4734 = vld [vmem:[%s5 + $0xc0] sm:$0xf]
  %v4735 = vld [vmem:[%s5 + $0xc4] sm:$0xf]
  %v4736 = vld [vmem:[%s5 + $0xc8] sm:$0xf]
  %v4737 = vld [vmem:[%s5 + $0xcc] sm:$0xf]
  %v4738 = vld [vmem:[%s5 + $0xd0] sm:$0xf]
  %v4739 = vld [vmem:[%s5 + $0xd4] sm:$0xf]
  %v4740 = vld [vmem:[%s5 + $0xd8] sm:$0xf]
  %v4741 = vld [vmem:[%s5 + $0xdc] sm:$0xf]
  %v4742 = vld [vmem:[%s5 + $0xe0] sm:$0xf]
  %v4743 = vld [vmem:[%s5 + $0xe4] sm:$0xf]
  %v4744 = vld [vmem:[%s5 + $0xe8] sm:$0xf]
  %v4745 = vld [vmem:[%s5 + $0xec] sm:$0xf]
  %v4746 = vld [vmem:[%s5 + $0xf0] sm:$0xf]
  %v4747 = vld [vmem:[%s5 + $0xf4] sm:$0xf]
  %v4748 = vld [vmem:[%s5 + $0xf8] sm:$0xf]
  %v4749 = vld [vmem:[%s5 + $0xfc] sm:$0xf]
  %v4750 = vld [vmem:[%s5 + $0x100] sm:$0xf]
  %v4751 = vld [vmem:[%s5 + $0x104] sm:$0xf]
  %v4752 = vld [vmem:[%s5 + $0x108] sm:$0xf]
  %v4753 = vld [vmem:[%s5 + $0x10c] sm:$0xf]
  %v4754 = vld [vmem:[%s5 + $0x110] sm:$0xf]
  %v4755 = vld [vmem:[%s5 + $0x114] sm:$0xf]
  %v4756 = vld [vmem:[%s5 + $0x118] sm:$0xf]
  %v4757 = vld [vmem:[%s5 + $0x11c] sm:$0xf]
  %v4758 = vld [vmem:[%s5 + $0x120] sm:$0xf]
  %v4759 = vld [vmem:[%s5 + $0x124] sm:$0xf]
  %v4760 = vld [vmem:[%s5 + $0x128] sm:$0xf]
  %v4761 = vld [vmem:[%s5 + $0x12c] sm:$0xf]
  %v4762 = vld [vmem:[%s5 + $0x130] sm:$0xf]
  %v4763 = vld [vmem:[%s5 + $0x134] sm:$0xf]
  %v4764 = vld [vmem:[%s5 + $0x138] sm:$0xf]
  %v4765 = vld [vmem:[%s5 + $0x13c] sm:$0xf]
  %v4766 = vld [vmem:[%s5 + $0x140] sm:$0xf]
  %v4767 = vld [vmem:[%s5 + $0x144] sm:$0xf]
  %v4768 = vld [vmem:[%s5 + $0x148] sm:$0xf]
  %v4769 = vld [vmem:[%s5 + $0x14c] sm:$0xf]
  %v4770 = vld [vmem:[%s5 + $0x150] sm:$0xf]
  %v4771 = vld [vmem:[%s5 + $0x154] sm:$0xf]
  %v4772 = vld [vmem:[%s5 + $0x158] sm:$0xf]
  %v4773 = vld [vmem:[%s5 + $0x15c] sm:$0xf]
  %v4774 = vld [vmem:[%s5 + $0x160] sm:$0xf]
  %v4775 = vld [vmem:[%s5 + $0x164] sm:$0xf]
  %v4776 = vld [vmem:[%s5 + $0x168] sm:$0xf]
  %v4777 = vld [vmem:[%s5 + $0x16c] sm:$0xf]
  %v4778 = vld [vmem:[%s5 + $0x170] sm:$0xf]
  %v4779 = vld [vmem:[%s5 + $0x174] sm:$0xf]
  %v4780 = vld [vmem:[%s5 + $0x178] sm:$0xf]
  %v4781 = vld [vmem:[%s5 + $0x17c] sm:$0xf]
  %v4782 = vld [vmem:[%s5 + $0x180] sm:$0xf]
  %v4783 = vld [vmem:[%s5 + $0x184] sm:$0xf]
  %v4784 = vld [vmem:[%s5 + $0x188] sm:$0xf]
  %v4785 = vld [vmem:[%s5 + $0x18c] sm:$0xf]
  %v4786 = vld [vmem:[%s5 + $0x190] sm:$0xf]
  %v4787 = vld [vmem:[%s5 + $0x194] sm:$0xf]
  %v4788 = vld [vmem:[%s5 + $0x198] sm:$0xf]
  %v4789 = vld [vmem:[%s5 + $0x19c] sm:$0xf]
  %v4790 = vld [vmem:[%s5 + $0x1a0] sm:$0xf]
  %v4791 = vld [vmem:[%s5 + $0x1a4] sm:$0xf]
  %v4792 = vld [vmem:[%s5 + $0x1a8] sm:$0xf]
  %v4793 = vld [vmem:[%s5 + $0x1ac] sm:$0xf]
  %v4794 = vld [vmem:[%s5 + $0x1b0] sm:$0xf]
  %v4795 = vld [vmem:[%s5 + $0x1b4] sm:$0xf]
  %v4796 = vld [vmem:[%s5 + $0x1b8] sm:$0xf]
  %v4797 = vld [vmem:[%s5 + $0x1bc] sm:$0xf]
  %v4798 = vld [vmem:[%s5 + $0x1c0] sm:$0xf]
  %v4799 = vld [vmem:[%s5 + $0x1c4] sm:$0xf]
  %v4800 = vld [vmem:[%s5 + $0x1c8] sm:$0xf]
  %v4801 = vld [vmem:[%s5 + $0x1cc] sm:$0xf]
  %v4802 = vld [vmem:[%s5 + $0x1d0] sm:$0xf]
  %v4803 = vld [vmem:[%s5 + $0x1d4] sm:$0xf]
  %v4804 = vld [vmem:[%s5 + $0x1d8] sm:$0xf]
  %v4805 = vld [vmem:[%s5 + $0x1dc] sm:$0xf]
  %v4806 = vld [vmem:[%s5 + $0x1e0] sm:$0xf]
  %v4807 = vld [vmem:[%s5 + $0x1e4] sm:$0xf]
  %v4808 = vld [vmem:[%s5 + $0x1e8] sm:$0xf]
  %v4809 = vld [vmem:[%s5 + $0x1ec] sm:$0xf]
  %v4810 = vld [vmem:[%s5 + $0x1f0] sm:$0xf]
  %v4811 = vld [vmem:[%s5 + $0x1f4] sm:$0xf]
  %v4812 = vld [vmem:[%s5 + $0x1f8] sm:$0xf]
  %v4813 = vld [vmem:[%s5 + $0x1fc] sm:$0xf]
  %v4814 = vld [vmem:[%s5 + $0x200] sm:$0xf]
  %v4815 = vld [vmem:[%s5 + $0x204] sm:$0xf]
  %v4816 = vld [vmem:[%s5 + $0x208] sm:$0xf]
  %v4817 = vld [vmem:[%s5 + $0x20c] sm:$0xf]
  %v4818 = vld [vmem:[%s5 + $0x210] sm:$0xf]
  %v4819 = vld [vmem:[%s5 + $0x214] sm:$0xf]
  %v4820 = vld [vmem:[%s5 + $0x218] sm:$0xf]
  %v4821 = vld [vmem:[%s5 + $0x21c] sm:$0xf]
  %v4822 = vld [vmem:[%s5 + $0x220] sm:$0xf]
  %v4823 = vld [vmem:[%s5 + $0x224] sm:$0xf]
  %v4824 = vld [vmem:[%s5 + $0x228] sm:$0xf]
  %v4825 = vld [vmem:[%s5 + $0x22c] sm:$0xf]
  %v4826 = vld [vmem:[%s5 + $0x230] sm:$0xf]
  %v4827 = vld [vmem:[%s5 + $0x234] sm:$0xf]
  %v4828 = vld [vmem:[%s5 + $0x238] sm:$0xf]
  %v4829 = vld [vmem:[%s5 + $0x23c] sm:$0xf]
  %v4830 = vld [vmem:[%s5 + $0x240] sm:$0xf]
  %v4831 = vld [vmem:[%s5 + $0x244] sm:$0xf]
  %v4832 = vld [vmem:[%s5 + $0x248] sm:$0xf]
  %v4833 = vld [vmem:[%s5 + $0x24c] sm:$0xf]
  %v4834 = vld [vmem:[%s5 + $0x250] sm:$0xf]
  %v4835 = vld [vmem:[%s5 + $0x254] sm:$0xf]
  %v4836 = vld [vmem:[%s5 + $0x258] sm:$0xf]
  %v4837 = vld [vmem:[%s5 + $0x25c] sm:$0xf]
  %v4838 = vld [vmem:[%s5 + $0x260] sm:$0xf]
  %v4839 = vld [vmem:[%s5 + $0x264] sm:$0xf]
  %v4840 = vld [vmem:[%s5 + $0x268] sm:$0xf]
  %v4841 = vld [vmem:[%s5 + $0x26c] sm:$0xf]
  %v4842 = vld [vmem:[%s5 + $0x270] sm:$0xf]
  %v4843 = vld [vmem:[%s5 + $0x274] sm:$0xf]
  %v4844 = vld [vmem:[%s5 + $0x278] sm:$0xf]
  %v4845 = vld [vmem:[%s5 + $0x27c] sm:$0xf]
  %v4846 = vld [vmem:[%s5 + $0x280] sm:$0xf]
  %v4847 = vld [vmem:[%s5 + $0x284] sm:$0xf]
  %v4848 = vld [vmem:[%s5 + $0x288] sm:$0xf]
  %v4849 = vld [vmem:[%s5 + $0x28c] sm:$0xf]
  %v4850 = vld [vmem:[%s5 + $0x290] sm:$0xf]
  %v4851 = vld [vmem:[%s5 + $0x294] sm:$0xf]
  %v4852 = vld [vmem:[%s5 + $0x298] sm:$0xf]
  %v4853 = vld [vmem:[%s5 + $0x29c] sm:$0xf]
  %v4854 = vld [vmem:[%s5 + $0x2a0] sm:$0xf]
  %v4855 = vld [vmem:[%s5 + $0x2a4] sm:$0xf]
  %v4856 = vld [vmem:[%s5 + $0x2a8] sm:$0xf]
  %v4857 = vld [vmem:[%s5 + $0x2ac] sm:$0xf]
  %v4858 = vld [vmem:[%s5 + $0x2b0] sm:$0xf]
  %v4859 = vld [vmem:[%s5 + $0x2b4] sm:$0xf]
  %v4860 = vld [vmem:[%s5 + $0x2b8] sm:$0xf]
  %v4861 = vld [vmem:[%s5 + $0x2bc] sm:$0xf]
  %v4862 = vld [vmem:[%s5 + $0x2c0] sm:$0xf]
  %v4863 = vld [vmem:[%s5 + $0x2c4] sm:$0xf]
  %v4864 = vld [vmem:[%s5 + $0x2c8] sm:$0xf]
  %v4865 = vld [vmem:[%s5 + $0x2cc] sm:$0xf]
  %v4866 = vld [vmem:[%s5 + $0x2d0] sm:$0xf]
  %v4867 = vld [vmem:[%s5 + $0x2d4] sm:$0xf]
  %v4868 = vld [vmem:[%s5 + $0x2d8] sm:$0xf]
  %v4869 = vld [vmem:[%s5 + $0x2dc] sm:$0xf]
  %v4870 = vld [vmem:[%s5 + $0x2e0] sm:$0xf]
  %v4871 = vld [vmem:[%s5 + $0x2e4] sm:$0xf]
  %v4872 = vld [vmem:[%s5 + $0x2e8] sm:$0xf]
  %v4873 = vld [vmem:[%s5 + $0x2ec] sm:$0xf]
  %v4874 = vld [vmem:[%s5 + $0x2f0] sm:$0xf]
  %v4875 = vld [vmem:[%s5 + $0x2f4] sm:$0xf]
  %v4876 = vld [vmem:[%s5 + $0x2f8] sm:$0xf]
  %v4877 = vld [vmem:[%s5 + $0x2fc] sm:$0xf]
  %v4878 = vld [vmem:[%s5 + $0x300] sm:$0xf]
  %v4879 = vld [vmem:[%s5 + $0x304] sm:$0xf]
  %v4880 = vld [vmem:[%s5 + $0x308] sm:$0xf]
  %v4881 = vld [vmem:[%s5 + $0x30c] sm:$0xf]
  %v4882 = vld [vmem:[%s5 + $0x310] sm:$0xf]
  %v4883 = vld [vmem:[%s5 + $0x314] sm:$0xf]
  %v4884 = vld [vmem:[%s5 + $0x318] sm:$0xf]
  %v4885 = vld [vmem:[%s5 + $0x31c] sm:$0xf]
  %v4886 = vld [vmem:[%s5 + $0x320] sm:$0xf]
  %v4887 = vld [vmem:[%s5 + $0x324] sm:$0xf]
  %v4888 = vld [vmem:[%s5 + $0x328] sm:$0xf]
  %v4889 = vld [vmem:[%s5 + $0x32c] sm:$0xf]
  %v4890 = vld [vmem:[%s5 + $0x330] sm:$0xf]
  %v4891 = vld [vmem:[%s5 + $0x334] sm:$0xf]
  %v4892 = vld [vmem:[%s5 + $0x338] sm:$0xf]
  %v4893 = vld [vmem:[%s5 + $0x33c] sm:$0xf]
  %v4894 = vld [vmem:[%s5 + $0x340] sm:$0xf]
  %v4895 = vld [vmem:[%s5 + $0x344] sm:$0xf]
  %v4896 = vld [vmem:[%s5 + $0x348] sm:$0xf]
  %v4897 = vld [vmem:[%s5 + $0x34c] sm:$0xf]
  %v4898 = vld [vmem:[%s5 + $0x350] sm:$0xf]
  %v4899 = vld [vmem:[%s5 + $0x354] sm:$0xf]
  %v4900 = vld [vmem:[%s5 + $0x358] sm:$0xf]
  %v4901 = vld [vmem:[%s5 + $0x35c] sm:$0xf]
  %v4902 = vld [vmem:[%s5 + $0x360] sm:$0xf]
  %v4903 = vld [vmem:[%s5 + $0x364] sm:$0xf]
  %v4904 = vld [vmem:[%s5 + $0x368] sm:$0xf]
  %v4905 = vld [vmem:[%s5 + $0x36c] sm:$0xf]
  %v4906 = vld [vmem:[%s5 + $0x370] sm:$0xf]
  %v4907 = vld [vmem:[%s5 + $0x374] sm:$0xf]
  %v4908 = vld [vmem:[%s5 + $0x378] sm:$0xf]
  %v4909 = vld [vmem:[%s5 + $0x37c] sm:$0xf]
  %v4910 = vld [vmem:[%s5 + $0x380] sm:$0xf]
  %v4911 = vld [vmem:[%s5 + $0x384] sm:$0xf]
  %v4912 = vld [vmem:[%s5 + $0x388] sm:$0xf]
  %v4913 = vld [vmem:[%s5 + $0x38c] sm:$0xf]
  %v4914 = vld [vmem:[%s5 + $0x390] sm:$0xf]
  %v4915 = vld [vmem:[%s5 + $0x394] sm:$0xf]
  %v4916 = vld [vmem:[%s5 + $0x398] sm:$0xf]
  %v4917 = vld [vmem:[%s5 + $0x39c] sm:$0xf]
  %v4918 = vld [vmem:[%s5 + $0x3a0] sm:$0xf]
  %v4919 = vld [vmem:[%s5 + $0x3a4] sm:$0xf]
  %v4920 = vld [vmem:[%s5 + $0x3a8] sm:$0xf]
  %v4921 = vld [vmem:[%s5 + $0x3ac] sm:$0xf]
  %v4922 = vld [vmem:[%s5 + $0x3b0] sm:$0xf]
  %v4923 = vld [vmem:[%s5 + $0x3b4] sm:$0xf]
  %v4924 = vld [vmem:[%s5 + $0x3b8] sm:$0xf]
  %v4925 = vld [vmem:[%s5 + $0x3bc] sm:$0xf]
  %v4926 = vld [vmem:[%s5 + $0x3c0] sm:$0xf]
  %v4927 = vld [vmem:[%s5 + $0x3c4] sm:$0xf]
  %v4928 = vld [vmem:[%s5 + $0x3c8] sm:$0xf]
  %v4929 = vld [vmem:[%s5 + $0x3cc] sm:$0xf]
  %v4930 = vld [vmem:[%s5 + $0x3d0] sm:$0xf]
  %v4931 = vld [vmem:[%s5 + $0x3d4] sm:$0xf]
  %v4932 = vld [vmem:[%s5 + $0x3d8] sm:$0xf]
  %v4933 = vld [vmem:[%s5 + $0x3dc] sm:$0xf]
  %v4934 = vld [vmem:[%s5 + $0x3e0] sm:$0xf]
  %v4935 = vld [vmem:[%s5 + $0x3e4] sm:$0xf]
  %v4936 = vld [vmem:[%s5 + $0x3e8] sm:$0xf]
  %v4937 = vld [vmem:[%s5 + $0x3ec] sm:$0xf]
  %v4938 = vld [vmem:[%s5 + $0x3f0] sm:$0xf]
  %v4939 = vld [vmem:[%s5 + $0x3f4] sm:$0xf]
  %v4940 = vld [vmem:[%s5 + $0x3f8] sm:$0xf]
  %v4941 = vld [vmem:[%s5 + $0x3fc] sm:$0xf]
  %v4942 = vld [vmem:[%s5 + $0x400] sm:$0xf]
  %v4943 = vld [vmem:[%s5 + $0x404] sm:$0xf]
  %v4944 = vld [vmem:[%s5 + $0x408] sm:$0xf]
  %v4945 = vld [vmem:[%s5 + $0x40c] sm:$0xf]
  %v4946 = vld [vmem:[%s5 + $0x410] sm:$0xf]
  %v4947 = vld [vmem:[%s5 + $0x414] sm:$0xf]
  %v4948 = vld [vmem:[%s5 + $0x418] sm:$0xf]
  %v4949 = vld [vmem:[%s5 + $0x41c] sm:$0xf]
  %v4950 = vld [vmem:[%s5 + $0x420] sm:$0xf]
  %v4951 = vld [vmem:[%s5 + $0x424] sm:$0xf]
  %v4952 = vld [vmem:[%s5 + $0x428] sm:$0xf]
  %v4953 = vld [vmem:[%s5 + $0x42c] sm:$0xf]
  %v4954 = vld [vmem:[%s5 + $0x430] sm:$0xf]
  %v4955 = vld [vmem:[%s5 + $0x434] sm:$0xf]
  %v4956 = vld [vmem:[%s5 + $0x438] sm:$0xf]
  %v4957 = vld [vmem:[%s5 + $0x43c] sm:$0xf]
  %v4958 = vld [vmem:[%s5 + $0x440] sm:$0xf]
  %v4959 = vld [vmem:[%s5 + $0x444] sm:$0xf]
  %v4960 = vld [vmem:[%s5 + $0x448] sm:$0xf]
  %v4961 = vld [vmem:[%s5 + $0x44c] sm:$0xf]
  %v4962 = vld [vmem:[%s5 + $0x450] sm:$0xf]
  %v4963 = vld [vmem:[%s5 + $0x454] sm:$0xf]
  %v4964 = vld [vmem:[%s5 + $0x458] sm:$0xf]
  %v4965 = vld [vmem:[%s5 + $0x45c] sm:$0xf]
  %v4966 = vld [vmem:[%s5 + $0x460] sm:$0xf]
  %v4967 = vld [vmem:[%s5 + $0x464] sm:$0xf]
  %v4968 = vld [vmem:[%s5 + $0x468] sm:$0xf]
  %v4969 = vld [vmem:[%s5 + $0x46c] sm:$0xf]
  %v4970 = vld [vmem:[%s5 + $0x470] sm:$0xf]
  %v4971 = vld [vmem:[%s5 + $0x474] sm:$0xf]
  %v4972 = vld [vmem:[%s5 + $0x478] sm:$0xf]
  %v4973 = vld [vmem:[%s5 + $0x47c] sm:$0xf]
  %v4974 = vld [vmem:[%s6] sm:$0x1]
  %v4976 = vlaneseq
  %v4977 = vshrl.u32 %v4976, 7
  %v4978 = vsub.s32 0, %v4977
  %v4979 = vrot.slane %v4974, %v4978
  %v5269 = vunpack.c.l.b16 %v4686
  %v5270 = vunpack.c.l.b16 %v4687
  %v5271 = vunpack.c.l.b16 %v4688
  %v5272 = vunpack.c.l.b16 %v4689
  %v5273 = vunpack.c.l.b16 %v4690
  %v5274 = vunpack.c.l.b16 %v4691
  %v5275 = vunpack.c.l.b16 %v4692
  %v5276 = vunpack.c.l.b16 %v4693
  %v5277 = vunpack.c.l.b16 %v4694
  %v5278 = vunpack.c.l.b16 %v4695
  %v5279 = vunpack.c.l.b16 %v4696
  %v5280 = vunpack.c.l.b16 %v4697
  %v5281 = vunpack.c.l.b16 %v4698
  %v5282 = vunpack.c.l.b16 %v4699
  %v5283 = vunpack.c.l.b16 %v4700
  %v5284 = vunpack.c.l.b16 %v4701
  %v5285 = vunpack.c.l.b16 %v4702
  %v5286 = vunpack.c.l.b16 %v4703
  %v5287 = vunpack.c.l.b16 %v4704
  %v5288 = vunpack.c.l.b16 %v4705
  %v5289 = vunpack.c.l.b16 %v4706
  %v5290 = vunpack.c.l.b16 %v4707
  %v5291 = vunpack.c.l.b16 %v4708
  %v5292 = vunpack.c.l.b16 %v4709
  %v5293 = vunpack.c.l.b16 %v4710
  %v5294 = vunpack.c.l.b16 %v4711
  %v5295 = vunpack.c.l.b16 %v4712
  %v5296 = vunpack.c.l.b16 %v4713
  %v5297 = vunpack.c.l.b16 %v4714
  %v5298 = vunpack.c.l.b16 %v4715
  %v5299 = vunpack.c.l.b16 %v4716
  %v5300 = vunpack.c.l.b16 %v4717
  %v5301 = vunpack.c.l.b16 %v4718
  %v5302 = vunpack.c.l.b16 %v4719
  %v5303 = vunpack.c.l.b16 %v4720
  %v5304 = vunpack.c.l.b16 %v4721
  %v5305 = vunpack.c.l.b16 %v4722
  %v5306 = vunpack.c.l.b16 %v4723
  %v5307 = vunpack.c.l.b16 %v4724
  %v5308 = vunpack.c.l.b16 %v4725
  %v5309 = vunpack.c.l.b16 %v4726
  %v5310 = vunpack.c.l.b16 %v4727
  %v5311 = vunpack.c.l.b16 %v4728
  %v5312 = vunpack.c.l.b16 %v4729
  %v5313 = vunpack.c.l.b16 %v4730
  %v5314 = vunpack.c.l.b16 %v4731
  %v5315 = vunpack.c.l.b16 %v4732
  %v5316 = vunpack.c.l.b16 %v4733
  %v5317 = vunpack.c.l.b16 %v4734
  %v5318 = vunpack.c.l.b16 %v4735
  %v5319 = vunpack.c.l.b16 %v4736
  %v5320 = vunpack.c.l.b16 %v4737
  %v5321 = vunpack.c.l.b16 %v4738
  %v5322 = vunpack.c.l.b16 %v4739
  %v5323 = vunpack.c.l.b16 %v4740
  %v5324 = vunpack.c.l.b16 %v4741
  %v5325 = vunpack.c.l.b16 %v4742
  %v5326 = vunpack.c.l.b16 %v4743
  %v5327 = vunpack.c.l.b16 %v4744
  %v5328 = vunpack.c.l.b16 %v4745
  %v5329 = vunpack.c.l.b16 %v4746
  %v5330 = vunpack.c.l.b16 %v4747
  %v5331 = vunpack.c.l.b16 %v4748
  %v5332 = vunpack.c.l.b16 %v4749
  %v5333 = vunpack.c.l.b16 %v4750
  %v5334 = vunpack.c.l.b16 %v4751
  %v5335 = vunpack.c.l.b16 %v4752
  %v5336 = vunpack.c.l.b16 %v4753
  %v5337 = vunpack.c.l.b16 %v4754
  %v5338 = vunpack.c.l.b16 %v4755
  %v5339 = vunpack.c.l.b16 %v4756
  %v5340 = vunpack.c.l.b16 %v4757
  %v5341 = vunpack.c.l.b16 %v4758
  %v5342 = vunpack.c.l.b16 %v4759
  %v5343 = vunpack.c.l.b16 %v4760
  %v5344 = vunpack.c.l.b16 %v4761
  %v5345 = vunpack.c.l.b16 %v4762
  %v5346 = vunpack.c.l.b16 %v4763
  %v5347 = vunpack.c.l.b16 %v4764
  %v5348 = vunpack.c.l.b16 %v4765
  %v5349 = vunpack.c.l.b16 %v4766
  %v5350 = vunpack.c.l.b16 %v4767
  %v5351 = vunpack.c.l.b16 %v4768
  %v5352 = vunpack.c.l.b16 %v4769
  %v5353 = vunpack.c.l.b16 %v4770
  %v5354 = vunpack.c.l.b16 %v4771
  %v5355 = vunpack.c.l.b16 %v4772
  %v5356 = vunpack.c.l.b16 %v4773
  %v5357 = vunpack.c.l.b16 %v4774
  %v5358 = vunpack.c.l.b16 %v4775
  %v5359 = vunpack.c.l.b16 %v4776
  %v5360 = vunpack.c.l.b16 %v4777
  %v5361 = vunpack.c.l.b16 %v4778
  %v5362 = vunpack.c.l.b16 %v4779
  %v5363 = vunpack.c.l.b16 %v4780
  %v5364 = vunpack.c.l.b16 %v4781
  %v5365 = vunpack.c.l.b16 %v4782
  %v5366 = vunpack.c.l.b16 %v4783
  %v5367 = vunpack.c.l.b16 %v4784
  %v5368 = vunpack.c.l.b16 %v4785
  %v5369 = vunpack.c.l.b16 %v4786
  %v5370 = vunpack.c.l.b16 %v4787
  %v5371 = vunpack.c.l.b16 %v4788
  %v5372 = vunpack.c.l.b16 %v4789
  %v5373 = vunpack.c.l.b16 %v4790
  %v5374 = vunpack.c.l.b16 %v4791
  %v5375 = vunpack.c.l.b16 %v4792
  %v5376 = vunpack.c.l.b16 %v4793
  %v5377 = vunpack.c.l.b16 %v4794
  %v5378 = vunpack.c.l.b16 %v4795
  %v5379 = vunpack.c.l.b16 %v4796
  %v5380 = vunpack.c.l.b16 %v4797
  %v5381 = vunpack.c.l.b16 %v4798
  %v5382 = vunpack.c.l.b16 %v4799
  %v5383 = vunpack.c.l.b16 %v4800
  %v5384 = vunpack.c.l.b16 %v4801
  %v5385 = vunpack.c.l.b16 %v4802
  %v5386 = vunpack.c.l.b16 %v4803
  %v5387 = vunpack.c.l.b16 %v4804
  %v5388 = vunpack.c.l.b16 %v4805
  %v5389 = vunpack.c.l.b16 %v4806
  %v5390 = vunpack.c.l.b16 %v4807
  %v5391 = vunpack.c.l.b16 %v4808
  %v5392 = vunpack.c.l.b16 %v4809
  %v5393 = vunpack.c.l.b16 %v4810
  %v5394 = vunpack.c.l.b16 %v4811
  %v5395 = vunpack.c.l.b16 %v4812
  %v5396 = vunpack.c.l.b16 %v4813
  %v5397 = vunpack.c.l.b16 %v4814
  %v5398 = vunpack.c.l.b16 %v4815
  %v5399 = vunpack.c.l.b16 %v4816
  %v5400 = vunpack.c.l.b16 %v4817
  %v5401 = vunpack.c.l.b16 %v4818
  %v5402 = vunpack.c.l.b16 %v4819
  %v5403 = vunpack.c.l.b16 %v4820
  %v5404 = vunpack.c.l.b16 %v4821
  %v5405 = vunpack.c.l.b16 %v4822
  %v5406 = vunpack.c.l.b16 %v4823
  %v5407 = vunpack.c.l.b16 %v4824
  %v5408 = vunpack.c.l.b16 %v4825
  %v5409 = vunpack.c.l.b16 %v4826
  %v5410 = vunpack.c.l.b16 %v4827
  %v5411 = vunpack.c.l.b16 %v4828
  %v5412 = vunpack.c.l.b16 %v4829
  %v5413 = vunpack.c.l.b16 %v4830
  %v5414 = vunpack.c.l.b16 %v4831
  %v5415 = vunpack.c.l.b16 %v4832
  %v5416 = vunpack.c.l.b16 %v4833
  %v5417 = vunpack.c.l.b16 %v4834
  %v5418 = vunpack.c.l.b16 %v4835
  %v5419 = vunpack.c.l.b16 %v4836
  %v5420 = vunpack.c.l.b16 %v4837
  %v5421 = vunpack.c.l.b16 %v4838
  %v5422 = vunpack.c.l.b16 %v4839
  %v5423 = vunpack.c.l.b16 %v4840
  %v5424 = vunpack.c.l.b16 %v4841
  %v5425 = vunpack.c.l.b16 %v4842
  %v5426 = vunpack.c.l.b16 %v4843
  %v5427 = vunpack.c.l.b16 %v4844
  %v5428 = vunpack.c.l.b16 %v4845
  %v5429 = vunpack.c.l.b16 %v4846
  %v5430 = vunpack.c.l.b16 %v4847
  %v5431 = vunpack.c.l.b16 %v4848
  %v5432 = vunpack.c.l.b16 %v4849
  %v5433 = vunpack.c.l.b16 %v4850
  %v5434 = vunpack.c.l.b16 %v4851
  %v5435 = vunpack.c.l.b16 %v4852
  %v5436 = vunpack.c.l.b16 %v4853
  %v5437 = vunpack.c.l.b16 %v4854
  %v5438 = vunpack.c.l.b16 %v4855
  %v5439 = vunpack.c.l.b16 %v4856
  %v5440 = vunpack.c.l.b16 %v4857
  %v5441 = vunpack.c.l.b16 %v4858
  %v5442 = vunpack.c.l.b16 %v4859
  %v5443 = vunpack.c.l.b16 %v4860
  %v5444 = vunpack.c.l.b16 %v4861
  %v5445 = vunpack.c.l.b16 %v4862
  %v5446 = vunpack.c.l.b16 %v4863
  %v5447 = vunpack.c.l.b16 %v4864
  %v5448 = vunpack.c.l.b16 %v4865
  %v5449 = vunpack.c.l.b16 %v4866
  %v5450 = vunpack.c.l.b16 %v4867
  %v5451 = vunpack.c.l.b16 %v4868
  %v5452 = vunpack.c.l.b16 %v4869
  %v5453 = vunpack.c.l.b16 %v4870
  %v5454 = vunpack.c.l.b16 %v4871
  %v5455 = vunpack.c.l.b16 %v4872
  %v5456 = vunpack.c.l.b16 %v4873
  %v5457 = vunpack.c.l.b16 %v4874
  %v5458 = vunpack.c.l.b16 %v4875
  %v5459 = vunpack.c.l.b16 %v4876
  %v5460 = vunpack.c.l.b16 %v4877
  %v5461 = vunpack.c.l.b16 %v4878
  %v5462 = vunpack.c.l.b16 %v4879
  %v5463 = vunpack.c.l.b16 %v4880
  %v5464 = vunpack.c.l.b16 %v4881
  %v5465 = vunpack.c.l.b16 %v4882
  %v5466 = vunpack.c.l.b16 %v4883
  %v5467 = vunpack.c.l.b16 %v4884
  %v5468 = vunpack.c.l.b16 %v4885
  %v5469 = vunpack.c.l.b16 %v4886
  %v5470 = vunpack.c.l.b16 %v4887
  %v5471 = vunpack.c.l.b16 %v4888
  %v5472 = vunpack.c.l.b16 %v4889
  %v5473 = vunpack.c.l.b16 %v4890
  %v5474 = vunpack.c.l.b16 %v4891
  %v5475 = vunpack.c.l.b16 %v4892
  %v5476 = vunpack.c.l.b16 %v4893
  %v5477 = vunpack.c.l.b16 %v4894
  %v5478 = vunpack.c.l.b16 %v4895
  %v5479 = vunpack.c.l.b16 %v4896
  %v5480 = vunpack.c.l.b16 %v4897
  %v5481 = vunpack.c.l.b16 %v4898
  %v5482 = vunpack.c.l.b16 %v4899
  %v5483 = vunpack.c.l.b16 %v4900
  %v5484 = vunpack.c.l.b16 %v4901
  %v5485 = vunpack.c.l.b16 %v4902
  %v5486 = vunpack.c.l.b16 %v4903
  %v5487 = vunpack.c.l.b16 %v4904
  %v5488 = vunpack.c.l.b16 %v4905
  %v5489 = vunpack.c.l.b16 %v4906
  %v5490 = vunpack.c.l.b16 %v4907
  %v5491 = vunpack.c.l.b16 %v4908
  %v5492 = vunpack.c.l.b16 %v4909
  %v5493 = vunpack.c.l.b16 %v4910
  %v5494 = vunpack.c.l.b16 %v4911
  %v5495 = vunpack.c.l.b16 %v4912
  %v5496 = vunpack.c.l.b16 %v4913
  %v5497 = vunpack.c.l.b16 %v4914
  %v5498 = vunpack.c.l.b16 %v4915
  %v5499 = vunpack.c.l.b16 %v4916
  %v5500 = vunpack.c.l.b16 %v4917
  %v5501 = vunpack.c.l.b16 %v4918
  %v5502 = vunpack.c.l.b16 %v4919
  %v5503 = vunpack.c.l.b16 %v4920
  %v5504 = vunpack.c.l.b16 %v4921
  %v5505 = vunpack.c.l.b16 %v4922
  %v5506 = vunpack.c.l.b16 %v4923
  %v5507 = vunpack.c.l.b16 %v4924
  %v5508 = vunpack.c.l.b16 %v4925
  %v5509 = vunpack.c.l.b16 %v4926
  %v5510 = vunpack.c.l.b16 %v4927
  %v5511 = vunpack.c.l.b16 %v4928
  %v5512 = vunpack.c.l.b16 %v4929
  %v5513 = vunpack.c.l.b16 %v4930
  %v5514 = vunpack.c.l.b16 %v4931
  %v5515 = vunpack.c.l.b16 %v4932
  %v5516 = vunpack.c.l.b16 %v4933
  %v5517 = vunpack.c.l.b16 %v4934
  %v5518 = vunpack.c.l.b16 %v4935
  %v5519 = vunpack.c.l.b16 %v4936
  %v5520 = vunpack.c.l.b16 %v4937
  %v5521 = vunpack.c.l.b16 %v4938
  %v5522 = vunpack.c.l.b16 %v4939
  %v5523 = vunpack.c.l.b16 %v4940
  %v5524 = vunpack.c.l.b16 %v4941
  %v5525 = vunpack.c.l.b16 %v4942
  %v5526 = vunpack.c.l.b16 %v4943
  %v5527 = vunpack.c.l.b16 %v4944
  %v5528 = vunpack.c.l.b16 %v4945
  %v5529 = vunpack.c.l.b16 %v4946
  %v5530 = vunpack.c.l.b16 %v4947
  %v5531 = vunpack.c.l.b16 %v4948
  %v5532 = vunpack.c.l.b16 %v4949
  %v5533 = vunpack.c.l.b16 %v4950
  %v5534 = vunpack.c.l.b16 %v4951
  %v5535 = vunpack.c.l.b16 %v4952
  %v5536 = vunpack.c.l.b16 %v4953
  %v5537 = vunpack.c.l.b16 %v4954
  %v5538 = vunpack.c.l.b16 %v4955
  %v5539 = vunpack.c.l.b16 %v4956
  %v5540 = vunpack.c.l.b16 %v4957
  %v5541 = vunpack.c.l.b16 %v4958
  %v5542 = vunpack.c.l.b16 %v4959
  %v5543 = vunpack.c.l.b16 %v4960
  %v5544 = vunpack.c.l.b16 %v4961
  %v5545 = vunpack.c.l.b16 %v4962
  %v5546 = vunpack.c.l.b16 %v4963
  %v5547 = vunpack.c.l.b16 %v4964
  %v5548 = vunpack.c.l.b16 %v4965
  %v5549 = vunpack.c.l.b16 %v4966
  %v5550 = vunpack.c.l.b16 %v4967
  %v5551 = vunpack.c.l.b16 %v4968
  %v5552 = vunpack.c.l.b16 %v4969
  %v5553 = vunpack.c.l.b16 %v4970
  %v5554 = vunpack.c.l.b16 %v4971
  %v5555 = vunpack.c.l.b16 %v4972
  %v5556 = vunpack.c.l.b16 %v4973
  %v5557 = vpack.c.b16 %v5270, %v5269
  %v5558 = vpack.c.b16 %v5272, %v5271
  %v5559 = vpack.c.b16 %v5274, %v5273
  %v5560 = vpack.c.b16 %v5276, %v5275
  %v5561 = vpack.c.b16 %v5278, %v5277
  %v5562 = vpack.c.b16 %v5280, %v5279
  %v5563 = vpack.c.b16 %v5282, %v5281
  %v5564 = vpack.c.b16 %v5284, %v5283
  %v5565 = vpack.c.b16 %v5286, %v5285
  %v5566 = vpack.c.b16 %v5288, %v5287
  %v5567 = vpack.c.b16 %v5290, %v5289
  %v5568 = vpack.c.b16 %v5292, %v5291
  %v5569 = vpack.c.b16 %v5294, %v5293
  %v5570 = vpack.c.b16 %v5296, %v5295
  %v5571 = vpack.c.b16 %v5298, %v5297
  %v5572 = vpack.c.b16 %v5300, %v5299
  %v5573 = vpack.c.b16 %v5302, %v5301
  %v5574 = vpack.c.b16 %v5304, %v5303
  %v5575 = vpack.c.b16 %v5306, %v5305
  %v5576 = vpack.c.b16 %v5308, %v5307
  %v5577 = vpack.c.b16 %v5310, %v5309
  %v5578 = vpack.c.b16 %v5312, %v5311
  %v5579 = vpack.c.b16 %v5314, %v5313
  %v5580 = vpack.c.b16 %v5316, %v5315
  %v5581 = vpack.c.b16 %v5318, %v5317
  %v5582 = vpack.c.b16 %v5320, %v5319
  %v5583 = vpack.c.b16 %v5322, %v5321
  %v5584 = vpack.c.b16 %v5324, %v5323
  %v5585 = vpack.c.b16 %v5326, %v5325
  %v5586 = vpack.c.b16 %v5328, %v5327
  %v5587 = vpack.c.b16 %v5330, %v5329
  %v5588 = vpack.c.b16 %v5332, %v5331
  %v5589 = vpack.c.b16 %v5334, %v5333
  %v5590 = vpack.c.b16 %v5336, %v5335
  %v5591 = vpack.c.b16 %v5338, %v5337
  %v5592 = vpack.c.b16 %v5340, %v5339
  %v5593 = vpack.c.b16 %v5342, %v5341
  %v5594 = vpack.c.b16 %v5344, %v5343
  %v5595 = vpack.c.b16 %v5346, %v5345
  %v5596 = vpack.c.b16 %v5348, %v5347
  %v5597 = vpack.c.b16 %v5350, %v5349
  %v5598 = vpack.c.b16 %v5352, %v5351
  %v5599 = vpack.c.b16 %v5354, %v5353
  %v5600 = vpack.c.b16 %v5356, %v5355
  %v5601 = vpack.c.b16 %v5358, %v5357
  %v5602 = vpack.c.b16 %v5360, %v5359
  %v5603 = vpack.c.b16 %v5362, %v5361
  %v5604 = vpack.c.b16 %v5364, %v5363
  %v5605 = vpack.c.b16 %v5366, %v5365
  %v5606 = vpack.c.b16 %v5368, %v5367
  %v5607 = vpack.c.b16 %v5370, %v5369
  %v5608 = vpack.c.b16 %v5372, %v5371
  %v5609 = vpack.c.b16 %v5374, %v5373
  %v5610 = vpack.c.b16 %v5376, %v5375
  %v5611 = vpack.c.b16 %v5378, %v5377
  %v5612 = vpack.c.b16 %v5380, %v5379
  %v5613 = vpack.c.b16 %v5382, %v5381
  %v5614 = vpack.c.b16 %v5384, %v5383
  %v5615 = vpack.c.b16 %v5386, %v5385
  %v5616 = vpack.c.b16 %v5388, %v5387
  %v5617 = vpack.c.b16 %v5390, %v5389
  %v5618 = vpack.c.b16 %v5392, %v5391
  %v5619 = vpack.c.b16 %v5394, %v5393
  %v5620 = vpack.c.b16 %v5396, %v5395
  %v5621 = vpack.c.b16 %v5398, %v5397
  %v5622 = vpack.c.b16 %v5400, %v5399
  %v5623 = vpack.c.b16 %v5402, %v5401
  %v5624 = vpack.c.b16 %v5404, %v5403
  %v5625 = vpack.c.b16 %v5406, %v5405
  %v5626 = vpack.c.b16 %v5408, %v5407
  %v5627 = vpack.c.b16 %v5410, %v5409
  %v5628 = vpack.c.b16 %v5412, %v5411
  %v5629 = vpack.c.b16 %v5414, %v5413
  %v5630 = vpack.c.b16 %v5416, %v5415
  %v5631 = vpack.c.b16 %v5418, %v5417
  %v5632 = vpack.c.b16 %v5420, %v5419
  %v5633 = vpack.c.b16 %v5422, %v5421
  %v5634 = vpack.c.b16 %v5424, %v5423
  %v5635 = vpack.c.b16 %v5426, %v5425
  %v5636 = vpack.c.b16 %v5428, %v5427
  %v5637 = vpack.c.b16 %v5430, %v5429
  %v5638 = vpack.c.b16 %v5432, %v5431
  %v5639 = vpack.c.b16 %v5434, %v5433
  %v5640 = vpack.c.b16 %v5436, %v5435
  %v5641 = vpack.c.b16 %v5438, %v5437
  %v5642 = vpack.c.b16 %v5440, %v5439
  %v5643 = vpack.c.b16 %v5442, %v5441
  %v5644 = vpack.c.b16 %v5444, %v5443
  %v5645 = vpack.c.b16 %v5446, %v5445
  %v5646 = vpack.c.b16 %v5448, %v5447
  %v5647 = vpack.c.b16 %v5450, %v5449
  %v5648 = vpack.c.b16 %v5452, %v5451
  %v5649 = vpack.c.b16 %v5454, %v5453
  %v5650 = vpack.c.b16 %v5456, %v5455
  %v5651 = vpack.c.b16 %v5458, %v5457
  %v5652 = vpack.c.b16 %v5460, %v5459
  %v5653 = vpack.c.b16 %v5462, %v5461
  %v5654 = vpack.c.b16 %v5464, %v5463
  %v5655 = vpack.c.b16 %v5466, %v5465
  %v5656 = vpack.c.b16 %v5468, %v5467
  %v5657 = vpack.c.b16 %v5470, %v5469
  %v5658 = vpack.c.b16 %v5472, %v5471
  %v5659 = vpack.c.b16 %v5474, %v5473
  %v5660 = vpack.c.b16 %v5476, %v5475
  %v5661 = vpack.c.b16 %v5478, %v5477
  %v5662 = vpack.c.b16 %v5480, %v5479
  %v5663 = vpack.c.b16 %v5482, %v5481
  %v5664 = vpack.c.b16 %v5484, %v5483
  %v5665 = vpack.c.b16 %v5486, %v5485
  %v5666 = vpack.c.b16 %v5488, %v5487
  %v5667 = vpack.c.b16 %v5490, %v5489
  %v5668 = vpack.c.b16 %v5492, %v5491
  %v5669 = vpack.c.b16 %v5494, %v5493
  %v5670 = vpack.c.b16 %v5496, %v5495
  %v5671 = vpack.c.b16 %v5498, %v5497
  %v5672 = vpack.c.b16 %v5500, %v5499
  %v5673 = vpack.c.b16 %v5502, %v5501
  %v5674 = vpack.c.b16 %v5504, %v5503
  %v5675 = vpack.c.b16 %v5506, %v5505
  %v5676 = vpack.c.b16 %v5508, %v5507
  %v5677 = vpack.c.b16 %v5510, %v5509
  %v5678 = vpack.c.b16 %v5512, %v5511
  %v5679 = vpack.c.b16 %v5514, %v5513
  %v5680 = vpack.c.b16 %v5516, %v5515
  %v5681 = vpack.c.b16 %v5518, %v5517
  %v5682 = vpack.c.b16 %v5520, %v5519
  %v5683 = vpack.c.b16 %v5522, %v5521
  %v5684 = vpack.c.b16 %v5524, %v5523
  %v5685 = vpack.c.b16 %v5526, %v5525
  %v5686 = vpack.c.b16 %v5528, %v5527
  %v5687 = vpack.c.b16 %v5530, %v5529
  %v5688 = vpack.c.b16 %v5532, %v5531
  %v5689 = vpack.c.b16 %v5534, %v5533
  %v5690 = vpack.c.b16 %v5536, %v5535
  %v5691 = vpack.c.b16 %v5538, %v5537
  %v5692 = vpack.c.b16 %v5540, %v5539
  %v5693 = vpack.c.b16 %v5542, %v5541
  %v5694 = vpack.c.b16 %v5544, %v5543
  %v5695 = vpack.c.b16 %v5546, %v5545
  %v5696 = vpack.c.b16 %v5548, %v5547
  %v5697 = vpack.c.b16 %v5550, %v5549
  %v5698 = vpack.c.b16 %v5552, %v5551
  %v5699 = vpack.c.b16 %v5554, %v5553
  %v5700 = vpack.c.b16 %v5556, %v5555
  %5845 = vmatprep.subr.bf16.mxu0 0
  %5846 = vmatpush1.bf16.msra.mxu0 %v5564
  %5847 = vmatprep.subr.bf16.mxu0 0
  %5848 = vmatpush1.bf16.msra.mxu0 %v5563
  %5849 = vmatprep.subr.bf16.mxu0 0
  %5850 = vmatpush1.bf16.msra.mxu0 %v5562
  %5851 = vmatprep.subr.bf16.mxu0 0
  %5852 = vmatpush1.bf16.msra.mxu0 %v5561
  %5853 = vmatprep.subr.bf16.mxu0 0
  %5854 = vmatpush1.bf16.msra.mxu0 %v5560
  %5855 = vmatprep.subr.bf16.mxu0 0
  %5856 = vmatpush1.bf16.msra.mxu0 %v5559
  %5857 = vmatprep.subr.bf16.mxu0 0
  %5858 = vmatpush1.bf16.msra.mxu0 %v5558
  %5859 = vmatprep.subr.bf16.mxu0 0
  %5860 = vmatpush1.bf16.msra.mxu0 %v5557
  %5861 = vmatprep.subr.bf16.mxu0 0
  %5862 = vmatpush2.bf16.msra.mxu0 %v5572
  %5863 = vmatprep.subr.bf16.mxu0 0
  %5864 = vmatpush2.bf16.msra.mxu0 %v5571
  %5865 = vmatprep.subr.bf16.mxu0 0
  %5866 = vmatpush2.bf16.msra.mxu0 %v5570
  %5867 = vmatprep.subr.bf16.mxu0 0
  %5868 = vmatpush2.bf16.msra.mxu0 %v5569
  %5869 = vmatprep.subr.bf16.mxu0 0
  %5870 = vmatpush2.bf16.msra.mxu0 %v5568
  %5871 = vmatprep.subr.bf16.mxu0 0
  %5872 = vmatpush2.bf16.msra.mxu0 %v5567
  %5873 = vmatprep.subr.bf16.mxu0 0
  %5874 = vmatpush2.bf16.msra.mxu0 %v5566
  %5875 = vmatprep.subr.bf16.mxu0 0
  %5876 = vmatpush2.bf16.msra.mxu0 %v5565
  %5877 = vmatprep.mubr.bf16.mxu0 %v2549
  %5878 = vmatmul.mubr.bf16.gmra.mxu0 %v2548
  %v5879 = vpop.f32.mrf.mxu0
  %v5880 = vadd.f32 %v4979, %v5879
  %v5881 = vpop.f32.mrf.mxu0
  %v5882 = vpop.f32.mrf.mxu0
  %v5883 = vpop.f32.mrf.mxu0
  %5884 = vdwg.mxu0
  %5885 = vmatprep.subr.bf16.mxu0 0
  %5886 = vmatpush1.bf16.msra.mxu0 %v5580
  %5887 = vmatprep.subr.bf16.mxu0 0
  %5888 = vmatpush1.bf16.msra.mxu0 %v5579
  %5889 = vmatprep.subr.bf16.mxu0 0
  %5890 = vmatpush1.bf16.msra.mxu0 %v5578
  %5891 = vmatprep.subr.bf16.mxu0 0
  %5892 = vmatpush1.bf16.msra.mxu0 %v5577
  %5893 = vmatprep.subr.bf16.mxu0 0
  %5894 = vmatpush1.bf16.msra.mxu0 %v5576
  %5895 = vmatprep.subr.bf16.mxu0 0
  %5896 = vmatpush1.bf16.msra.mxu0 %v5575
  %5897 = vmatprep.subr.bf16.mxu0 0
  %5898 = vmatpush1.bf16.msra.mxu0 %v5574
  %5899 = vmatprep.subr.bf16.mxu0 0
  %5900 = vmatpush1.bf16.msra.mxu0 %v5573
  %5901 = vmatprep.subr.bf16.mxu0 0
  %5902 = vmatpush2.bf16.msra.mxu0 %v5588
  %5903 = vmatprep.subr.bf16.mxu0 0
  %5904 = vmatpush2.bf16.msra.mxu0 %v5587
  %5905 = vmatprep.subr.bf16.mxu0 0
  %5906 = vmatpush2.bf16.msra.mxu0 %v5586
  %5907 = vmatprep.subr.bf16.mxu0 0
  %5908 = vmatpush2.bf16.msra.mxu0 %v5585
  %5909 = vmatprep.subr.bf16.mxu0 0
  %5910 = vmatpush2.bf16.msra.mxu0 %v5584
  %5911 = vmatprep.subr.bf16.mxu0 0
  %5912 = vmatpush2.bf16.msra.mxu0 %v5583
  %5913 = vmatprep.subr.bf16.mxu0 0
  %5914 = vmatpush2.bf16.msra.mxu0 %v5582
  %5915 = vmatprep.subr.bf16.mxu0 0
  %5916 = vmatpush2.bf16.msra.mxu0 %v5581
  %5917 = vmatprep.mubr.bf16.mxu0 %v2845
  %5918 = vmatmul.mubr.bf16.gmra.mxu0 %v2844
  %v5919 = vpop.f32.mrf.mxu0
  %v5920 = vadd.f32 %v5880, %v5919
  %v5921 = vpop.f32.mrf.mxu0
  %v5922 = vpop.f32.mrf.mxu0
  %v5923 = vpop.f32.mrf.mxu0
  %5924 = vdwg.mxu0
  %5925 = vmatprep.subr.bf16.mxu0 0
  %5926 = vmatpush1.bf16.msra.mxu0 %v5596
  %5927 = vmatprep.subr.bf16.mxu0 0
  %5928 = vmatpush1.bf16.msra.mxu0 %v5595
  %5929 = vmatprep.subr.bf16.mxu0 0
  %5930 = vmatpush1.bf16.msra.mxu0 %v5594
  %5931 = vmatprep.subr.bf16.mxu0 0
  %5932 = vmatpush1.bf16.msra.mxu0 %v5593
  %5933 = vmatprep.subr.bf16.mxu0 0
  %5934 = vmatpush1.bf16.msra.mxu0 %v5592
  %5935 = vmatprep.subr.bf16.mxu0 0
  %5936 = vmatpush1.bf16.msra.mxu0 %v5591
  %5937 = vmatprep.subr.bf16.mxu0 0
  %5938 = vmatpush1.bf16.msra.mxu0 %v5590
  %5939 = vmatprep.subr.bf16.mxu0 0
  %5940 = vmatpush1.bf16.msra.mxu0 %v5589
  %5941 = vmatprep.subr.bf16.mxu0 0
  %5942 = vmatpush2.bf16.msra.mxu0 %v5604
  %5943 = vmatprep.subr.bf16.mxu0 0
  %5944 = vmatpush2.bf16.msra.mxu0 %v5603
  %5945 = vmatprep.subr.bf16.mxu0 0
  %5946 = vmatpush2.bf16.msra.mxu0 %v5602
  %5947 = vmatprep.subr.bf16.mxu0 0
  %5948 = vmatpush2.bf16.msra.mxu0 %v5601
  %5949 = vmatprep.subr.bf16.mxu0 0
  %5950 = vmatpush2.bf16.msra.mxu0 %v5600
  %5951 = vmatprep.subr.bf16.mxu0 0
  %5952 = vmatpush2.bf16.msra.mxu0 %v5599
  %5953 = vmatprep.subr.bf16.mxu0 0
  %5954 = vmatpush2.bf16.msra.mxu0 %v5598
  %5955 = vmatprep.subr.bf16.mxu0 0
  %5956 = vmatpush2.bf16.msra.mxu0 %v5597
  %5957 = vmatprep.mubr.bf16.mxu0 %v3141
  %5958 = vmatmul.mubr.bf16.gmra.mxu0 %v3140
  %v5959 = vpop.f32.mrf.mxu0
  %v5960 = vadd.f32 %v5920, %v5959
  %v5961 = vpop.f32.mrf.mxu0
  %v5962 = vpop.f32.mrf.mxu0
  %v5963 = vpop.f32.mrf.mxu0
  %5964 = vdwg.mxu0
  %5965 = vmatprep.subr.bf16.mxu0 0
  %5966 = vmatpush1.bf16.msra.mxu0 %v5612
  %5967 = vmatprep.subr.bf16.mxu0 0
  %5968 = vmatpush1.bf16.msra.mxu0 %v5611
  %5969 = vmatprep.subr.bf16.mxu0 0
  %5970 = vmatpush1.bf16.msra.mxu0 %v5610
  %5971 = vmatprep.subr.bf16.mxu0 0
  %5972 = vmatpush1.bf16.msra.mxu0 %v5609
  %5973 = vmatprep.subr.bf16.mxu0 0
  %5974 = vmatpush1.bf16.msra.mxu0 %v5608
  %5975 = vmatprep.subr.bf16.mxu0 0
  %5976 = vmatpush1.bf16.msra.mxu0 %v5607
  %5977 = vmatprep.subr.bf16.mxu0 0
  %5978 = vmatpush1.bf16.msra.mxu0 %v5606
  %5979 = vmatprep.subr.bf16.mxu0 0
  %5980 = vmatpush1.bf16.msra.mxu0 %v5605
  %5981 = vmatprep.subr.bf16.mxu0 0
  %5982 = vmatpush2.bf16.msra.mxu0 %v5620
  %5983 = vmatprep.subr.bf16.mxu0 0
  %5984 = vmatpush2.bf16.msra.mxu0 %v5619
  %5985 = vmatprep.subr.bf16.mxu0 0
  %5986 = vmatpush2.bf16.msra.mxu0 %v5618
  %5987 = vmatprep.subr.bf16.mxu0 0
  %5988 = vmatpush2.bf16.msra.mxu0 %v5617
  %5989 = vmatprep.subr.bf16.mxu0 0
  %5990 = vmatpush2.bf16.msra.mxu0 %v5616
  %5991 = vmatprep.subr.bf16.mxu0 0
  %5992 = vmatpush2.bf16.msra.mxu0 %v5615
  %5993 = vmatprep.subr.bf16.mxu0 0
  %5994 = vmatpush2.bf16.msra.mxu0 %v5614
  %5995 = vmatprep.subr.bf16.mxu0 0
  %5996 = vmatpush2.bf16.msra.mxu0 %v5613
  %5997 = vmatprep.mubr.bf16.mxu0 %v3437
  %5998 = vmatmul.mubr.bf16.gmra.mxu0 %v3436
  %v5999 = vpop.f32.mrf.mxu0
  %v6000 = vadd.f32 %v5960, %v5999
  %v6001 = vpop.f32.mrf.mxu0
  %v6002 = vpop.f32.mrf.mxu0
  %v6003 = vpop.f32.mrf.mxu0
  %6004 = vdwg.mxu0
  %6005 = vmatprep.subr.bf16.mxu0 0
  %6006 = vmatpush1.bf16.msra.mxu0 %v5628
  %6007 = vmatprep.subr.bf16.mxu0 0
  %6008 = vmatpush1.bf16.msra.mxu0 %v5627
  %6009 = vmatprep.subr.bf16.mxu0 0
  %6010 = vmatpush1.bf16.msra.mxu0 %v5626
  %6011 = vmatprep.subr.bf16.mxu0 0
  %6012 = vmatpush1.bf16.msra.mxu0 %v5625
  %6013 = vmatprep.subr.bf16.mxu0 0
  %6014 = vmatpush1.bf16.msra.mxu0 %v5624
  %6015 = vmatprep.subr.bf16.mxu0 0
  %6016 = vmatpush1.bf16.msra.mxu0 %v5623
  %6017 = vmatprep.subr.bf16.mxu0 0
  %6018 = vmatpush1.bf16.msra.mxu0 %v5622
  %6019 = vmatprep.subr.bf16.mxu0 0
  %6020 = vmatpush1.bf16.msra.mxu0 %v5621
  %6021 = vmatprep.subr.bf16.mxu0 0
  %6022 = vmatpush2.bf16.msra.mxu0 %v5636
  %6023 = vmatprep.subr.bf16.mxu0 0
  %6024 = vmatpush2.bf16.msra.mxu0 %v5635
  %6025 = vmatprep.subr.bf16.mxu0 0
  %6026 = vmatpush2.bf16.msra.mxu0 %v5634
  %6027 = vmatprep.subr.bf16.mxu0 0
  %6028 = vmatpush2.bf16.msra.mxu0 %v5633
  %6029 = vmatprep.subr.bf16.mxu0 0
  %6030 = vmatpush2.bf16.msra.mxu0 %v5632
  %6031 = vmatprep.subr.bf16.mxu0 0
  %6032 = vmatpush2.bf16.msra.mxu0 %v5631
  %6033 = vmatprep.subr.bf16.mxu0 0
  %6034 = vmatpush2.bf16.msra.mxu0 %v5630
  %6035 = vmatprep.subr.bf16.mxu0 0
  %6036 = vmatpush2.bf16.msra.mxu0 %v5629
  %6037 = vmatprep.mubr.bf16.mxu0 %v3675
  %6038 = vmatmul.mubr.bf16.gmra.mxu0 %v3674
  %v6039 = vpop.f32.mrf.mxu0
  %v6040 = vadd.f32 %v6000, %v6039
  %v6041 = vpop.f32.mrf.mxu0
  %v6042 = vpop.f32.mrf.mxu0
  %v6043 = vpop.f32.mrf.mxu0
  %6044 = vdwg.mxu0
  %6045 = vmatprep.subr.bf16.mxu0 0
  %6046 = vmatpush1.bf16.msra.mxu0 %v5644
  %6047 = vmatprep.subr.bf16.mxu0 0
  %6048 = vmatpush1.bf16.msra.mxu0 %v5643
  %6049 = vmatprep.subr.bf16.mxu0 0
  %6050 = vmatpush1.bf16.msra.mxu0 %v5642
  %6051 = vmatprep.subr.bf16.mxu0 0
  %6052 = vmatpush1.bf16.msra.mxu0 %v5641
  %6053 = vmatprep.subr.bf16.mxu0 0
  %6054 = vmatpush1.bf16.msra.mxu0 %v5640
  %6055 = vmatprep.subr.bf16.mxu0 0
  %6056 = vmatpush1.bf16.msra.mxu0 %v5639
  %6057 = vmatprep.subr.bf16.mxu0 0
  %6058 = vmatpush1.bf16.msra.mxu0 %v5638
  %6059 = vmatprep.subr.bf16.mxu0 0
  %6060 = vmatpush1.bf16.msra.mxu0 %v5637
  %6061 = vmatprep.subr.bf16.mxu0 0
  %6062 = vmatpush2.bf16.msra.mxu0 %v5652
  %6063 = vmatprep.subr.bf16.mxu0 0
  %6064 = vmatpush2.bf16.msra.mxu0 %v5651
  %6065 = vmatprep.subr.bf16.mxu0 0
  %6066 = vmatpush2.bf16.msra.mxu0 %v5650
  %6067 = vmatprep.subr.bf16.mxu0 0
  %6068 = vmatpush2.bf16.msra.mxu0 %v5649
  %6069 = vmatprep.subr.bf16.mxu0 0
  %6070 = vmatpush2.bf16.msra.mxu0 %v5648
  %6071 = vmatprep.subr.bf16.mxu0 0
  %6072 = vmatpush2.bf16.msra.mxu0 %v5647
  %6073 = vmatprep.subr.bf16.mxu0 0
  %6074 = vmatpush2.bf16.msra.mxu0 %v5646
  %6075 = vmatprep.subr.bf16.mxu0 0
  %6076 = vmatpush2.bf16.msra.mxu0 %v5645
  %6077 = vmatprep.mubr.bf16.mxu0 %v3913
  %6078 = vmatmul.mubr.bf16.gmra.mxu0 %v3912
  %v6079 = vpop.f32.mrf.mxu0
  %v6080 = vadd.f32 %v6040, %v6079
  %v6081 = vpop.f32.mrf.mxu0
  %v6082 = vpop.f32.mrf.mxu0
  %v6083 = vpop.f32.mrf.mxu0
  %6084 = vdwg.mxu0
  %6085 = vmatprep.subr.bf16.mxu0 0
  %6086 = vmatpush1.bf16.msra.mxu0 %v5660
  %6087 = vmatprep.subr.bf16.mxu0 0
  %6088 = vmatpush1.bf16.msra.mxu0 %v5659
  %6089 = vmatprep.subr.bf16.mxu0 0
  %6090 = vmatpush1.bf16.msra.mxu0 %v5658
  %6091 = vmatprep.subr.bf16.mxu0 0
  %6092 = vmatpush1.bf16.msra.mxu0 %v5657
  %6093 = vmatprep.subr.bf16.mxu0 0
  %6094 = vmatpush1.bf16.msra.mxu0 %v5656
  %6095 = vmatprep.subr.bf16.mxu0 0
  %6096 = vmatpush1.bf16.msra.mxu0 %v5655
  %6097 = vmatprep.subr.bf16.mxu0 0
  %6098 = vmatpush1.bf16.msra.mxu0 %v5654
  %6099 = vmatprep.subr.bf16.mxu0 0
  %6100 = vmatpush1.bf16.msra.mxu0 %v5653
  %6101 = vmatprep.subr.bf16.mxu0 0
  %6102 = vmatpush2.bf16.msra.mxu0 %v5668
  %6103 = vmatprep.subr.bf16.mxu0 0
  %6104 = vmatpush2.bf16.msra.mxu0 %v5667
  %6105 = vmatprep.subr.bf16.mxu0 0
  %6106 = vmatpush2.bf16.msra.mxu0 %v5666
  %6107 = vmatprep.subr.bf16.mxu0 0
  %6108 = vmatpush2.bf16.msra.mxu0 %v5665
  %6109 = vmatprep.subr.bf16.mxu0 0
  %6110 = vmatpush2.bf16.msra.mxu0 %v5664
  %6111 = vmatprep.subr.bf16.mxu0 0
  %6112 = vmatpush2.bf16.msra.mxu0 %v5663
  %6113 = vmatprep.subr.bf16.mxu0 0
  %6114 = vmatpush2.bf16.msra.mxu0 %v5662
  %6115 = vmatprep.subr.bf16.mxu0 0
  %6116 = vmatpush2.bf16.msra.mxu0 %v5661
  %6117 = vmatprep.mubr.bf16.mxu0 %v4209
  %6118 = vmatmul.mubr.bf16.gmra.mxu0 %v4208
  %v6119 = vpop.f32.mrf.mxu0
  %v6120 = vadd.f32 %v6080, %v6119
  %v6121 = vpop.f32.mrf.mxu0
  %v6122 = vpop.f32.mrf.mxu0
  %v6123 = vpop.f32.mrf.mxu0
  %6124 = vdwg.mxu0
  %6125 = vmatprep.subr.bf16.mxu0 0
  %6126 = vmatpush1.bf16.msra.mxu0 %v5676
  %6127 = vmatprep.subr.bf16.mxu0 0
  %6128 = vmatpush1.bf16.msra.mxu0 %v5675
  %6129 = vmatprep.subr.bf16.mxu0 0
  %6130 = vmatpush1.bf16.msra.mxu0 %v5674
  %6131 = vmatprep.subr.bf16.mxu0 0
  %6132 = vmatpush1.bf16.msra.mxu0 %v5673
  %6133 = vmatprep.subr.bf16.mxu0 0
  %6134 = vmatpush1.bf16.msra.mxu0 %v5672
  %6135 = vmatprep.subr.bf16.mxu0 0
  %6136 = vmatpush1.bf16.msra.mxu0 %v5671
  %6137 = vmatprep.subr.bf16.mxu0 0
  %6138 = vmatpush1.bf16.msra.mxu0 %v5670
  %6139 = vmatprep.subr.bf16.mxu0 0
  %6140 = vmatpush1.bf16.msra.mxu0 %v5669
  %6141 = vmatprep.subr.bf16.mxu0 0
  %6142 = vmatpush2.bf16.msra.mxu0 %v5684
  %6143 = vmatprep.subr.bf16.mxu0 0
  %6144 = vmatpush2.bf16.msra.mxu0 %v5683
  %6145 = vmatprep.subr.bf16.mxu0 0
  %6146 = vmatpush2.bf16.msra.mxu0 %v5682
  %6147 = vmatprep.subr.bf16.mxu0 0
  %6148 = vmatpush2.bf16.msra.mxu0 %v5681
  %6149 = vmatprep.subr.bf16.mxu0 0
  %6150 = vmatpush2.bf16.msra.mxu0 %v5680
  %6151 = vmatprep.subr.bf16.mxu0 0
  %6152 = vmatpush2.bf16.msra.mxu0 %v5679
  %6153 = vmatprep.subr.bf16.mxu0 0
  %6154 = vmatpush2.bf16.msra.mxu0 %v5678
  %6155 = vmatprep.subr.bf16.mxu0 0
  %6156 = vmatpush2.bf16.msra.mxu0 %v5677
  %6157 = vmatprep.mubr.bf16.mxu0 %v4447
  %6158 = vmatmul.mubr.bf16.gmra.mxu0 %v4446
  %v6159 = vpop.f32.mrf.mxu0
  %v6160 = vadd.f32 %v6120, %v6159
  %v6161 = vpop.f32.mrf.mxu0
  %v6162 = vpop.f32.mrf.mxu0
  %v6163 = vpop.f32.mrf.mxu0
  %6164 = vdwg.mxu0
  %6165 = vmatprep.subr.bf16.mxu0 0
  %6166 = vmatpush1.bf16.msra.mxu0 %v5692
  %6167 = vmatprep.subr.bf16.mxu0 0
  %6168 = vmatpush1.bf16.msra.mxu0 %v5691
  %6169 = vmatprep.subr.bf16.mxu0 0
  %6170 = vmatpush1.bf16.msra.mxu0 %v5690
  %6171 = vmatprep.subr.bf16.mxu0 0
  %6172 = vmatpush1.bf16.msra.mxu0 %v5689
  %6173 = vmatprep.subr.bf16.mxu0 0
  %6174 = vmatpush1.bf16.msra.mxu0 %v5688
  %6175 = vmatprep.subr.bf16.mxu0 0
  %6176 = vmatpush1.bf16.msra.mxu0 %v5687
  %6177 = vmatprep.subr.bf16.mxu0 0
  %6178 = vmatpush1.bf16.msra.mxu0 %v5686
  %6179 = vmatprep.subr.bf16.mxu0 0
  %6180 = vmatpush1.bf16.msra.mxu0 %v5685
  %6181 = vmatprep.subr.bf16.mxu0 0
  %6182 = vmatpush2.bf16.msra.mxu0 %v5700
  %6183 = vmatprep.subr.bf16.mxu0 0
  %6184 = vmatpush2.bf16.msra.mxu0 %v5699
  %6185 = vmatprep.subr.bf16.mxu0 0
  %6186 = vmatpush2.bf16.msra.mxu0 %v5698
  %6187 = vmatprep.subr.bf16.mxu0 0
  %6188 = vmatpush2.bf16.msra.mxu0 %v5697
  %6189 = vmatprep.subr.bf16.mxu0 0
  %6190 = vmatpush2.bf16.msra.mxu0 %v5696
  %6191 = vmatprep.subr.bf16.mxu0 0
  %6192 = vmatpush2.bf16.msra.mxu0 %v5695
  %6193 = vmatprep.subr.bf16.mxu0 0
  %6194 = vmatpush2.bf16.msra.mxu0 %v5694
  %6195 = vmatprep.subr.bf16.mxu0 0
  %6196 = vmatpush2.bf16.msra.mxu0 %v5693
  %6197 = vmatprep.mubr.bf16.mxu0 %v4685
  %6198 = vmatmul.mubr.bf16.gmra.mxu0 %v4684
  %v6199 = vpop.f32.mrf.mxu0
  %v6200 = vadd.f32 %v6160, %v6199
  %v6201 = vpop.f32.mrf.mxu0
  %v6202 = vpop.f32.mrf.mxu0
  %v6203 = vpop.f32.mrf.mxu0
  %6204 = vdwg.mxu0
  %v6205 = vmax.f32 %v6200, 0.0
  %v6206 = vpack.c.bf16 %v6205, %v6205
  %v6207 = vld [vmem:[%s7] sm:$0xf]
  %v6208 = vld [vmem:[%s7 + $0x4] sm:$0xf]
  %v6209 = vld [vmem:[%s7 + $0x8] sm:$0xf]
  %v6210 = vld [vmem:[%s7 + $0xc] sm:$0xf]
  %v6211 = vld [vmem:[%s7 + $0x10] sm:$0xf]
  %v6212 = vld [vmem:[%s7 + $0x14] sm:$0xf]
  %v6213 = vld [vmem:[%s7 + $0x18] sm:$0xf]
  %v6214 = vld [vmem:[%s7 + $0x1c] sm:$0xf]
  %v6215 = vld [vmem:[%s7 + $0x20] sm:$0xf]
  %v6216 = vld [vmem:[%s7 + $0x24] sm:$0xf]
  %v6217 = vld [vmem:[%s7 + $0x28] sm:$0xf]
  %v6218 = vld [vmem:[%s7 + $0x2c] sm:$0xf]
  %v6219 = vld [vmem:[%s7 + $0x30] sm:$0xf]
  %v6220 = vld [vmem:[%s7 + $0x34] sm:$0xf]
  %v6221 = vld [vmem:[%s7 + $0x38] sm:$0xf]
  %v6222 = vld [vmem:[%s7 + $0x3c] sm:$0xf]
  %v6223 = vld [vmem:[%s8] sm:$0x1]
  %v6225 = vlaneseq
  %v6226 = vshrl.u32 %v6225, 7
  %v6227 = vsub.s32 0, %v6226
  %v6228 = vrot.slane %v6223, %v6227
  %v6246 = vunpack.c.l.b16 %v6207
  %v6247 = vunpack.c.l.b16 %v6208
  %v6248 = vunpack.c.l.b16 %v6209
  %v6249 = vunpack.c.l.b16 %v6210
  %v6250 = vunpack.c.l.b16 %v6211
  %v6251 = vunpack.c.l.b16 %v6212
  %v6252 = vunpack.c.l.b16 %v6213
  %v6253 = vunpack.c.l.b16 %v6214
  %v6254 = vunpack.c.l.b16 %v6215
  %v6255 = vunpack.c.l.b16 %v6216
  %v6256 = vunpack.c.l.b16 %v6217
  %v6257 = vunpack.c.l.b16 %v6218
  %v6258 = vunpack.c.l.b16 %v6219
  %v6259 = vunpack.c.l.b16 %v6220
  %v6260 = vunpack.c.l.b16 %v6221
  %v6261 = vunpack.c.l.b16 %v6222
  %v6262 = vpack.c.b16 %v6247, %v6246
  %v6263 = vpack.c.b16 %v6249, %v6248
  %v6264 = vpack.c.b16 %v6251, %v6250
  %v6265 = vpack.c.b16 %v6253, %v6252
  %v6266 = vpack.c.b16 %v6255, %v6254
  %v6267 = vpack.c.b16 %v6257, %v6256
  %v6268 = vpack.c.b16 %v6259, %v6258
  %v6269 = vpack.c.b16 %v6261, %v6260
  %6278 = vmatprep.subr.bf16.mxu0 0
  %6279 = vmatpush1.bf16.msra.mxu0 %v6269
  %6280 = vmatprep.subr.bf16.mxu0 0
  %6281 = vmatpush1.bf16.msra.mxu0 %v6268
  %6282 = vmatprep.subr.bf16.mxu0 0
  %6283 = vmatpush1.bf16.msra.mxu0 %v6267
  %6284 = vmatprep.subr.bf16.mxu0 0
  %6285 = vmatpush1.bf16.msra.mxu0 %v6266
  %6286 = vmatprep.subr.bf16.mxu0 0
  %6287 = vmatpush1.bf16.msra.mxu0 %v6265
  %6288 = vmatprep.subr.bf16.mxu0 0
  %6289 = vmatpush1.bf16.msra.mxu0 %v6264
  %6290 = vmatprep.subr.bf16.mxu0 0
  %6291 = vmatpush1.bf16.msra.mxu0 %v6263
  %6292 = vmatprep.subr.bf16.mxu0 0
  %6293 = vmatpush1.bf16.msra.mxu0 %v6262
  %6294 = vmatprep.subr.bf16.mxu0 0
  %6295 = vmatpush2.bf16.msra.mxu0 0
  %6296 = vmatprep.subr.bf16.mxu0 0
  %6297 = vmatpush2.bf16.msra.mxu0 0
  %6298 = vmatprep.subr.bf16.mxu0 0
  %6299 = vmatpush2.bf16.msra.mxu0 0
  %6300 = vmatprep.subr.bf16.mxu0 0
  %6301 = vmatpush2.bf16.msra.mxu0 0
  %6302 = vmatprep.subr.bf16.mxu0 0
  %6303 = vmatpush2.bf16.msra.mxu0 0
  %6304 = vmatprep.subr.bf16.mxu0 0
  %6305 = vmatpush2.bf16.msra.mxu0 0
  %6306 = vmatprep.subr.bf16.mxu0 0
  %6307 = vmatpush2.bf16.msra.mxu0 0
  %6308 = vmatprep.subr.bf16.mxu0 0
  %6309 = vmatpush2.bf16.msra.mxu0 0
  %6310 = vmatprep.mubr.bf16.mxu0 0
  %6311 = vmatmul.mubr.bf16.gmra.mxu0 %v6206
  %v6312 = vpop.f32.mrf.mxu0
  %v6313 = vadd.f32 %v6228, %v6312
  %v6314 = vpop.f32.mrf.mxu0
  %v6315 = vpop.f32.mrf.mxu0
  %v6316 = vpop.f32.mrf.mxu0
  %6317 = vdwg.mxu0
  %6318 = vst [vmem:[%s9] sm:$0xff] %v6313
  // Predicated region
  $region38: #{_lambda_.1} parent=0 // pred_check
    _
  $region39: #{_lambda_.1} parent=0 // pred_check_branch
    %6320 = sbr.rel (0) target = $region41
  $region40: #{_lambda_.1} parent=0 // pred_region
    _
  $region41: #{_lambda_.1} parent=0 // pred_fallthru
    _
  // Predicated region
  $region42: #{_lambda_.1} parent=0 // pred_check
    _
  $region43: #{_lambda_.1} parent=0 // pred_check_branch
    %6322 = sbr.rel (0) target = $region45
  $region44: #{_lambda_.1} parent=0 // pred_region
    _
  $region45: #{_lambda_.1} parent=0 // pred_fallthru
    _

</llo_original>
